<compile_context>
chip_gen: v5e
topology: v5e:2x2
jax: 0.10.0
libtpu: 0.0.40
codegen_flags: <defaults>
</compile_context>

<pallas_src>
import numpy as np
import jax
import jax.numpy as jnp
from jax import lax
from jax.experimental import pallas as pl
from jax.experimental.pallas import tpu as pltpu

IMAGENET_MEAN = (0.485, 0.456, 0.406)
IMAGENET_STD = (0.229, 0.224, 0.225)


# ---------------------------------------------------------------------------
# Pallas kernel: stem conv as im2col matmul (bf16 operands, f32 accumulate),
# fused bias add + ReLU.  Output is lane-dense (N padded to 128).
# ---------------------------------------------------------------------------
def _stem_matmul_kernel(p_ref, w_ref, b_ref, o_ref):
    acc = jnp.dot(p_ref[...], w_ref[...], preferred_element_type=jnp.float32)
    o_ref[...] = jnp.maximum(acc + b_ref[...], 0.0)


def stem_conv_pallas(patches, w_mat, bias_row, tm=2048):
    """patches: (M, K) bf16, w_mat: (K, N) bf16, bias_row: (1, N) f32 -> (M, N) f32."""
    M, K = patches.shape
    _, N = w_mat.shape

    # Pick the tile count for the requested tm, then shrink tm to the smallest
    # sublane-aligned tile that still covers M with that many tiles (minimal row padding,
    # still large lane/sublane-dense tiles that amortize per-grid-step overhead).
    g = pl.cdiv(M, tm)
    tm = ((pl.cdiv(M, g) + 7) // 8) * 8
    Mp = g * tm
    if Mp != M:  # pad rows so every grid step sees a full (tm, K) tile
        patches = jnp.pad(patches, ((0, Mp - M), (0, 0)))

    out = pl.pallas_call(
        _stem_matmul_kernel,
        out_shape=jax.ShapeDtypeStruct((Mp, N), jnp.float32),
        grid=(g,),
        in_specs=[
            pl.BlockSpec((tm, K), lambda i: (i, 0)),
            pl.BlockSpec((K, N), lambda i: (0, 0)),
            pl.BlockSpec((1, N), lambda i: (0, 0)),
        ],
        out_specs=pl.BlockSpec((tm, N), lambda i: (i, 0)),
        compiler_params=pltpu.CompilerParams(dimension_semantics=("parallel",)),
    )(patches, w_mat, bias_row)
    return out[:M]


# ---------------------------------------------------------------------------
# Glue: per-channel border padding + im2col (reshape/slice only, bf16).
# ---------------------------------------------------------------------------
def im2col(xp, kh=7, kw=7, stride=2):
    """xp: already-padded (B, C, Hp, Wp).  Returns (B*Ho*Wo, C*kh*kw), Ho, Wo."""
    B, C, Hp, Wp = xp.shape
    Ho = (Hp - kh) // stride + 1
    Wo = (Wp - kw) // stride + 1
    cols = []
    for i in range(kh):
        for j in range(kw):
            cols.append(xp[:, :, i:i + stride * Ho:stride, j:j + stride * Wo:stride])
    patches = jnp.stack(cols, axis=-1)          # (B, C, Ho, Wo, kh*kw)
    patches = patches.transpose(0, 2, 3, 1, 4)  # (B, Ho, Wo, C, kh*kw)
    patches = patches.reshape(B * Ho * Wo, C * kh * kw)
    return patches, Ho, Wo


def object_detection_forward(x, params, tm=2048):
    """Pallas forward for ObjectDetection (preprocess folded into backbone stem).

    x: (B, 3, H, W) float32 in [-1, 1] (NCHW, PyTorch convention).
    Returns the stem feature map in NHWC: (B, H//2, W//2, 64).
    """
    B, C, H, W = x.shape
    mean = jnp.asarray(IMAGENET_MEAN, jnp.float32)
    std = jnp.asarray(IMAGENET_STD, jnp.float32)
    scale = 0.5 / std                 # folds (x+1)*0.5 into the normalize
    bias = (0.5 - mean) / std

    # TODO(synk): GeneralizedRCNNTransform also bilinearly resizes to min_size=800
    # (image-size dependent) before the backbone; skipped here.

    # Fold frozen BatchNorm into the conv, then fold the normalize into that.
    eps = 1e-5
    inv = params["bn_gamma"] * lax.rsqrt(params["bn_var"] + eps)
    w_bn = params["conv_w"] * inv[:, None, None, None]          # (OC, C, 7, 7)
    b_bn = params["bn_beta"] - params["bn_mean"] * inv           # (OC,)
    w_full = w_bn * scale[None, :, None, None]                   # normalize scale folded
    b_full = b_bn + jnp.sum(w_bn * bias[None, :, None, None], axis=(1, 2, 3))
    OC = w_full.shape[0]
    OCp = ((OC + 127) // 128) * 128                              # lane-dense output width

    # Pad the RAW image with -bias/scale per channel so the folded normalize of the
    # padded pixels is exactly 0 (matches zero-padding of the normalized image).
    pad = 3
    Hp, Wp = H + 2 * pad, W + 2 * pad
    pad_val = (-bias / scale).reshape(1, C, 1, 1)
    xp = jnp.broadcast_to(pad_val, (B, C, Hp, Wp)).astype(jnp.bfloat16)
    xp = xp.at[:, :, pad:pad + H, pad:pad + W].set(x.astype(jnp.bfloat16))

    patches, Ho, Wo = im2col(xp)                                 # (M, 147) bf16
    K = patches.shape[1]

    w_mat = jnp.pad(w_full.reshape(OC, K).T, ((0, 0), (0, OCp - OC))).astype(jnp.bfloat16)
    bias_row = jnp.pad(b_full.reshape(1, OC), ((0, 0), (0, OCp - OC))).astype(jnp.float32)

    out_flat = stem_conv_pallas(patches, w_mat, bias_row, tm=tm)  # (M, OCp) f32
    feat_nhwc = out_flat[:, :OC].reshape(B, Ho, Wo, OC)           # keep channels-last

    # TODO(synk): remaining FasterRCNN-ResNet50-FPN-V2 pieces (3x3/s2 maxpool, residual
    # stages 1-4, FPN, RPN proposal generation, RoIAlign, box heads, NMS/postprocess) have
    # no clean single-kernel Pallas equivalent and are not implemented.
    return feat_nhwc


if __name__ == "__main__":
    key = jax.random.PRNGKey(0)
    kx, kw, kg, kb, km, kv = jax.random.split(key, 6)

    B, C, H, W = 2, 3, 64, 64
    OC = 64
    x = jax.random.uniform(kx, (B, C, H, W), jnp.float32, minval=-1.0, maxval=1.0)

    # Deterministic synthetic stem parameters (conv weight + frozen BN stats).
    params = {
        "conv_w": jax.random.normal(kw, (OC, C, 7, 7), jnp.float32) * 0.05,
        "bn_gamma": 1.0 + 0.1 * jax.random.normal(kg, (OC,), jnp.float32),
        "bn_beta": 0.1 * jax.random.normal(kb, (OC,), jnp.float32),
        "bn_mean": 0.1 * jax.random.normal(km, (OC,), jnp.float32),
        "bn_var": jnp.abs(jax.random.normal(kv, (OC,), jnp.float32)) + 0.5,
    }

    fwd = jax.jit(object_detection_forward)
    feat = fwd(x, params)                     # NHWC (B, H//2, W//2, OC)
    feat = jax.block_until_ready(feat)

    # Pure-JAX f32 reference: normalize -> zero-pad -> conv+frozenBN -> ReLU (NCHW).
    mean = jnp.asarray(IMAGENET_MEAN, jnp.float32).reshape(1, 3, 1, 1)
    std = jnp.asarray(IMAGENET_STD, jnp.float32).reshape(1, 3, 1, 1)
    x_norm_ref = ((x + 1.0) * 0.5 - mean) / std
    inv = params["bn_gamma"] / jnp.sqrt(params["bn_var"] + 1e-5)
    w_bn = params["conv_w"] * inv[:, None, None, None]
    b_bn = params["bn_beta"] - params["bn_mean"] * inv
    conv_ref = lax.conv_general_dilated(
        x_norm_ref, w_bn, window_strides=(2, 2), padding=((3, 3), (3, 3)),
        dimension_numbers=("NCHW", "OIHW", "NCHW"), precision=lax.Precision.HIGHEST)
    ref = jnp.maximum(conv_ref + b_bn.reshape(1, OC, 1, 1), 0.0)
    ref_nhwc = jnp.transpose(ref, (0, 2, 3, 1))

    np.testing.assert_allclose(np.asarray(feat), np.asarray(ref_nhwc), rtol=2e-2, atol=2e-2)
    print("KERNEL_OK")
</pallas_src>

<mosaic_0001>
module attributes {stable_mosaic.version = 11 : i64} {
  func.func @_stem_matmul_kernel(%arg0: i32, %arg1: memref<2048x147xbf16, #tpu.memory_space<vmem>>, %arg2: memref<147x128xbf16, #tpu.memory_space<vmem>>, %arg3: memref<1x128xf32, #tpu.memory_space<vmem>>, %arg4: memref<2048x128xf32, #tpu.memory_space<vmem>>) attributes {dimension_semantics = [#tpu.dimension_semantics<parallel>], iteration_bounds = array<i64: 1>, scalar_prefetch = 0 : i64, scratch_operands = 0 : i64, tpu.core_type = #tpu.core_type<tc>, window_params = [{transform_indices = @transform_0, window_bounds = array<i64: 2048, 147>}, {pipeline_mode = #tpu.pipeline_mode<synchronous>, transform_indices = @transform_1, window_bounds = array<i64: 147, 128>}, {pipeline_mode = #tpu.pipeline_mode<synchronous>, transform_indices = @transform_2, window_bounds = array<i64: 1, 128>}, {transform_indices = @transform_3, window_bounds = array<i64: 2048, 128>}]} {
    %c0 = arith.constant 0 : index
    %c0_0 = arith.constant 0 : index
    %0 = vector.load %arg1[%c0, %c0_0] : memref<2048x147xbf16, #tpu.memory_space<vmem>>, vector<2048x147xbf16>
    %c0_1 = arith.constant 0 : index
    %c0_2 = arith.constant 0 : index
    %1 = vector.load %arg2[%c0_1, %c0_2] : memref<147x128xbf16, #tpu.memory_space<vmem>>, vector<147x128xbf16>
    %cst = arith.constant dense<0.000000e+00> : vector<2048x128xf32>
    %2 = tpu.matmul %0, %1, %cst {dimension_numbers = #tpu.dot_dimension_numbers<[1], [0], [0], [1], [0, 0, 1, 1], [], []>} : vector<2048x147xbf16>, vector<147x128xbf16>, vector<2048x128xf32> -> vector<2048x128xf32>
    %c0_3 = arith.constant 0 : index
    %c0_4 = arith.constant 0 : index
    %3 = vector.load %arg3[%c0_3, %c0_4] : memref<1x128xf32, #tpu.memory_space<vmem>>, vector<1x128xf32>
    %4 = vector.broadcast %3 : vector<1x128xf32> to vector<2048x128xf32>
    %5 = arith.addf %2, %4 : vector<2048x128xf32>
    %cst_5 = arith.constant 0.000000e+00 : f32
    %6 = vector.broadcast %cst_5 : f32 to vector<2048x128xf32>
    %7 = arith.maximumf %5, %6 : vector<2048x128xf32>
    %c0_6 = arith.constant 0 : index
    %c0_7 = arith.constant 0 : index
    %8 = vector.load %arg4[%c0_6, %c0_7] : memref<2048x128xf32, #tpu.memory_space<vmem>>, vector<2048x128xf32>
    tpu.vector_store %arg4[%c0_6, %c0_7], %7 {strides = array<i32>} : memref<2048x128xf32, #tpu.memory_space<vmem>>, vector<2048x128xf32>,
    return
  }
  func.func @transform_0(%arg0: i32) -> (i32, i32) {
    %c0_i32 = arith.constant 0 : i32
    %c0_i32_0 = arith.constant 0 : i32
    return %arg0, %c0_i32 : i32, i32
  }
  func.func @transform_1(%arg0: i32) -> (i32, i32) {
    %c0_i32 = arith.constant 0 : i32
    %c0_i32_0 = arith.constant 0 : i32
    %c0_i32_1 = arith.constant 0 : i32
    return %c0_i32, %c0_i32_0 : i32, i32
  }
  func.func @transform_2(%arg0: i32) -> (i32, i32) {
    %c0_i32 = arith.constant 0 : i32
    %c0_i32_0 = arith.constant 0 : i32
    %c0_i32_1 = arith.constant 0 : i32
    return %c0_i32, %c0_i32_0 : i32, i32
  }
  func.func @transform_3(%arg0: i32) -> (i32, i32) {
    %c0_i32 = arith.constant 0 : i32
    %c0_i32_0 = arith.constant 0 : i32
    return %arg0, %c0_i32 : i32, i32
  }
}

</mosaic_0001>

<llo_original>
// kernel: object_detection_forward.1
$region0: #{object_detection_forward.1}
  #allocation0 [shape = 'u32[]', space=smem, size = 0x4, offset = 0x4, fixed_abs, tag = 'smem constant byte address 0x4 - core index']
  #allocation1 [shape = 'u32[72,128]{1,0:T(1,128)}', space=vmem, size = 0x9000, scoped, tag = 'internal scratch']
  %s0 = inlined_call_operand.vmem [shape: bf16[2048,147], index: 0, kind: input, shape index: {}]
  %s1 = inlined_call_operand.vmem [shape: bf16[147,128], index: 1, kind: input, shape index: {}]
  %s2 = inlined_call_operand.vmem [shape: f32[1,128], index: 2, kind: input, shape index: {}]
  %s3 = inlined_call_operand.hbm [shape: f32[2048,128], index: 3, kind: output, shape index: {}]
  %s4 = sld [smem:[#allocation0]]
  $region22: #{object_detection_forward.1} parent=0
    _
  %s6 = ssub.s32 1, %s4
  %s7 = scalar_select 0, %s6, %s4
  $region1: #{object_detection_forward.1} parent=0
    #allocation2 [shape = 'u8[1048576]{0}', space=vmem, size = 0x100000, scoped, tag = 'output window, operand 0, single buffered']
    #allocation3 [shape = 's32[1]{0}', space=sflag, size = 0x4, scoped, tag = 'scoped memory for object_detection_forward.1']
    %8 = vsyncpa [#allocation3], 0
    // Predicated region
    $region2: #{object_detection_forward.1} parent=1 // pred_check
      _
    $region3: #{object_detection_forward.1} parent=1 // pred_check_branch
      %10 = sbr.rel (0) target = $region5
    $region4: #{object_detection_forward.1} parent=1 // pred_region
      _
    $region5: #{object_detection_forward.1} parent=1 // pred_fallthru
      _
    // Predicated region
    $region6: #{object_detection_forward.1} parent=1 // pred_check
      _
    $region7: #{object_detection_forward.1} parent=1 // pred_check_branch
      %12 = sbr.rel (0) target = $region9
    $region8: #{object_detection_forward.1} parent=1 // pred_region
      _
    $region9: #{object_detection_forward.1} parent=1 // pred_fallthru
      _
    // Predicated region
    $region10: #{object_detection_forward.1} parent=1 // pred_check
      _
    $region11: #{object_detection_forward.1} parent=1 // pred_check_branch
      %14 = sbr.rel (0) target = $region13
    $region12: #{object_detection_forward.1} parent=1 // pred_region
      _
    $region13: #{object_detection_forward.1} parent=1 // pred_fallthru
      _
    %v16 = vld [vmem:[%s0] sm:$0xff]
    %v17 = vld [vmem:[%s0 + $0x8] sm:$0xff]
    %v18 = vld [vmem:[%s0 + $0x10] sm:$0xff]
    %v19 = vld [vmem:[%s0 + $0x18] sm:$0xff]
    %v20 = vld [vmem:[%s0 + $0x20] sm:$0xff]
    %v21 = vld [vmem:[%s0 + $0x28] sm:$0xff]
    %v22 = vld [vmem:[%s0 + $0x30] sm:$0xff]
    %v23 = vld [vmem:[%s0 + $0x38] sm:$0xff]
    %v24 = vld [vmem:[%s0 + $0x40] sm:$0xff]
    %v25 = vld [vmem:[%s0 + $0x48] sm:$0xff]
    %v26 = vld [vmem:[%s0 + $0x50] sm:$0xff]
    %v27 = vld [vmem:[%s0 + $0x58] sm:$0xff]
    %v28 = vld [vmem:[%s0 + $0x60] sm:$0xff]
    %v29 = vld [vmem:[%s0 + $0x68] sm:$0xff]
    %v30 = vld [vmem:[%s0 + $0x70] sm:$0xff]
    %v31 = vld [vmem:[%s0 + $0x78] sm:$0xff]
    %v32 = vld [vmem:[%s0 + $0x80] sm:$0xff]
    %v33 = vld [vmem:[%s0 + $0x88] sm:$0xff]
    %v34 = vld [vmem:[%s0 + $0x90] sm:$0xff]
    %v35 = vld [vmem:[%s0 + $0x98] sm:$0xff]
    %v36 = vld [vmem:[%s0 + $0xa0] sm:$0xff]
    %v37 = vld [vmem:[%s0 + $0xa8] sm:$0xff]
    %v38 = vld [vmem:[%s0 + $0xb0] sm:$0xff]
    %v39 = vld [vmem:[%s0 + $0xb8] sm:$0xff]
    %v40 = vld [vmem:[%s0 + $0xc0] sm:$0xff]
    %v41 = vld [vmem:[%s0 + $0xc8] sm:$0xff]
    %v42 = vld [vmem:[%s0 + $0xd0] sm:$0xff]
    %v43 = vld [vmem:[%s0 + $0xd8] sm:$0xff]
    %v44 = vld [vmem:[%s0 + $0xe0] sm:$0xff]
    %v45 = vld [vmem:[%s0 + $0xe8] sm:$0xff]
    %v46 = vld [vmem:[%s0 + $0xf0] sm:$0xff]
    %v47 = vld [vmem:[%s0 + $0xf8] sm:$0xff]
    %v48 = vld [vmem:[%s0 + $0x100] sm:$0xff]
    %v49 = vld [vmem:[%s0 + $0x108] sm:$0xff]
    %v50 = vld [vmem:[%s0 + $0x110] sm:$0xff]
    %v51 = vld [vmem:[%s0 + $0x118] sm:$0xff]
    %v52 = vld [vmem:[%s0 + $0x120] sm:$0xff]
    %v53 = vld [vmem:[%s0 + $0x128] sm:$0xff]
    %v54 = vld [vmem:[%s0 + $0x130] sm:$0xff]
    %v55 = vld [vmem:[%s0 + $0x138] sm:$0xff]
    %v56 = vld [vmem:[%s0 + $0x140] sm:$0xff]
    %v57 = vld [vmem:[%s0 + $0x148] sm:$0xff]
    %v58 = vld [vmem:[%s0 + $0x150] sm:$0xff]
    %v59 = vld [vmem:[%s0 + $0x158] sm:$0xff]
    %v60 = vld [vmem:[%s0 + $0x160] sm:$0xff]
    %v61 = vld [vmem:[%s0 + $0x168] sm:$0xff]
    %v62 = vld [vmem:[%s0 + $0x170] sm:$0xff]
    %v63 = vld [vmem:[%s0 + $0x178] sm:$0xff]
    %v64 = vld [vmem:[%s0 + $0x180] sm:$0xff]
    %v65 = vld [vmem:[%s0 + $0x188] sm:$0xff]
    %v66 = vld [vmem:[%s0 + $0x190] sm:$0xff]
    %v67 = vld [vmem:[%s0 + $0x198] sm:$0xff]
    %v68 = vld [vmem:[%s0 + $0x1a0] sm:$0xff]
    %v69 = vld [vmem:[%s0 + $0x1a8] sm:$0xff]
    %v70 = vld [vmem:[%s0 + $0x1b0] sm:$0xff]
    %v71 = vld [vmem:[%s0 + $0x1b8] sm:$0xff]
    %v72 = vld [vmem:[%s0 + $0x1c0] sm:$0xff]
    %v73 = vld [vmem:[%s0 + $0x1c8] sm:$0xff]
    %v74 = vld [vmem:[%s0 + $0x1d0] sm:$0xff]
    %v75 = vld [vmem:[%s0 + $0x1d8] sm:$0xff]
    %v76 = vld [vmem:[%s0 + $0x1e0] sm:$0xff]
    %v77 = vld [vmem:[%s0 + $0x1e8] sm:$0xff]
    %v78 = vld [vmem:[%s0 + $0x1f0] sm:$0xff]
    %v79 = vld [vmem:[%s0 + $0x1f8] sm:$0xff]
    %v80 = vld [vmem:[%s0 + $0x200] sm:$0xff]
    %v81 = vld [vmem:[%s0 + $0x208] sm:$0xff]
    %v82 = vld [vmem:[%s0 + $0x210] sm:$0xff]
    %v83 = vld [vmem:[%s0 + $0x218] sm:$0xff]
    %v84 = vld [vmem:[%s0 + $0x220] sm:$0xff]
    %v85 = vld [vmem:[%s0 + $0x228] sm:$0xff]
    %v86 = vld [vmem:[%s0 + $0x230] sm:$0xff]
    %v87 = vld [vmem:[%s0 + $0x238] sm:$0xff]
    %v88 = vld [vmem:[%s0 + $0x240] sm:$0xff]
    %v89 = vld [vmem:[%s0 + $0x248] sm:$0xff]
    %v90 = vld [vmem:[%s0 + $0x250] sm:$0xff]
    %v91 = vld [vmem:[%s0 + $0x258] sm:$0xff]
    %v92 = vld [vmem:[%s0 + $0x260] sm:$0xff]
    %v93 = vld [vmem:[%s0 + $0x268] sm:$0xff]
    %v94 = vld [vmem:[%s0 + $0x270] sm:$0xff]
    %v95 = vld [vmem:[%s0 + $0x278] sm:$0xff]
    %v96 = vld [vmem:[%s0 + $0x280] sm:$0xff]
    %v97 = vld [vmem:[%s0 + $0x288] sm:$0xff]
    %v98 = vld [vmem:[%s0 + $0x290] sm:$0xff]
    %v99 = vld [vmem:[%s0 + $0x298] sm:$0xff]
    %v100 = vld [vmem:[%s0 + $0x2a0] sm:$0xff]
    %v101 = vld [vmem:[%s0 + $0x2a8] sm:$0xff]
    %v102 = vld [vmem:[%s0 + $0x2b0] sm:$0xff]
    %v103 = vld [vmem:[%s0 + $0x2b8] sm:$0xff]
    %v104 = vld [vmem:[%s0 + $0x2c0] sm:$0xff]
    %v105 = vld [vmem:[%s0 + $0x2c8] sm:$0xff]
    %v106 = vld [vmem:[%s0 + $0x2d0] sm:$0xff]
    %v107 = vld [vmem:[%s0 + $0x2d8] sm:$0xff]
    %v108 = vld [vmem:[%s0 + $0x2e0] sm:$0xff]
    %v109 = vld [vmem:[%s0 + $0x2e8] sm:$0xff]
    %v110 = vld [vmem:[%s0 + $0x2f0] sm:$0xff]
    %v111 = vld [vmem:[%s0 + $0x2f8] sm:$0xff]
    %v112 = vld [vmem:[%s0 + $0x300] sm:$0xff]
    %v113 = vld [vmem:[%s0 + $0x308] sm:$0xff]
    %v114 = vld [vmem:[%s0 + $0x310] sm:$0xff]
    %v115 = vld [vmem:[%s0 + $0x318] sm:$0xff]
    %v116 = vld [vmem:[%s0 + $0x320] sm:$0xff]
    %v117 = vld [vmem:[%s0 + $0x328] sm:$0xff]
    %v118 = vld [vmem:[%s0 + $0x330] sm:$0xff]
    %v119 = vld [vmem:[%s0 + $0x338] sm:$0xff]
    %v120 = vld [vmem:[%s0 + $0x340] sm:$0xff]
    %v121 = vld [vmem:[%s0 + $0x348] sm:$0xff]
    %v122 = vld [vmem:[%s0 + $0x350] sm:$0xff]
    %v123 = vld [vmem:[%s0 + $0x358] sm:$0xff]
    %v124 = vld [vmem:[%s0 + $0x360] sm:$0xff]
    %v125 = vld [vmem:[%s0 + $0x368] sm:$0xff]
    %v126 = vld [vmem:[%s0 + $0x370] sm:$0xff]
    %v127 = vld [vmem:[%s0 + $0x378] sm:$0xff]
    %v128 = vld [vmem:[%s0 + $0x380] sm:$0xff]
    %v129 = vld [vmem:[%s0 + $0x388] sm:$0xff]
    %v130 = vld [vmem:[%s0 + $0x390] sm:$0xff]
    %v131 = vld [vmem:[%s0 + $0x398] sm:$0xff]
    %v132 = vld [vmem:[%s0 + $0x3a0] sm:$0xff]
    %v133 = vld [vmem:[%s0 + $0x3a8] sm:$0xff]
    %v134 = vld [vmem:[%s0 + $0x3b0] sm:$0xff]
    %v135 = vld [vmem:[%s0 + $0x3b8] sm:$0xff]
    %v136 = vld [vmem:[%s0 + $0x3c0] sm:$0xff]
    %v137 = vld [vmem:[%s0 + $0x3c8] sm:$0xff]
    %v138 = vld [vmem:[%s0 + $0x3d0] sm:$0xff]
    %v139 = vld [vmem:[%s0 + $0x3d8] sm:$0xff]
    %v140 = vld [vmem:[%s0 + $0x3e0] sm:$0xff]
    %v141 = vld [vmem:[%s0 + $0x3e8] sm:$0xff]
    %v142 = vld [vmem:[%s0 + $0x3f0] sm:$0xff]
    %v143 = vld [vmem:[%s0 + $0x3f8] sm:$0xff]
    %v144 = vld [vmem:[%s0 + $0x400] sm:$0xff]
    %v145 = vld [vmem:[%s0 + $0x408] sm:$0xff]
    %v146 = vld [vmem:[%s0 + $0x410] sm:$0xff]
    %v147 = vld [vmem:[%s0 + $0x418] sm:$0xff]
    %v148 = vld [vmem:[%s0 + $0x420] sm:$0xff]
    %v149 = vld [vmem:[%s0 + $0x428] sm:$0xff]
    %v150 = vld [vmem:[%s0 + $0x430] sm:$0xff]
    %v151 = vld [vmem:[%s0 + $0x438] sm:$0xff]
    %v152 = vld [vmem:[%s0 + $0x440] sm:$0xff]
    %v153 = vld [vmem:[%s0 + $0x448] sm:$0xff]
    %v154 = vld [vmem:[%s0 + $0x450] sm:$0xff]
    %v155 = vld [vmem:[%s0 + $0x458] sm:$0xff]
    %v156 = vld [vmem:[%s0 + $0x460] sm:$0xff]
    %v157 = vld [vmem:[%s0 + $0x468] sm:$0xff]
    %v158 = vld [vmem:[%s0 + $0x470] sm:$0xff]
    %v159 = vld [vmem:[%s0 + $0x478] sm:$0xff]
    %v160 = vld [vmem:[%s0 + $0x480] sm:$0xff]
    %v161 = vld [vmem:[%s0 + $0x488] sm:$0xff]
    %v162 = vld [vmem:[%s0 + $0x490] sm:$0xff]
    %v163 = vld [vmem:[%s0 + $0x498] sm:$0xff]
    %v164 = vld [vmem:[%s0 + $0x4a0] sm:$0xff]
    %v165 = vld [vmem:[%s0 + $0x4a8] sm:$0xff]
    %v166 = vld [vmem:[%s0 + $0x4b0] sm:$0xff]
    %v167 = vld [vmem:[%s0 + $0x4b8] sm:$0xff]
    %v168 = vld [vmem:[%s0 + $0x4c0] sm:$0xff]
    %v169 = vld [vmem:[%s0 + $0x4c8] sm:$0xff]
    %v170 = vld [vmem:[%s0 + $0x4d0] sm:$0xff]
    %v171 = vld [vmem:[%s0 + $0x4d8] sm:$0xff]
    %v172 = vld [vmem:[%s0 + $0x4e0] sm:$0xff]
    %v173 = vld [vmem:[%s0 + $0x4e8] sm:$0xff]
    %v174 = vld [vmem:[%s0 + $0x4f0] sm:$0xff]
    %v175 = vld [vmem:[%s0 + $0x4f8] sm:$0xff]
    %v176 = vld [vmem:[%s0 + $0x500] sm:$0xff]
    %v177 = vld [vmem:[%s0 + $0x508] sm:$0xff]
    %v178 = vld [vmem:[%s0 + $0x510] sm:$0xff]
    %v179 = vld [vmem:[%s0 + $0x518] sm:$0xff]
    %v180 = vld [vmem:[%s0 + $0x520] sm:$0xff]
    %v181 = vld [vmem:[%s0 + $0x528] sm:$0xff]
    %v182 = vld [vmem:[%s0 + $0x530] sm:$0xff]
    %v183 = vld [vmem:[%s0 + $0x538] sm:$0xff]
    %v184 = vld [vmem:[%s0 + $0x540] sm:$0xff]
    %v185 = vld [vmem:[%s0 + $0x548] sm:$0xff]
    %v186 = vld [vmem:[%s0 + $0x550] sm:$0xff]
    %v187 = vld [vmem:[%s0 + $0x558] sm:$0xff]
    %v188 = vld [vmem:[%s0 + $0x560] sm:$0xff]
    %v189 = vld [vmem:[%s0 + $0x568] sm:$0xff]
    %v190 = vld [vmem:[%s0 + $0x570] sm:$0xff]
    %v191 = vld [vmem:[%s0 + $0x578] sm:$0xff]
    %v192 = vld [vmem:[%s0 + $0x580] sm:$0xff]
    %v193 = vld [vmem:[%s0 + $0x588] sm:$0xff]
    %v194 = vld [vmem:[%s0 + $0x590] sm:$0xff]
    %v195 = vld [vmem:[%s0 + $0x598] sm:$0xff]
    %v196 = vld [vmem:[%s0 + $0x5a0] sm:$0xff]
    %v197 = vld [vmem:[%s0 + $0x5a8] sm:$0xff]
    %v198 = vld [vmem:[%s0 + $0x5b0] sm:$0xff]
    %v199 = vld [vmem:[%s0 + $0x5b8] sm:$0xff]
    %v200 = vld [vmem:[%s0 + $0x5c0] sm:$0xff]
    %v201 = vld [vmem:[%s0 + $0x5c8] sm:$0xff]
    %v202 = vld [vmem:[%s0 + $0x5d0] sm:$0xff]
    %v203 = vld [vmem:[%s0 + $0x5d8] sm:$0xff]
    %v204 = vld [vmem:[%s0 + $0x5e0] sm:$0xff]
    %v205 = vld [vmem:[%s0 + $0x5e8] sm:$0xff]
    %v206 = vld [vmem:[%s0 + $0x5f0] sm:$0xff]
    %v207 = vld [vmem:[%s0 + $0x5f8] sm:$0xff]
    %v208 = vld [vmem:[%s0 + $0x600] sm:$0xff]
    %v209 = vld [vmem:[%s0 + $0x608] sm:$0xff]
    %v210 = vld [vmem:[%s0 + $0x610] sm:$0xff]
    %v211 = vld [vmem:[%s0 + $0x618] sm:$0xff]
    %v212 = vld [vmem:[%s0 + $0x620] sm:$0xff]
    %v213 = vld [vmem:[%s0 + $0x628] sm:$0xff]
    %v214 = vld [vmem:[%s0 + $0x630] sm:$0xff]
    %v215 = vld [vmem:[%s0 + $0x638] sm:$0xff]
    %v216 = vld [vmem:[%s0 + $0x640] sm:$0xff]
    %v217 = vld [vmem:[%s0 + $0x648] sm:$0xff]
    %v218 = vld [vmem:[%s0 + $0x650] sm:$0xff]
    %v219 = vld [vmem:[%s0 + $0x658] sm:$0xff]
    %v220 = vld [vmem:[%s0 + $0x660] sm:$0xff]
    %v221 = vld [vmem:[%s0 + $0x668] sm:$0xff]
    %v222 = vld [vmem:[%s0 + $0x670] sm:$0xff]
    %v223 = vld [vmem:[%s0 + $0x678] sm:$0xff]
    %v224 = vld [vmem:[%s0 + $0x680] sm:$0xff]
    %v225 = vld [vmem:[%s0 + $0x688] sm:$0xff]
    %v226 = vld [vmem:[%s0 + $0x690] sm:$0xff]
    %v227 = vld [vmem:[%s0 + $0x698] sm:$0xff]
    %v228 = vld [vmem:[%s0 + $0x6a0] sm:$0xff]
    %v229 = vld [vmem:[%s0 + $0x6a8] sm:$0xff]
    %v230 = vld [vmem:[%s0 + $0x6b0] sm:$0xff]
    %v231 = vld [vmem:[%s0 + $0x6b8] sm:$0xff]
    %v232 = vld [vmem:[%s0 + $0x6c0] sm:$0xff]
    %v233 = vld [vmem:[%s0 + $0x6c8] sm:$0xff]
    %v234 = vld [vmem:[%s0 + $0x6d0] sm:$0xff]
    %v235 = vld [vmem:[%s0 + $0x6d8] sm:$0xff]
    %v236 = vld [vmem:[%s0 + $0x6e0] sm:$0xff]
    %v237 = vld [vmem:[%s0 + $0x6e8] sm:$0xff]
    %v238 = vld [vmem:[%s0 + $0x6f0] sm:$0xff]
    %v239 = vld [vmem:[%s0 + $0x6f8] sm:$0xff]
    %v240 = vld [vmem:[%s0 + $0x700] sm:$0xff]
    %v241 = vld [vmem:[%s0 + $0x708] sm:$0xff]
    %v242 = vld [vmem:[%s0 + $0x710] sm:$0xff]
    %v243 = vld [vmem:[%s0 + $0x718] sm:$0xff]
    %v244 = vld [vmem:[%s0 + $0x720] sm:$0xff]
    %v245 = vld [vmem:[%s0 + $0x728] sm:$0xff]
    %v246 = vld [vmem:[%s0 + $0x730] sm:$0xff]
    %v247 = vld [vmem:[%s0 + $0x738] sm:$0xff]
    %v248 = vld [vmem:[%s0 + $0x740] sm:$0xff]
    %v249 = vld [vmem:[%s0 + $0x748] sm:$0xff]
    %v250 = vld [vmem:[%s0 + $0x750] sm:$0xff]
    %v251 = vld [vmem:[%s0 + $0x758] sm:$0xff]
    %v252 = vld [vmem:[%s0 + $0x760] sm:$0xff]
    %v253 = vld [vmem:[%s0 + $0x768] sm:$0xff]
    %v254 = vld [vmem:[%s0 + $0x770] sm:$0xff]
    %v255 = vld [vmem:[%s0 + $0x778] sm:$0xff]
    %v256 = vld [vmem:[%s0 + $0x780] sm:$0xff]
    %v257 = vld [vmem:[%s0 + $0x788] sm:$0xff]
    %v258 = vld [vmem:[%s0 + $0x790] sm:$0xff]
    %v259 = vld [vmem:[%s0 + $0x798] sm:$0xff]
    %v260 = vld [vmem:[%s0 + $0x7a0] sm:$0xff]
    %v261 = vld [vmem:[%s0 + $0x7a8] sm:$0xff]
    %v262 = vld [vmem:[%s0 + $0x7b0] sm:$0xff]
    %v263 = vld [vmem:[%s0 + $0x7b8] sm:$0xff]
    %v264 = vld [vmem:[%s0 + $0x7c0] sm:$0xff]
    %v265 = vld [vmem:[%s0 + $0x7c8] sm:$0xff]
    %v266 = vld [vmem:[%s0 + $0x7d0] sm:$0xff]
    %v267 = vld [vmem:[%s0 + $0x7d8] sm:$0xff]
    %v268 = vld [vmem:[%s0 + $0x7e0] sm:$0xff]
    %v269 = vld [vmem:[%s0 + $0x7e8] sm:$0xff]
    %v270 = vld [vmem:[%s0 + $0x7f0] sm:$0xff]
    %v271 = vld [vmem:[%s0 + $0x7f8] sm:$0xff]
    %v272 = vld [vmem:[%s1] sm:$0xf]
    %v273 = vld [vmem:[%s1 + $0x4] sm:$0xf]
    %v274 = vld [vmem:[%s1 + $0x8] sm:$0xf]
    %v275 = vld [vmem:[%s1 + $0xc] sm:$0xf]
    %v276 = vld [vmem:[%s1 + $0x10] sm:$0xf]
    %v277 = vld [vmem:[%s1 + $0x14] sm:$0xf]
    %v278 = vld [vmem:[%s1 + $0x18] sm:$0xf]
    %v279 = vld [vmem:[%s1 + $0x1c] sm:$0xf]
    %v280 = vld [vmem:[%s1 + $0x20] sm:$0xf]
    %v281 = vld [vmem:[%s1 + $0x24] sm:$0xf]
    %v282 = vld [vmem:[%s1 + $0x28] sm:$0xf]
    %v283 = vld [vmem:[%s1 + $0x2c] sm:$0xf]
    %v284 = vld [vmem:[%s1 + $0x30] sm:$0xf]
    %v285 = vld [vmem:[%s1 + $0x34] sm:$0xf]
    %v286 = vld [vmem:[%s1 + $0x38] sm:$0xf]
    %v287 = vld [vmem:[%s1 + $0x3c] sm:$0xf]
    %v288 = vld [vmem:[%s1 + $0x40] sm:$0xf]
    %v289 = vld [vmem:[%s1 + $0x44] sm:$0xf]
    %v290 = vld [vmem:[%s1 + $0x48] sm:$0x3]
    %v291 = vld [vmem:[%s2] sm:$0x1]
    %v293 = vperm.slane %v291, 0
    %v551 = vunpack.c.l.b16 %v16
    %v552 = vunpack.c.h.b16 %v16
    %v553 = vunpack.c.l.b16 %v17
    %v554 = vunpack.c.h.b16 %v17
    %v555 = vunpack.c.l.b16 %v18
    %v556 = vunpack.c.h.b16 %v18
    %v557 = vunpack.c.l.b16 %v19
    %v558 = vunpack.c.h.b16 %v19
    %v559 = vunpack.c.l.b16 %v20
    %v560 = vunpack.c.h.b16 %v20
    %v561 = vunpack.c.l.b16 %v21
    %v562 = vunpack.c.h.b16 %v21
    %v563 = vunpack.c.l.b16 %v22
    %v564 = vunpack.c.h.b16 %v22
    %v565 = vunpack.c.l.b16 %v23
    %v566 = vunpack.c.h.b16 %v23
    %v567 = vunpack.c.l.b16 %v24
    %v568 = vunpack.c.h.b16 %v24
    %v569 = vunpack.c.l.b16 %v25
    %v570 = vunpack.c.h.b16 %v25
    %v571 = vunpack.c.l.b16 %v26
    %v572 = vunpack.c.h.b16 %v26
    %v573 = vunpack.c.l.b16 %v27
    %v574 = vunpack.c.h.b16 %v27
    %v575 = vunpack.c.l.b16 %v28
    %v576 = vunpack.c.h.b16 %v28
    %v577 = vunpack.c.l.b16 %v29
    %v578 = vunpack.c.h.b16 %v29
    %v579 = vunpack.c.l.b16 %v30
    %v580 = vunpack.c.h.b16 %v30
    %v581 = vunpack.c.l.b16 %v31
    %v582 = vunpack.c.h.b16 %v31
    %v583 = vunpack.c.l.b16 %v32
    %v584 = vunpack.c.h.b16 %v32
    %v585 = vunpack.c.l.b16 %v33
    %v586 = vunpack.c.h.b16 %v33
    %v587 = vunpack.c.l.b16 %v34
    %v588 = vunpack.c.h.b16 %v34
    %v589 = vunpack.c.l.b16 %v35
    %v590 = vunpack.c.h.b16 %v35
    %v591 = vunpack.c.l.b16 %v36
    %v592 = vunpack.c.h.b16 %v36
    %v593 = vunpack.c.l.b16 %v37
    %v594 = vunpack.c.h.b16 %v37
    %v595 = vunpack.c.l.b16 %v38
    %v596 = vunpack.c.h.b16 %v38
    %v597 = vunpack.c.l.b16 %v39
    %v598 = vunpack.c.h.b16 %v39
    %v599 = vunpack.c.l.b16 %v40
    %v600 = vunpack.c.h.b16 %v40
    %v601 = vunpack.c.l.b16 %v41
    %v602 = vunpack.c.h.b16 %v41
    %v603 = vunpack.c.l.b16 %v42
    %v604 = vunpack.c.h.b16 %v42
    %v605 = vunpack.c.l.b16 %v43
    %v606 = vunpack.c.h.b16 %v43
    %v607 = vunpack.c.l.b16 %v44
    %v608 = vunpack.c.h.b16 %v44
    %v609 = vunpack.c.l.b16 %v45
    %v610 = vunpack.c.h.b16 %v45
    %v611 = vunpack.c.l.b16 %v46
    %v612 = vunpack.c.h.b16 %v46
    %v613 = vunpack.c.l.b16 %v47
    %v614 = vunpack.c.h.b16 %v47
    %v615 = vunpack.c.l.b16 %v48
    %v616 = vunpack.c.h.b16 %v48
    %v617 = vunpack.c.l.b16 %v49
    %v618 = vunpack.c.h.b16 %v49
    %v619 = vunpack.c.l.b16 %v50
    %v620 = vunpack.c.h.b16 %v50
    %v621 = vunpack.c.l.b16 %v51
    %v622 = vunpack.c.h.b16 %v51
    %v623 = vunpack.c.l.b16 %v52
    %v624 = vunpack.c.h.b16 %v52
    %v625 = vunpack.c.l.b16 %v53
    %v626 = vunpack.c.h.b16 %v53
    %v627 = vunpack.c.l.b16 %v54
    %v628 = vunpack.c.h.b16 %v54
    %v629 = vunpack.c.l.b16 %v55
    %v630 = vunpack.c.h.b16 %v55
    %v631 = vunpack.c.l.b16 %v56
    %v632 = vunpack.c.h.b16 %v56
    %v633 = vunpack.c.l.b16 %v57
    %v634 = vunpack.c.h.b16 %v57
    %v635 = vunpack.c.l.b16 %v58
    %v636 = vunpack.c.h.b16 %v58
    %v637 = vunpack.c.l.b16 %v59
    %v638 = vunpack.c.h.b16 %v59
    %v639 = vunpack.c.l.b16 %v60
    %v640 = vunpack.c.h.b16 %v60
    %v641 = vunpack.c.l.b16 %v61
    %v642 = vunpack.c.h.b16 %v61
    %v643 = vunpack.c.l.b16 %v62
    %v644 = vunpack.c.h.b16 %v62
    %v645 = vunpack.c.l.b16 %v63
    %v646 = vunpack.c.h.b16 %v63
    %v647 = vunpack.c.l.b16 %v64
    %v648 = vunpack.c.h.b16 %v64
    %v649 = vunpack.c.l.b16 %v65
    %v650 = vunpack.c.h.b16 %v65
    %v651 = vunpack.c.l.b16 %v66
    %v652 = vunpack.c.h.b16 %v66
    %v653 = vunpack.c.l.b16 %v67
    %v654 = vunpack.c.h.b16 %v67
    %v655 = vunpack.c.l.b16 %v68
    %v656 = vunpack.c.h.b16 %v68
    %v657 = vunpack.c.l.b16 %v69
    %v658 = vunpack.c.h.b16 %v69
    %v659 = vunpack.c.l.b16 %v70
    %v660 = vunpack.c.h.b16 %v70
    %v661 = vunpack.c.l.b16 %v71
    %v662 = vunpack.c.h.b16 %v71
    %v663 = vunpack.c.l.b16 %v72
    %v664 = vunpack.c.h.b16 %v72
    %v665 = vunpack.c.l.b16 %v73
    %v666 = vunpack.c.h.b16 %v73
    %v667 = vunpack.c.l.b16 %v74
    %v668 = vunpack.c.h.b16 %v74
    %v669 = vunpack.c.l.b16 %v75
    %v670 = vunpack.c.h.b16 %v75
    %v671 = vunpack.c.l.b16 %v76
    %v672 = vunpack.c.h.b16 %v76
    %v673 = vunpack.c.l.b16 %v77
    %v674 = vunpack.c.h.b16 %v77
    %v675 = vunpack.c.l.b16 %v78
    %v676 = vunpack.c.h.b16 %v78
    %v677 = vunpack.c.l.b16 %v79
    %v678 = vunpack.c.h.b16 %v79
    %v679 = vunpack.c.l.b16 %v80
    %v680 = vunpack.c.h.b16 %v80
    %v681 = vunpack.c.l.b16 %v81
    %v682 = vunpack.c.h.b16 %v81
    %v683 = vunpack.c.l.b16 %v82
    %v684 = vunpack.c.h.b16 %v82
    %v685 = vunpack.c.l.b16 %v83
    %v686 = vunpack.c.h.b16 %v83
    %v687 = vunpack.c.l.b16 %v84
    %v688 = vunpack.c.h.b16 %v84
    %v689 = vunpack.c.l.b16 %v85
    %v690 = vunpack.c.h.b16 %v85
    %v691 = vunpack.c.l.b16 %v86
    %v692 = vunpack.c.h.b16 %v86
    %v693 = vunpack.c.l.b16 %v87
    %v694 = vunpack.c.h.b16 %v87
    %v695 = vunpack.c.l.b16 %v88
    %v696 = vunpack.c.h.b16 %v88
    %v697 = vunpack.c.l.b16 %v89
    %v698 = vunpack.c.h.b16 %v89
    %v699 = vunpack.c.l.b16 %v90
    %v700 = vunpack.c.h.b16 %v90
    %v701 = vunpack.c.l.b16 %v91
    %v702 = vunpack.c.h.b16 %v91
    %v703 = vunpack.c.l.b16 %v92
    %v704 = vunpack.c.h.b16 %v92
    %v705 = vunpack.c.l.b16 %v93
    %v706 = vunpack.c.h.b16 %v93
    %v707 = vunpack.c.l.b16 %v94
    %v708 = vunpack.c.h.b16 %v94
    %v709 = vunpack.c.l.b16 %v95
    %v710 = vunpack.c.h.b16 %v95
    %v711 = vunpack.c.l.b16 %v96
    %v712 = vunpack.c.h.b16 %v96
    %v713 = vunpack.c.l.b16 %v97
    %v714 = vunpack.c.h.b16 %v97
    %v715 = vunpack.c.l.b16 %v98
    %v716 = vunpack.c.h.b16 %v98
    %v717 = vunpack.c.l.b16 %v99
    %v718 = vunpack.c.h.b16 %v99
    %v719 = vunpack.c.l.b16 %v100
    %v720 = vunpack.c.h.b16 %v100
    %v721 = vunpack.c.l.b16 %v101
    %v722 = vunpack.c.h.b16 %v101
    %v723 = vunpack.c.l.b16 %v102
    %v724 = vunpack.c.h.b16 %v102
    %v725 = vunpack.c.l.b16 %v103
    %v726 = vunpack.c.h.b16 %v103
    %v727 = vunpack.c.l.b16 %v104
    %v728 = vunpack.c.h.b16 %v104
    %v729 = vunpack.c.l.b16 %v105
    %v730 = vunpack.c.h.b16 %v105
    %v731 = vunpack.c.l.b16 %v106
    %v732 = vunpack.c.h.b16 %v106
    %v733 = vunpack.c.l.b16 %v107
    %v734 = vunpack.c.h.b16 %v107
    %v735 = vunpack.c.l.b16 %v108
    %v736 = vunpack.c.h.b16 %v108
    %v737 = vunpack.c.l.b16 %v109
    %v738 = vunpack.c.h.b16 %v109
    %v739 = vunpack.c.l.b16 %v110
    %v740 = vunpack.c.h.b16 %v110
    %v741 = vunpack.c.l.b16 %v111
    %v742 = vunpack.c.h.b16 %v111
    %v743 = vunpack.c.l.b16 %v112
    %v744 = vunpack.c.h.b16 %v112
    %v745 = vunpack.c.l.b16 %v113
    %v746 = vunpack.c.h.b16 %v113
    %v747 = vunpack.c.l.b16 %v114
    %v748 = vunpack.c.h.b16 %v114
    %v749 = vunpack.c.l.b16 %v115
    %v750 = vunpack.c.h.b16 %v115
    %v751 = vunpack.c.l.b16 %v116
    %v752 = vunpack.c.h.b16 %v116
    %v753 = vunpack.c.l.b16 %v117
    %v754 = vunpack.c.h.b16 %v117
    %v755 = vunpack.c.l.b16 %v118
    %v756 = vunpack.c.h.b16 %v118
    %v757 = vunpack.c.l.b16 %v119
    %v758 = vunpack.c.h.b16 %v119
    %v759 = vunpack.c.l.b16 %v120
    %v760 = vunpack.c.h.b16 %v120
    %v761 = vunpack.c.l.b16 %v121
    %v762 = vunpack.c.h.b16 %v121
    %v763 = vunpack.c.l.b16 %v122
    %v764 = vunpack.c.h.b16 %v122
    %v765 = vunpack.c.l.b16 %v123
    %v766 = vunpack.c.h.b16 %v123
    %v767 = vunpack.c.l.b16 %v124
    %v768 = vunpack.c.h.b16 %v124
    %v769 = vunpack.c.l.b16 %v125
    %v770 = vunpack.c.h.b16 %v125
    %v771 = vunpack.c.l.b16 %v126
    %v772 = vunpack.c.h.b16 %v126
    %v773 = vunpack.c.l.b16 %v127
    %v774 = vunpack.c.h.b16 %v127
    %v775 = vunpack.c.l.b16 %v128
    %v776 = vunpack.c.h.b16 %v128
    %v777 = vunpack.c.l.b16 %v129
    %v778 = vunpack.c.h.b16 %v129
    %v779 = vunpack.c.l.b16 %v130
    %v780 = vunpack.c.h.b16 %v130
    %v781 = vunpack.c.l.b16 %v131
    %v782 = vunpack.c.h.b16 %v131
    %v783 = vunpack.c.l.b16 %v132
    %v784 = vunpack.c.h.b16 %v132
    %v785 = vunpack.c.l.b16 %v133
    %v786 = vunpack.c.h.b16 %v133
    %v787 = vunpack.c.l.b16 %v134
    %v788 = vunpack.c.h.b16 %v134
    %v789 = vunpack.c.l.b16 %v135
    %v790 = vunpack.c.h.b16 %v135
    %v791 = vunpack.c.l.b16 %v136
    %v792 = vunpack.c.h.b16 %v136
    %v793 = vunpack.c.l.b16 %v137
    %v794 = vunpack.c.h.b16 %v137
    %v795 = vunpack.c.l.b16 %v138
    %v796 = vunpack.c.h.b16 %v138
    %v797 = vunpack.c.l.b16 %v139
    %v798 = vunpack.c.h.b16 %v139
    %v799 = vunpack.c.l.b16 %v140
    %v800 = vunpack.c.h.b16 %v140
    %v801 = vunpack.c.l.b16 %v141
    %v802 = vunpack.c.h.b16 %v141
    %v803 = vunpack.c.l.b16 %v142
    %v804 = vunpack.c.h.b16 %v142
    %v805 = vunpack.c.l.b16 %v143
    %v806 = vunpack.c.h.b16 %v143
    %v807 = vunpack.c.l.b16 %v144
    %v808 = vunpack.c.h.b16 %v144
    %v809 = vunpack.c.l.b16 %v145
    %v810 = vunpack.c.h.b16 %v145
    %v811 = vunpack.c.l.b16 %v146
    %v812 = vunpack.c.h.b16 %v146
    %v813 = vunpack.c.l.b16 %v147
    %v814 = vunpack.c.h.b16 %v147
    %v815 = vunpack.c.l.b16 %v148
    %v816 = vunpack.c.h.b16 %v148
    %v817 = vunpack.c.l.b16 %v149
    %v818 = vunpack.c.h.b16 %v149
    %v819 = vunpack.c.l.b16 %v150
    %v820 = vunpack.c.h.b16 %v150
    %v821 = vunpack.c.l.b16 %v151
    %v822 = vunpack.c.h.b16 %v151
    %v823 = vunpack.c.l.b16 %v152
    %v824 = vunpack.c.h.b16 %v152
    %v825 = vunpack.c.l.b16 %v153
    %v826 = vunpack.c.h.b16 %v153
    %v827 = vunpack.c.l.b16 %v154
    %v828 = vunpack.c.h.b16 %v154
    %v829 = vunpack.c.l.b16 %v155
    %v830 = vunpack.c.h.b16 %v155
    %v831 = vunpack.c.l.b16 %v156
    %v832 = vunpack.c.h.b16 %v156
    %v833 = vunpack.c.l.b16 %v157
    %v834 = vunpack.c.h.b16 %v157
    %v835 = vunpack.c.l.b16 %v158
    %v836 = vunpack.c.h.b16 %v158
    %v837 = vunpack.c.l.b16 %v159
    %v838 = vunpack.c.h.b16 %v159
    %v839 = vunpack.c.l.b16 %v160
    %v840 = vunpack.c.h.b16 %v160
    %v841 = vunpack.c.l.b16 %v161
    %v842 = vunpack.c.h.b16 %v161
    %v843 = vunpack.c.l.b16 %v162
    %v844 = vunpack.c.h.b16 %v162
    %v845 = vunpack.c.l.b16 %v163
    %v846 = vunpack.c.h.b16 %v163
    %v847 = vunpack.c.l.b16 %v164
    %v848 = vunpack.c.h.b16 %v164
    %v849 = vunpack.c.l.b16 %v165
    %v850 = vunpack.c.h.b16 %v165
    %v851 = vunpack.c.l.b16 %v166
    %v852 = vunpack.c.h.b16 %v166
    %v853 = vunpack.c.l.b16 %v167
    %v854 = vunpack.c.h.b16 %v167
    %v855 = vunpack.c.l.b16 %v168
    %v856 = vunpack.c.h.b16 %v168
    %v857 = vunpack.c.l.b16 %v169
    %v858 = vunpack.c.h.b16 %v169
    %v859 = vunpack.c.l.b16 %v170
    %v860 = vunpack.c.h.b16 %v170
    %v861 = vunpack.c.l.b16 %v171
    %v862 = vunpack.c.h.b16 %v171
    %v863 = vunpack.c.l.b16 %v172
    %v864 = vunpack.c.h.b16 %v172
    %v865 = vunpack.c.l.b16 %v173
    %v866 = vunpack.c.h.b16 %v173
    %v867 = vunpack.c.l.b16 %v174
    %v868 = vunpack.c.h.b16 %v174
    %v869 = vunpack.c.l.b16 %v175
    %v870 = vunpack.c.h.b16 %v175
    %v871 = vunpack.c.l.b16 %v176
    %v872 = vunpack.c.h.b16 %v176
    %v873 = vunpack.c.l.b16 %v177
    %v874 = vunpack.c.h.b16 %v177
    %v875 = vunpack.c.l.b16 %v178
    %v876 = vunpack.c.h.b16 %v178
    %v877 = vunpack.c.l.b16 %v179
    %v878 = vunpack.c.h.b16 %v179
    %v879 = vunpack.c.l.b16 %v180
    %v880 = vunpack.c.h.b16 %v180
    %v881 = vunpack.c.l.b16 %v181
    %v882 = vunpack.c.h.b16 %v181
    %v883 = vunpack.c.l.b16 %v182
    %v884 = vunpack.c.h.b16 %v182
    %v885 = vunpack.c.l.b16 %v183
    %v886 = vunpack.c.h.b16 %v183
    %v887 = vunpack.c.l.b16 %v184
    %v888 = vunpack.c.h.b16 %v184
    %v889 = vunpack.c.l.b16 %v185
    %v890 = vunpack.c.h.b16 %v185
    %v891 = vunpack.c.l.b16 %v186
    %v892 = vunpack.c.h.b16 %v186
    %v893 = vunpack.c.l.b16 %v187
    %v894 = vunpack.c.h.b16 %v187
    %v895 = vunpack.c.l.b16 %v188
    %v896 = vunpack.c.h.b16 %v188
    %v897 = vunpack.c.l.b16 %v189
    %v898 = vunpack.c.h.b16 %v189
    %v899 = vunpack.c.l.b16 %v190
    %v900 = vunpack.c.h.b16 %v190
    %v901 = vunpack.c.l.b16 %v191
    %v902 = vunpack.c.h.b16 %v191
    %v903 = vunpack.c.l.b16 %v192
    %v904 = vunpack.c.h.b16 %v192
    %v905 = vunpack.c.l.b16 %v193
    %v906 = vunpack.c.h.b16 %v193
    %v907 = vunpack.c.l.b16 %v194
    %v908 = vunpack.c.h.b16 %v194
    %v909 = vunpack.c.l.b16 %v195
    %v910 = vunpack.c.h.b16 %v195
    %v911 = vunpack.c.l.b16 %v196
    %v912 = vunpack.c.h.b16 %v196
    %v913 = vunpack.c.l.b16 %v197
    %v914 = vunpack.c.h.b16 %v197
    %v915 = vunpack.c.l.b16 %v198
    %v916 = vunpack.c.h.b16 %v198
    %v917 = vunpack.c.l.b16 %v199
    %v918 = vunpack.c.h.b16 %v199
    %v919 = vunpack.c.l.b16 %v200
    %v920 = vunpack.c.h.b16 %v200
    %v921 = vunpack.c.l.b16 %v201
    %v922 = vunpack.c.h.b16 %v201
    %v923 = vunpack.c.l.b16 %v202
    %v924 = vunpack.c.h.b16 %v202
    %v925 = vunpack.c.l.b16 %v203
    %v926 = vunpack.c.h.b16 %v203
    %v927 = vunpack.c.l.b16 %v204
    %v928 = vunpack.c.h.b16 %v204
    %v929 = vunpack.c.l.b16 %v205
    %v930 = vunpack.c.h.b16 %v205
    %v931 = vunpack.c.l.b16 %v206
    %v932 = vunpack.c.h.b16 %v206
    %v933 = vunpack.c.l.b16 %v207
    %v934 = vunpack.c.h.b16 %v207
    %v935 = vunpack.c.l.b16 %v208
    %v936 = vunpack.c.h.b16 %v208
    %v937 = vunpack.c.l.b16 %v209
    %v938 = vunpack.c.h.b16 %v209
    %v939 = vunpack.c.l.b16 %v210
    %v940 = vunpack.c.h.b16 %v210
    %v941 = vunpack.c.l.b16 %v211
    %v942 = vunpack.c.h.b16 %v211
    %v943 = vunpack.c.l.b16 %v212
    %v944 = vunpack.c.h.b16 %v212
    %v945 = vunpack.c.l.b16 %v213
    %v946 = vunpack.c.h.b16 %v213
    %v947 = vunpack.c.l.b16 %v214
    %v948 = vunpack.c.h.b16 %v214
    %v949 = vunpack.c.l.b16 %v215
    %v950 = vunpack.c.h.b16 %v215
    %v951 = vunpack.c.l.b16 %v216
    %v952 = vunpack.c.h.b16 %v216
    %v953 = vunpack.c.l.b16 %v217
    %v954 = vunpack.c.h.b16 %v217
    %v955 = vunpack.c.l.b16 %v218
    %v956 = vunpack.c.h.b16 %v218
    %v957 = vunpack.c.l.b16 %v219
    %v958 = vunpack.c.h.b16 %v219
    %v959 = vunpack.c.l.b16 %v220
    %v960 = vunpack.c.h.b16 %v220
    %v961 = vunpack.c.l.b16 %v221
    %v962 = vunpack.c.h.b16 %v221
    %v963 = vunpack.c.l.b16 %v222
    %v964 = vunpack.c.h.b16 %v222
    %v965 = vunpack.c.l.b16 %v223
    %v966 = vunpack.c.h.b16 %v223
    %v967 = vunpack.c.l.b16 %v224
    %v968 = vunpack.c.h.b16 %v224
    %v969 = vunpack.c.l.b16 %v225
    %v970 = vunpack.c.h.b16 %v225
    %v971 = vunpack.c.l.b16 %v226
    %v972 = vunpack.c.h.b16 %v226
    %v973 = vunpack.c.l.b16 %v227
    %v974 = vunpack.c.h.b16 %v227
    %v975 = vunpack.c.l.b16 %v228
    %v976 = vunpack.c.h.b16 %v228
    %v977 = vunpack.c.l.b16 %v229
    %v978 = vunpack.c.h.b16 %v229
    %v979 = vunpack.c.l.b16 %v230
    %v980 = vunpack.c.h.b16 %v230
    %v981 = vunpack.c.l.b16 %v231
    %v982 = vunpack.c.h.b16 %v231
    %v983 = vunpack.c.l.b16 %v232
    %v984 = vunpack.c.h.b16 %v232
    %v985 = vunpack.c.l.b16 %v233
    %v986 = vunpack.c.h.b16 %v233
    %v987 = vunpack.c.l.b16 %v234
    %v988 = vunpack.c.h.b16 %v234
    %v989 = vunpack.c.l.b16 %v235
    %v990 = vunpack.c.h.b16 %v235
    %v991 = vunpack.c.l.b16 %v236
    %v992 = vunpack.c.h.b16 %v236
    %v993 = vunpack.c.l.b16 %v237
    %v994 = vunpack.c.h.b16 %v237
    %v995 = vunpack.c.l.b16 %v238
    %v996 = vunpack.c.h.b16 %v238
    %v997 = vunpack.c.l.b16 %v239
    %v998 = vunpack.c.h.b16 %v239
    %v999 = vunpack.c.l.b16 %v240
    %v1000 = vunpack.c.h.b16 %v240
    %v1001 = vunpack.c.l.b16 %v241
    %v1002 = vunpack.c.h.b16 %v241
    %v1003 = vunpack.c.l.b16 %v242
    %v1004 = vunpack.c.h.b16 %v242
    %v1005 = vunpack.c.l.b16 %v243
    %v1006 = vunpack.c.h.b16 %v243
    %v1007 = vunpack.c.l.b16 %v244
    %v1008 = vunpack.c.h.b16 %v244
    %v1009 = vunpack.c.l.b16 %v245
    %v1010 = vunpack.c.h.b16 %v245
    %v1011 = vunpack.c.l.b16 %v246
    %v1012 = vunpack.c.h.b16 %v246
    %v1013 = vunpack.c.l.b16 %v247
    %v1014 = vunpack.c.h.b16 %v247
    %v1015 = vunpack.c.l.b16 %v248
    %v1016 = vunpack.c.h.b16 %v248
    %v1017 = vunpack.c.l.b16 %v249
    %v1018 = vunpack.c.h.b16 %v249
    %v1019 = vunpack.c.l.b16 %v250
    %v1020 = vunpack.c.h.b16 %v250
    %v1021 = vunpack.c.l.b16 %v251
    %v1022 = vunpack.c.h.b16 %v251
    %v1023 = vunpack.c.l.b16 %v252
    %v1024 = vunpack.c.h.b16 %v252
    %v1025 = vunpack.c.l.b16 %v253
    %v1026 = vunpack.c.h.b16 %v253
    %v1027 = vunpack.c.l.b16 %v254
    %v1028 = vunpack.c.h.b16 %v254
    %v1029 = vunpack.c.l.b16 %v255
    %v1030 = vunpack.c.h.b16 %v255
    %v1031 = vunpack.c.l.b16 %v256
    %v1032 = vunpack.c.h.b16 %v256
    %v1033 = vunpack.c.l.b16 %v257
    %v1034 = vunpack.c.h.b16 %v257
    %v1035 = vunpack.c.l.b16 %v258
    %v1036 = vunpack.c.h.b16 %v258
    %v1037 = vunpack.c.l.b16 %v259
    %v1038 = vunpack.c.h.b16 %v259
    %v1039 = vunpack.c.l.b16 %v260
    %v1040 = vunpack.c.h.b16 %v260
    %v1041 = vunpack.c.l.b16 %v261
    %v1042 = vunpack.c.h.b16 %v261
    %v1043 = vunpack.c.l.b16 %v262
    %v1044 = vunpack.c.h.b16 %v262
    %v1045 = vunpack.c.l.b16 %v263
    %v1046 = vunpack.c.h.b16 %v263
    %v1047 = vunpack.c.l.b16 %v264
    %v1048 = vunpack.c.h.b16 %v264
    %v1049 = vunpack.c.l.b16 %v265
    %v1050 = vunpack.c.h.b16 %v265
    %v1051 = vunpack.c.l.b16 %v266
    %v1052 = vunpack.c.h.b16 %v266
    %v1053 = vunpack.c.l.b16 %v267
    %v1054 = vunpack.c.h.b16 %v267
    %v1055 = vunpack.c.l.b16 %v268
    %v1056 = vunpack.c.h.b16 %v268
    %v1057 = vunpack.c.l.b16 %v269
    %v1058 = vunpack.c.h.b16 %v269
    %v1059 = vunpack.c.l.b16 %v270
    %v1060 = vunpack.c.h.b16 %v270
    %v1061 = vunpack.c.l.b16 %v271
    %v1062 = vunpack.c.h.b16 %v271
    %v1063 = vpack.c.b16 %v553, %v551
    %v1064 = vpack.c.b16 %v554, %v552
    %v1065 = vpack.c.b16 %v557, %v555
    %v1066 = vpack.c.b16 %v558, %v556
    %v1067 = vpack.c.b16 %v561, %v559
    %v1068 = vpack.c.b16 %v562, %v560
    %v1069 = vpack.c.b16 %v565, %v563
    %v1070 = vpack.c.b16 %v566, %v564
    %v1071 = vpack.c.b16 %v569, %v567
    %v1072 = vpack.c.b16 %v570, %v568
    %v1073 = vpack.c.b16 %v573, %v571
    %v1074 = vpack.c.b16 %v574, %v572
    %v1075 = vpack.c.b16 %v577, %v575
    %v1076 = vpack.c.b16 %v578, %v576
    %v1077 = vpack.c.b16 %v581, %v579
    %v1078 = vpack.c.b16 %v582, %v580
    %v1079 = vpack.c.b16 %v585, %v583
    %v1080 = vpack.c.b16 %v586, %v584
    %v1081 = vpack.c.b16 %v589, %v587
    %v1082 = vpack.c.b16 %v590, %v588
    %v1083 = vpack.c.b16 %v593, %v591
    %v1084 = vpack.c.b16 %v594, %v592
    %v1085 = vpack.c.b16 %v597, %v595
    %v1086 = vpack.c.b16 %v598, %v596
    %v1087 = vpack.c.b16 %v601, %v599
    %v1088 = vpack.c.b16 %v602, %v600
    %v1089 = vpack.c.b16 %v605, %v603
    %v1090 = vpack.c.b16 %v606, %v604
    %v1091 = vpack.c.b16 %v609, %v607
    %v1092 = vpack.c.b16 %v610, %v608
    %v1093 = vpack.c.b16 %v613, %v611
    %v1094 = vpack.c.b16 %v614, %v612
    %v1095 = vpack.c.b16 %v617, %v615
    %v1096 = vpack.c.b16 %v618, %v616
    %v1097 = vpack.c.b16 %v621, %v619
    %v1098 = vpack.c.b16 %v622, %v620
    %v1099 = vpack.c.b16 %v625, %v623
    %v1100 = vpack.c.b16 %v626, %v624
    %v1101 = vpack.c.b16 %v629, %v627
    %v1102 = vpack.c.b16 %v630, %v628
    %v1103 = vpack.c.b16 %v633, %v631
    %v1104 = vpack.c.b16 %v634, %v632
    %v1105 = vpack.c.b16 %v637, %v635
    %v1106 = vpack.c.b16 %v638, %v636
    %v1107 = vpack.c.b16 %v641, %v639
    %v1108 = vpack.c.b16 %v642, %v640
    %v1109 = vpack.c.b16 %v645, %v643
    %v1110 = vpack.c.b16 %v646, %v644
    %v1111 = vpack.c.b16 %v649, %v647
    %v1112 = vpack.c.b16 %v650, %v648
    %v1113 = vpack.c.b16 %v653, %v651
    %v1114 = vpack.c.b16 %v654, %v652
    %v1115 = vpack.c.b16 %v657, %v655
    %v1116 = vpack.c.b16 %v658, %v656
    %v1117 = vpack.c.b16 %v661, %v659
    %v1118 = vpack.c.b16 %v662, %v660
    %v1119 = vpack.c.b16 %v665, %v663
    %v1120 = vpack.c.b16 %v666, %v664
    %v1121 = vpack.c.b16 %v669, %v667
    %v1122 = vpack.c.b16 %v670, %v668
    %v1123 = vpack.c.b16 %v673, %v671
    %v1124 = vpack.c.b16 %v674, %v672
    %v1125 = vpack.c.b16 %v677, %v675
    %v1126 = vpack.c.b16 %v678, %v676
    %v1127 = vpack.c.b16 %v681, %v679
    %v1128 = vpack.c.b16 %v682, %v680
    %v1129 = vpack.c.b16 %v685, %v683
    %v1130 = vpack.c.b16 %v686, %v684
    %v1131 = vpack.c.b16 %v689, %v687
    %v1132 = vpack.c.b16 %v690, %v688
    %v1133 = vpack.c.b16 %v693, %v691
    %v1134 = vpack.c.b16 %v694, %v692
    %v1135 = vpack.c.b16 %v697, %v695
    %v1136 = vpack.c.b16 %v698, %v696
    %v1137 = vpack.c.b16 %v701, %v699
    %v1138 = vpack.c.b16 %v702, %v700
    %v1139 = vpack.c.b16 %v705, %v703
    %v1140 = vpack.c.b16 %v706, %v704
    %v1141 = vpack.c.b16 %v709, %v707
    %v1142 = vpack.c.b16 %v710, %v708
    %v1143 = vpack.c.b16 %v713, %v711
    %v1144 = vpack.c.b16 %v714, %v712
    %v1145 = vpack.c.b16 %v717, %v715
    %v1146 = vpack.c.b16 %v718, %v716
    %v1147 = vpack.c.b16 %v721, %v719
    %v1148 = vpack.c.b16 %v722, %v720
    %v1149 = vpack.c.b16 %v725, %v723
    %v1150 = vpack.c.b16 %v726, %v724
    %v1151 = vpack.c.b16 %v729, %v727
    %v1152 = vpack.c.b16 %v730, %v728
    %v1153 = vpack.c.b16 %v733, %v731
    %v1154 = vpack.c.b16 %v734, %v732
    %v1155 = vpack.c.b16 %v737, %v735
    %v1156 = vpack.c.b16 %v738, %v736
    %v1157 = vpack.c.b16 %v741, %v739
    %v1158 = vpack.c.b16 %v742, %v740
    %v1159 = vpack.c.b16 %v745, %v743
    %v1160 = vpack.c.b16 %v746, %v744
    %v1161 = vpack.c.b16 %v749, %v747
    %v1162 = vpack.c.b16 %v750, %v748
    %v1163 = vpack.c.b16 %v753, %v751
    %v1164 = vpack.c.b16 %v754, %v752
    %v1165 = vpack.c.b16 %v757, %v755
    %v1166 = vpack.c.b16 %v758, %v756
    %v1167 = vpack.c.b16 %v761, %v759
    %v1168 = vpack.c.b16 %v762, %v760
    %v1169 = vpack.c.b16 %v765, %v763
    %v1170 = vpack.c.b16 %v766, %v764
    %v1171 = vpack.c.b16 %v769, %v767
    %v1172 = vpack.c.b16 %v770, %v768
    %v1173 = vpack.c.b16 %v773, %v771
    %v1174 = vpack.c.b16 %v774, %v772
    %v1175 = vpack.c.b16 %v777, %v775
    %v1176 = vpack.c.b16 %v778, %v776
    %v1177 = vpack.c.b16 %v781, %v779
    %v1178 = vpack.c.b16 %v782, %v780
    %v1179 = vpack.c.b16 %v785, %v783
    %v1180 = vpack.c.b16 %v786, %v784
    %v1181 = vpack.c.b16 %v789, %v787
    %v1182 = vpack.c.b16 %v790, %v788
    %v1183 = vpack.c.b16 %v793, %v791
    %v1184 = vpack.c.b16 %v794, %v792
    %v1185 = vpack.c.b16 %v797, %v795
    %v1186 = vpack.c.b16 %v798, %v796
    %v1187 = vpack.c.b16 %v801, %v799
    %v1188 = vpack.c.b16 %v802, %v800
    %v1189 = vpack.c.b16 %v805, %v803
    %v1190 = vpack.c.b16 %v806, %v804
    %v1191 = vpack.c.b16 %v809, %v807
    %v1192 = vpack.c.b16 %v810, %v808
    %v1193 = vpack.c.b16 %v813, %v811
    %v1194 = vpack.c.b16 %v814, %v812
    %v1195 = vpack.c.b16 %v817, %v815
    %v1196 = vpack.c.b16 %v818, %v816
    %v1197 = vpack.c.b16 %v821, %v819
    %v1198 = vpack.c.b16 %v822, %v820
    %v1199 = vpack.c.b16 %v825, %v823
    %v1200 = vpack.c.b16 %v826, %v824
    %v1201 = vpack.c.b16 %v829, %v827
    %v1202 = vpack.c.b16 %v830, %v828
    %v1203 = vpack.c.b16 %v833, %v831
    %v1204 = vpack.c.b16 %v834, %v832
    %v1205 = vpack.c.b16 %v837, %v835
    %v1206 = vpack.c.b16 %v838, %v836
    %v1207 = vpack.c.b16 %v841, %v839
    %v1208 = vpack.c.b16 %v842, %v840
    %v1209 = vpack.c.b16 %v845, %v843
    %v1210 = vpack.c.b16 %v846, %v844
    %v1211 = vpack.c.b16 %v849, %v847
    %v1212 = vpack.c.b16 %v850, %v848
    %v1213 = vpack.c.b16 %v853, %v851
    %v1214 = vpack.c.b16 %v854, %v852
    %v1215 = vpack.c.b16 %v857, %v855
    %v1216 = vpack.c.b16 %v858, %v856
    %v1217 = vpack.c.b16 %v861, %v859
    %v1218 = vpack.c.b16 %v862, %v860
    %v1219 = vpack.c.b16 %v865, %v863
    %v1220 = vpack.c.b16 %v866, %v864
    %v1221 = vpack.c.b16 %v869, %v867
    %v1222 = vpack.c.b16 %v870, %v868
    %v1223 = vpack.c.b16 %v873, %v871
    %v1224 = vpack.c.b16 %v874, %v872
    %v1225 = vpack.c.b16 %v877, %v875
    %v1226 = vpack.c.b16 %v878, %v876
    %v1227 = vpack.c.b16 %v881, %v879
    %v1228 = vpack.c.b16 %v882, %v880
    %v1229 = vpack.c.b16 %v885, %v883
    %v1230 = vpack.c.b16 %v886, %v884
    %v1231 = vpack.c.b16 %v889, %v887
    %v1232 = vpack.c.b16 %v890, %v888
    %v1233 = vpack.c.b16 %v893, %v891
    %v1234 = vpack.c.b16 %v894, %v892
    %v1235 = vpack.c.b16 %v897, %v895
    %v1236 = vpack.c.b16 %v898, %v896
    %v1237 = vpack.c.b16 %v901, %v899
    %v1238 = vpack.c.b16 %v902, %v900
    %v1239 = vpack.c.b16 %v905, %v903
    %v1240 = vpack.c.b16 %v906, %v904
    %v1241 = vpack.c.b16 %v909, %v907
    %v1242 = vpack.c.b16 %v910, %v908
    %v1243 = vpack.c.b16 %v913, %v911
    %v1244 = vpack.c.b16 %v914, %v912
    %v1245 = vpack.c.b16 %v917, %v915
    %v1246 = vpack.c.b16 %v918, %v916
    %v1247 = vpack.c.b16 %v921, %v919
    %v1248 = vpack.c.b16 %v922, %v920
    %v1249 = vpack.c.b16 %v925, %v923
    %v1250 = vpack.c.b16 %v926, %v924
    %v1251 = vpack.c.b16 %v929, %v927
    %v1252 = vpack.c.b16 %v930, %v928
    %v1253 = vpack.c.b16 %v933, %v931
    %v1254 = vpack.c.b16 %v934, %v932
    %v1255 = vpack.c.b16 %v937, %v935
    %v1256 = vpack.c.b16 %v938, %v936
    %v1257 = vpack.c.b16 %v941, %v939
    %v1258 = vpack.c.b16 %v942, %v940
    %v1259 = vpack.c.b16 %v945, %v943
    %v1260 = vpack.c.b16 %v946, %v944
    %v1261 = vpack.c.b16 %v949, %v947
    %v1262 = vpack.c.b16 %v950, %v948
    %v1263 = vpack.c.b16 %v953, %v951
    %v1264 = vpack.c.b16 %v954, %v952
    %v1265 = vpack.c.b16 %v957, %v955
    %v1266 = vpack.c.b16 %v958, %v956
    %v1267 = vpack.c.b16 %v961, %v959
    %v1268 = vpack.c.b16 %v962, %v960
    %v1269 = vpack.c.b16 %v965, %v963
    %v1270 = vpack.c.b16 %v966, %v964
    %v1271 = vpack.c.b16 %v969, %v967
    %v1272 = vpack.c.b16 %v970, %v968
    %v1273 = vpack.c.b16 %v973, %v971
    %v1274 = vpack.c.b16 %v974, %v972
    %v1275 = vpack.c.b16 %v977, %v975
    %v1276 = vpack.c.b16 %v978, %v976
    %v1277 = vpack.c.b16 %v981, %v979
    %v1278 = vpack.c.b16 %v982, %v980
    %v1279 = vpack.c.b16 %v985, %v983
    %v1280 = vpack.c.b16 %v986, %v984
    %v1281 = vpack.c.b16 %v989, %v987
    %v1282 = vpack.c.b16 %v990, %v988
    %v1283 = vpack.c.b16 %v993, %v991
    %v1284 = vpack.c.b16 %v994, %v992
    %v1285 = vpack.c.b16 %v997, %v995
    %v1286 = vpack.c.b16 %v998, %v996
    %v1287 = vpack.c.b16 %v1001, %v999
    %v1288 = vpack.c.b16 %v1002, %v1000
    %v1289 = vpack.c.b16 %v1005, %v1003
    %v1290 = vpack.c.b16 %v1006, %v1004
    %v1291 = vpack.c.b16 %v1009, %v1007
    %v1292 = vpack.c.b16 %v1010, %v1008
    %v1293 = vpack.c.b16 %v1013, %v1011
    %v1294 = vpack.c.b16 %v1014, %v1012
    %v1295 = vpack.c.b16 %v1017, %v1015
    %v1296 = vpack.c.b16 %v1018, %v1016
    %v1297 = vpack.c.b16 %v1021, %v1019
    %v1298 = vpack.c.b16 %v1022, %v1020
    %v1299 = vpack.c.b16 %v1025, %v1023
    %v1300 = vpack.c.b16 %v1026, %v1024
    %v1301 = vpack.c.b16 %v1029, %v1027
    %v1302 = vpack.c.b16 %v1030, %v1028
    %v1303 = vpack.c.b16 %v1033, %v1031
    %v1304 = vpack.c.b16 %v1034, %v1032
    %v1305 = vpack.c.b16 %v1037, %v1035
    %v1306 = vpack.c.b16 %v1038, %v1036
    %v1307 = vpack.c.b16 %v1041, %v1039
    %v1308 = vpack.c.b16 %v1042, %v1040
    %v1309 = vpack.c.b16 %v1045, %v1043
    %v1310 = vpack.c.b16 %v1046, %v1044
    %v1311 = vpack.c.b16 %v1049, %v1047
    %v1312 = vpack.c.b16 %v1050, %v1048
    %v1313 = vpack.c.b16 %v1053, %v1051
    %v1314 = vpack.c.b16 %v1054, %v1052
    %v1315 = vpack.c.b16 %v1057, %v1055
    %v1316 = vpack.c.b16 %v1058, %v1056
    %v1317 = vpack.c.b16 %v1061, %v1059
    %v1318 = vpack.c.b16 %v1062, %v1060
    %v1466 = vunpack.c.l.b16 %v272
    %v1467 = vunpack.c.l.b16 %v273
    %v1468 = vunpack.c.l.b16 %v274
    %v1469 = vunpack.c.l.b16 %v275
    %v1470 = vunpack.c.l.b16 %v276
    %v1471 = vunpack.c.l.b16 %v277
    %v1472 = vunpack.c.l.b16 %v278
    %v1473 = vunpack.c.l.b16 %v279
    %v1474 = vunpack.c.l.b16 %v280
    %v1475 = vunpack.c.l.b16 %v281
    %v1476 = vunpack.c.l.b16 %v282
    %v1477 = vunpack.c.l.b16 %v283
    %v1478 = vunpack.c.l.b16 %v284
    %v1479 = vunpack.c.l.b16 %v285
    %v1480 = vunpack.c.l.b16 %v286
    %v1481 = vunpack.c.l.b16 %v287
    %v1482 = vunpack.c.l.b16 %v288
    %v1483 = vunpack.c.l.b16 %v289
    %v1484 = vunpack.c.l.b16 %v290
    %v1485 = vpack.c.b16 %v1467, %v1466
    %v1486 = vpack.c.b16 %v1469, %v1468
    %v1487 = vpack.c.b16 %v1471, %v1470
    %v1488 = vpack.c.b16 %v1473, %v1472
    %v1489 = vpack.c.b16 %v1475, %v1474
    %v1490 = vpack.c.b16 %v1477, %v1476
    %v1491 = vpack.c.b16 %v1479, %v1478
    %v1492 = vpack.c.b16 %v1481, %v1480
    %v1493 = vpack.c.b16 %v1483, %v1482
    %v1494 = vpack.c.b16 %v1484, %v1484
    %vm1504 = vcmask 154624
    %v1506 = vsel %vm1504, %v1064, 0
    %v1509 = vsel %vm1504, %v1066, 0
    %v1512 = vsel %vm1504, %v1068, 0
    %v1515 = vsel %vm1504, %v1070, 0
    %v1518 = vsel %vm1504, %v1072, 0
    %v1521 = vsel %vm1504, %v1074, 0
    %v1524 = vsel %vm1504, %v1076, 0
    %v1527 = vsel %vm1504, %v1078, 0
    %v1530 = vsel %vm1504, %v1080, 0
    %v1533 = vsel %vm1504, %v1082, 0
    %v1536 = vsel %vm1504, %v1084, 0
    %v1539 = vsel %vm1504, %v1086, 0
    %v1542 = vsel %vm1504, %v1088, 0
    %v1545 = vsel %vm1504, %v1090, 0
    %v1548 = vsel %vm1504, %v1092, 0
    %v1551 = vsel %vm1504, %v1094, 0
    %v1554 = vsel %vm1504, %v1096, 0
    %v1557 = vsel %vm1504, %v1098, 0
    %v1560 = vsel %vm1504, %v1100, 0
    %v1563 = vsel %vm1504, %v1102, 0
    %v1566 = vsel %vm1504, %v1104, 0
    %v1569 = vsel %vm1504, %v1106, 0
    %v1572 = vsel %vm1504, %v1108, 0
    %v1575 = vsel %vm1504, %v1110, 0
    %v1578 = vsel %vm1504, %v1112, 0
    %v1581 = vsel %vm1504, %v1114, 0
    %v1584 = vsel %vm1504, %v1116, 0
    %v1587 = vsel %vm1504, %v1118, 0
    %v1590 = vsel %vm1504, %v1120, 0
    %v1593 = vsel %vm1504, %v1122, 0
    %v1596 = vsel %vm1504, %v1124, 0
    %v1599 = vsel %vm1504, %v1126, 0
    %v1602 = vsel %vm1504, %v1128, 0
    %v1605 = vsel %vm1504, %v1130, 0
    %v1608 = vsel %vm1504, %v1132, 0
    %v1611 = vsel %vm1504, %v1134, 0
    %v1614 = vsel %vm1504, %v1136, 0
    %v1617 = vsel %vm1504, %v1138, 0
    %v1620 = vsel %vm1504, %v1140, 0
    %v1623 = vsel %vm1504, %v1142, 0
    %v1626 = vsel %vm1504, %v1144, 0
    %v1629 = vsel %vm1504, %v1146, 0
    %v1632 = vsel %vm1504, %v1148, 0
    %v1635 = vsel %vm1504, %v1150, 0
    %v1638 = vsel %vm1504, %v1152, 0
    %v1641 = vsel %vm1504, %v1154, 0
    %v1644 = vsel %vm1504, %v1156, 0
    %v1647 = vsel %vm1504, %v1158, 0
    %v1650 = vsel %vm1504, %v1160, 0
    %v1653 = vsel %vm1504, %v1162, 0
    %v1656 = vsel %vm1504, %v1164, 0
    %v1659 = vsel %vm1504, %v1166, 0
    %v1662 = vsel %vm1504, %v1168, 0
    %v1665 = vsel %vm1504, %v1170, 0
    %v1668 = vsel %vm1504, %v1172, 0
    %v1671 = vsel %vm1504, %v1174, 0
    %v1674 = vsel %vm1504, %v1176, 0
    %v1677 = vsel %vm1504, %v1178, 0
    %v1680 = vsel %vm1504, %v1180, 0
    %v1683 = vsel %vm1504, %v1182, 0
    %v1686 = vsel %vm1504, %v1184, 0
    %v1689 = vsel %vm1504, %v1186, 0
    %v1692 = vsel %vm1504, %v1188, 0
    %v1695 = vsel %vm1504, %v1190, 0
    %v1698 = vsel %vm1504, %v1192, 0
    %v1701 = vsel %vm1504, %v1194, 0
    %v1704 = vsel %vm1504, %v1196, 0
    %v1707 = vsel %vm1504, %v1198, 0
    %v1710 = vsel %vm1504, %v1200, 0
    %v1713 = vsel %vm1504, %v1202, 0
    %v1716 = vsel %vm1504, %v1204, 0
    %v1719 = vsel %vm1504, %v1206, 0
    %v1722 = vsel %vm1504, %v1208, 0
    %v1725 = vsel %vm1504, %v1210, 0
    %v1728 = vsel %vm1504, %v1212, 0
    %v1731 = vsel %vm1504, %v1214, 0
    %v1734 = vsel %vm1504, %v1216, 0
    %v1737 = vsel %vm1504, %v1218, 0
    %v1740 = vsel %vm1504, %v1220, 0
    %v1743 = vsel %vm1504, %v1222, 0
    %v1746 = vsel %vm1504, %v1224, 0
    %v1749 = vsel %vm1504, %v1226, 0
    %v1752 = vsel %vm1504, %v1228, 0
    %v1755 = vsel %vm1504, %v1230, 0
    %v1758 = vsel %vm1504, %v1232, 0
    %v1761 = vsel %vm1504, %v1234, 0
    %v1764 = vsel %vm1504, %v1236, 0
    %v1767 = vsel %vm1504, %v1238, 0
    %v1770 = vsel %vm1504, %v1240, 0
    %v1773 = vsel %vm1504, %v1242, 0
    %v1776 = vsel %vm1504, %v1244, 0
    %v1779 = vsel %vm1504, %v1246, 0
    %v1782 = vsel %vm1504, %v1248, 0
    %v1785 = vsel %vm1504, %v1250, 0
    %v1788 = vsel %vm1504, %v1252, 0
    %v1791 = vsel %vm1504, %v1254, 0
    %v1794 = vsel %vm1504, %v1256, 0
    %v1797 = vsel %vm1504, %v1258, 0
    %v1800 = vsel %vm1504, %v1260, 0
    %v1803 = vsel %vm1504, %v1262, 0
    %v1806 = vsel %vm1504, %v1264, 0
    %v1809 = vsel %vm1504, %v1266, 0
    %v1812 = vsel %vm1504, %v1268, 0
    %v1815 = vsel %vm1504, %v1270, 0
    %v1818 = vsel %vm1504, %v1272, 0
    %v1821 = vsel %vm1504, %v1274, 0
    %v1824 = vsel %vm1504, %v1276, 0
    %v1827 = vsel %vm1504, %v1278, 0
    %v1830 = vsel %vm1504, %v1280, 0
    %v1833 = vsel %vm1504, %v1282, 0
    %v1836 = vsel %vm1504, %v1284, 0
    %v1839 = vsel %vm1504, %v1286, 0
    %v1842 = vsel %vm1504, %v1288, 0
    %v1845 = vsel %vm1504, %v1290, 0
    %v1848 = vsel %vm1504, %v1292, 0
    %v1851 = vsel %vm1504, %v1294, 0
    %v1854 = vsel %vm1504, %v1296, 0
    %v1857 = vsel %vm1504, %v1298, 0
    %v1860 = vsel %vm1504, %v1300, 0
    %v1863 = vsel %vm1504, %v1302, 0
    %v1866 = vsel %vm1504, %v1304, 0
    %v1869 = vsel %vm1504, %v1306, 0
    %v1872 = vsel %vm1504, %v1308, 0
    %v1875 = vsel %vm1504, %v1310, 0
    %v1878 = vsel %vm1504, %v1312, 0
    %v1881 = vsel %vm1504, %v1314, 0
    %v1884 = vsel %vm1504, %v1316, 0
    %v1887 = vsel %vm1504, %v1318, 0
    %vm1889 = vcmask 1040384
    %vm1890 = vcmask 1041408
    %v1891 = vsel %vm1889, 4294967295, 65535
    %v1892 = vsel %vm1890, %v1891, 0
    %v1894 = vand.u32 %v1494, %v1892
    %1896 = vmatpush.bf16.msra.mxu0 %v1492
    %1897 = vmatpush.bf16.msra.mxu0 %v1491
    %1898 = vmatpush.bf16.msra.mxu0 %v1490
    %1899 = vmatpush.bf16.msra.mxu0 %v1489
    %1900 = vmatpush.bf16.msra.mxu0 %v1488
    %1901 = vmatpush.bf16.msra.mxu0 %v1487
    %1902 = vmatpush.bf16.msra.mxu0 %v1486
    %1903 = vmatpush.bf16.msra.mxu0 %v1485
    %1904 = vmatmul.bf16.gmra.mxu0 %v1063
    %v1905 = vpop.f32.mrf.mxu0
    %v1906 = vadd.f32 %v293, %v1905
    %v1907 = vpop.f32.mrf.mxu0
    %v1908 = vadd.f32 %v293, %v1907
    %1909 = vmatmul.bf16.gmra.mxu0 %v1065
    %v1910 = vpop.f32.mrf.mxu0
    %v1911 = vadd.f32 %v293, %v1910
    %v1912 = vpop.f32.mrf.mxu0
    %v1913 = vadd.f32 %v293, %v1912
    %1914 = vmatmul.bf16.gmra.mxu0 %v1067
    %v1915 = vpop.f32.mrf.mxu0
    %v1916 = vadd.f32 %v293, %v1915
    %v1917 = vpop.f32.mrf.mxu0
    %v1918 = vadd.f32 %v293, %v1917
    %1919 = vmatmul.bf16.gmra.mxu0 %v1069
    %v1920 = vpop.f32.mrf.mxu0
    %v1921 = vadd.f32 %v293, %v1920
    %v1922 = vpop.f32.mrf.mxu0
    %v1923 = vadd.f32 %v293, %v1922
    %1924 = vmatmul.bf16.gmra.mxu0 %v1071
    %v1925 = vpop.f32.mrf.mxu0
    %v1926 = vadd.f32 %v293, %v1925
    %v1927 = vpop.f32.mrf.mxu0
    %v1928 = vadd.f32 %v293, %v1927
    %1929 = vmatmul.bf16.gmra.mxu0 %v1073
    %v1930 = vpop.f32.mrf.mxu0
    %v1931 = vadd.f32 %v293, %v1930
    %v1932 = vpop.f32.mrf.mxu0
    %v1933 = vadd.f32 %v293, %v1932
    %1934 = vmatmul.bf16.gmra.mxu0 %v1075
    %v1935 = vpop.f32.mrf.mxu0
    %v1936 = vadd.f32 %v293, %v1935
    %v1937 = vpop.f32.mrf.mxu0
    %v1938 = vadd.f32 %v293, %v1937
    %1939 = vmatmul.bf16.gmra.mxu0 %v1077
    %v1940 = vpop.f32.mrf.mxu0
    %v1941 = vadd.f32 %v293, %v1940
    %v1942 = vpop.f32.mrf.mxu0
    %v1943 = vadd.f32 %v293, %v1942
    %1944 = vmatmul.bf16.gmra.mxu0 %v1079
    %v1945 = vpop.f32.mrf.mxu0
    %v1946 = vadd.f32 %v293, %v1945
    %v1947 = vpop.f32.mrf.mxu0
    %v1948 = vadd.f32 %v293, %v1947
    %1949 = vmatmul.bf16.gmra.mxu0 %v1081
    %v1950 = vpop.f32.mrf.mxu0
    %v1951 = vadd.f32 %v293, %v1950
    %v1952 = vpop.f32.mrf.mxu0
    %v1953 = vadd.f32 %v293, %v1952
    %1954 = vmatmul.bf16.gmra.mxu0 %v1083
    %v1955 = vpop.f32.mrf.mxu0
    %v1956 = vadd.f32 %v293, %v1955
    %v1957 = vpop.f32.mrf.mxu0
    %v1958 = vadd.f32 %v293, %v1957
    %1959 = vmatmul.bf16.gmra.mxu0 %v1085
    %v1960 = vpop.f32.mrf.mxu0
    %v1961 = vadd.f32 %v293, %v1960
    %v1962 = vpop.f32.mrf.mxu0
    %v1963 = vadd.f32 %v293, %v1962
    %1964 = vmatmul.bf16.gmra.mxu0 %v1087
    %v1965 = vpop.f32.mrf.mxu0
    %v1966 = vadd.f32 %v293, %v1965
    %v1967 = vpop.f32.mrf.mxu0
    %v1968 = vadd.f32 %v293, %v1967
    %1969 = vmatmul.bf16.gmra.mxu0 %v1089
    %v1970 = vpop.f32.mrf.mxu0
    %v1971 = vadd.f32 %v293, %v1970
    %v1972 = vpop.f32.mrf.mxu0
    %v1973 = vadd.f32 %v293, %v1972
    %1974 = vmatmul.bf16.gmra.mxu0 %v1091
    %v1975 = vpop.f32.mrf.mxu0
    %v1976 = vadd.f32 %v293, %v1975
    %v1977 = vpop.f32.mrf.mxu0
    %v1978 = vadd.f32 %v293, %v1977
    %1979 = vmatmul.bf16.gmra.mxu0 %v1093
    %v1980 = vpop.f32.mrf.mxu0
    %v1981 = vadd.f32 %v293, %v1980
    %v1982 = vpop.f32.mrf.mxu0
    %v1983 = vadd.f32 %v293, %v1982
    %1984 = vmatmul.bf16.gmra.mxu0 %v1095
    %v1985 = vpop.f32.mrf.mxu0
    %v1986 = vadd.f32 %v293, %v1985
    %v1987 = vpop.f32.mrf.mxu0
    %v1988 = vadd.f32 %v293, %v1987
    %1989 = vmatmul.bf16.gmra.mxu0 %v1097
    %v1990 = vpop.f32.mrf.mxu0
    %v1991 = vadd.f32 %v293, %v1990
    %v1992 = vpop.f32.mrf.mxu0
    %v1993 = vadd.f32 %v293, %v1992
    %1994 = vmatmul.bf16.gmra.mxu0 %v1099
    %v1995 = vpop.f32.mrf.mxu0
    %v1996 = vadd.f32 %v293, %v1995
    %v1997 = vpop.f32.mrf.mxu0
    %v1998 = vadd.f32 %v293, %v1997
    %1999 = vmatmul.bf16.gmra.mxu0 %v1101
    %v2000 = vpop.f32.mrf.mxu0
    %v2001 = vadd.f32 %v293, %v2000
    %v2002 = vpop.f32.mrf.mxu0
    %v2003 = vadd.f32 %v293, %v2002
    %2004 = vmatmul.bf16.gmra.mxu0 %v1103
    %v2005 = vpop.f32.mrf.mxu0
    %v2006 = vadd.f32 %v293, %v2005
    %v2007 = vpop.f32.mrf.mxu0
    %v2008 = vadd.f32 %v293, %v2007
    %2009 = vmatmul.bf16.gmra.mxu0 %v1105
    %v2010 = vpop.f32.mrf.mxu0
    %v2011 = vadd.f32 %v293, %v2010
    %v2012 = vpop.f32.mrf.mxu0
    %v2013 = vadd.f32 %v293, %v2012
    %2014 = vmatmul.bf16.gmra.mxu0 %v1107
    %v2015 = vpop.f32.mrf.mxu0
    %v2016 = vadd.f32 %v293, %v2015
    %v2017 = vpop.f32.mrf.mxu0
    %v2018 = vadd.f32 %v293, %v2017
    %2019 = vmatmul.bf16.gmra.mxu0 %v1109
    %v2020 = vpop.f32.mrf.mxu0
    %v2021 = vadd.f32 %v293, %v2020
    %v2022 = vpop.f32.mrf.mxu0
    %v2023 = vadd.f32 %v293, %v2022
    %2024 = vmatmul.bf16.gmra.mxu0 %v1111
    %v2025 = vpop.f32.mrf.mxu0
    %v2026 = vadd.f32 %v293, %v2025
    %v2027 = vpop.f32.mrf.mxu0
    %v2028 = vadd.f32 %v293, %v2027
    %2029 = vmatmul.bf16.gmra.mxu0 %v1113
    %v2030 = vpop.f32.mrf.mxu0
    %v2031 = vadd.f32 %v293, %v2030
    %v2032 = vpop.f32.mrf.mxu0
    %v2033 = vadd.f32 %v293, %v2032
    %2034 = vmatmul.bf16.gmra.mxu0 %v1115
    %v2035 = vpop.f32.mrf.mxu0
    %v2036 = vadd.f32 %v293, %v2035
    %v2037 = vpop.f32.mrf.mxu0
    %v2038 = vadd.f32 %v293, %v2037
    %2039 = vmatmul.bf16.gmra.mxu0 %v1117
    %v2040 = vpop.f32.mrf.mxu0
    %v2041 = vadd.f32 %v293, %v2040
    %v2042 = vpop.f32.mrf.mxu0
    %v2043 = vadd.f32 %v293, %v2042
    %2044 = vmatmul.bf16.gmra.mxu0 %v1119
    %v2045 = vpop.f32.mrf.mxu0
    %v2046 = vadd.f32 %v293, %v2045
    %v2047 = vpop.f32.mrf.mxu0
    %v2048 = vadd.f32 %v293, %v2047
    %2049 = vmatmul.bf16.gmra.mxu0 %v1121
    %v2050 = vpop.f32.mrf.mxu0
    %v2051 = vadd.f32 %v293, %v2050
    %v2052 = vpop.f32.mrf.mxu0
    %v2053 = vadd.f32 %v293, %v2052
    %2054 = vmatmul.bf16.gmra.mxu0 %v1123
    %v2055 = vpop.f32.mrf.mxu0
    %v2056 = vadd.f32 %v293, %v2055
    %v2057 = vpop.f32.mrf.mxu0
    %v2058 = vadd.f32 %v293, %v2057
    %2059 = vmatmul.bf16.gmra.mxu0 %v1125
    %v2060 = vpop.f32.mrf.mxu0
    %v2061 = vadd.f32 %v293, %v2060
    %v2062 = vpop.f32.mrf.mxu0
    %v2063 = vadd.f32 %v293, %v2062
    %2064 = vmatmul.bf16.gmra.mxu0 %v1127
    %v2065 = vpop.f32.mrf.mxu0
    %v2066 = vadd.f32 %v293, %v2065
    %v2067 = vpop.f32.mrf.mxu0
    %v2068 = vadd.f32 %v293, %v2067
    %2069 = vmatmul.bf16.gmra.mxu0 %v1129
    %v2070 = vpop.f32.mrf.mxu0
    %v2071 = vadd.f32 %v293, %v2070
    %v2072 = vpop.f32.mrf.mxu0
    %v2073 = vadd.f32 %v293, %v2072
    %2074 = vmatmul.bf16.gmra.mxu0 %v1131
    %v2075 = vpop.f32.mrf.mxu0
    %v2076 = vadd.f32 %v293, %v2075
    %v2077 = vpop.f32.mrf.mxu0
    %v2078 = vadd.f32 %v293, %v2077
    %2079 = vmatmul.bf16.gmra.mxu0 %v1133
    %v2080 = vpop.f32.mrf.mxu0
    %v2081 = vadd.f32 %v293, %v2080
    %v2082 = vpop.f32.mrf.mxu0
    %v2083 = vadd.f32 %v293, %v2082
    %2084 = vmatmul.bf16.gmra.mxu0 %v1135
    %v2085 = vpop.f32.mrf.mxu0
    %v2086 = vadd.f32 %v293, %v2085
    %v2087 = vpop.f32.mrf.mxu0
    %v2088 = vadd.f32 %v293, %v2087
    %2089 = vmatmul.bf16.gmra.mxu0 %v1137
    %v2090 = vpop.f32.mrf.mxu0
    %v2091 = vadd.f32 %v293, %v2090
    %v2092 = vpop.f32.mrf.mxu0
    %v2093 = vadd.f32 %v293, %v2092
    %2094 = vmatmul.bf16.gmra.mxu0 %v1139
    %v2095 = vpop.f32.mrf.mxu0
    %v2096 = vadd.f32 %v293, %v2095
    %v2097 = vpop.f32.mrf.mxu0
    %v2098 = vadd.f32 %v293, %v2097
    %2099 = vmatmul.bf16.gmra.mxu0 %v1141
    %v2100 = vpop.f32.mrf.mxu0
    %v2101 = vadd.f32 %v293, %v2100
    %v2102 = vpop.f32.mrf.mxu0
    %v2103 = vadd.f32 %v293, %v2102
    %2104 = vmatmul.bf16.gmra.mxu0 %v1143
    %v2105 = vpop.f32.mrf.mxu0
    %v2106 = vadd.f32 %v293, %v2105
    %v2107 = vpop.f32.mrf.mxu0
    %v2108 = vadd.f32 %v293, %v2107
    %2109 = vmatmul.bf16.gmra.mxu0 %v1145
    %v2110 = vpop.f32.mrf.mxu0
    %v2111 = vadd.f32 %v293, %v2110
    %v2112 = vpop.f32.mrf.mxu0
    %v2113 = vadd.f32 %v293, %v2112
    %2114 = vmatmul.bf16.gmra.mxu0 %v1147
    %v2115 = vpop.f32.mrf.mxu0
    %v2116 = vadd.f32 %v293, %v2115
    %v2117 = vpop.f32.mrf.mxu0
    %v2118 = vadd.f32 %v293, %v2117
    %2119 = vmatmul.bf16.gmra.mxu0 %v1149
    %v2120 = vpop.f32.mrf.mxu0
    %v2121 = vadd.f32 %v293, %v2120
    %v2122 = vpop.f32.mrf.mxu0
    %v2123 = vadd.f32 %v293, %v2122
    %2124 = vmatmul.bf16.gmra.mxu0 %v1151
    %v2125 = vpop.f32.mrf.mxu0
    %v2126 = vadd.f32 %v293, %v2125
    %v2127 = vpop.f32.mrf.mxu0
    %v2128 = vadd.f32 %v293, %v2127
    %2129 = vmatmul.bf16.gmra.mxu0 %v1153
    %v2130 = vpop.f32.mrf.mxu0
    %v2131 = vadd.f32 %v293, %v2130
    %v2132 = vpop.f32.mrf.mxu0
    %v2133 = vadd.f32 %v293, %v2132
    %2134 = vmatmul.bf16.gmra.mxu0 %v1155
    %v2135 = vpop.f32.mrf.mxu0
    %v2136 = vadd.f32 %v293, %v2135
    %v2137 = vpop.f32.mrf.mxu0
    %v2138 = vadd.f32 %v293, %v2137
    %2139 = vmatmul.bf16.gmra.mxu0 %v1157
    %v2140 = vpop.f32.mrf.mxu0
    %v2141 = vadd.f32 %v293, %v2140
    %v2142 = vpop.f32.mrf.mxu0
    %v2143 = vadd.f32 %v293, %v2142
    %2144 = vmatmul.bf16.gmra.mxu0 %v1159
    %v2145 = vpop.f32.mrf.mxu0
    %v2146 = vadd.f32 %v293, %v2145
    %v2147 = vpop.f32.mrf.mxu0
    %v2148 = vadd.f32 %v293, %v2147
    %2149 = vmatmul.bf16.gmra.mxu0 %v1161
    %v2150 = vpop.f32.mrf.mxu0
    %v2151 = vadd.f32 %v293, %v2150
    %v2152 = vpop.f32.mrf.mxu0
    %v2153 = vadd.f32 %v293, %v2152
    %2154 = vmatmul.bf16.gmra.mxu0 %v1163
    %v2155 = vpop.f32.mrf.mxu0
    %v2156 = vadd.f32 %v293, %v2155
    %v2157 = vpop.f32.mrf.mxu0
    %v2158 = vadd.f32 %v293, %v2157
    %2159 = vmatmul.bf16.gmra.mxu0 %v1165
    %v2160 = vpop.f32.mrf.mxu0
    %v2161 = vadd.f32 %v293, %v2160
    %v2162 = vpop.f32.mrf.mxu0
    %v2163 = vadd.f32 %v293, %v2162
    %2164 = vmatmul.bf16.gmra.mxu0 %v1167
    %v2165 = vpop.f32.mrf.mxu0
    %v2166 = vadd.f32 %v293, %v2165
    %v2167 = vpop.f32.mrf.mxu0
    %v2168 = vadd.f32 %v293, %v2167
    %2169 = vmatmul.bf16.gmra.mxu0 %v1169
    %v2170 = vpop.f32.mrf.mxu0
    %v2171 = vadd.f32 %v293, %v2170
    %v2172 = vpop.f32.mrf.mxu0
    %v2173 = vadd.f32 %v293, %v2172
    %2174 = vmatmul.bf16.gmra.mxu0 %v1171
    %v2175 = vpop.f32.mrf.mxu0
    %v2176 = vadd.f32 %v293, %v2175
    %v2177 = vpop.f32.mrf.mxu0
    %v2178 = vadd.f32 %v293, %v2177
    %2179 = vmatmul.bf16.gmra.mxu0 %v1173
    %v2180 = vpop.f32.mrf.mxu0
    %v2181 = vadd.f32 %v293, %v2180
    %v2182 = vpop.f32.mrf.mxu0
    %v2183 = vadd.f32 %v293, %v2182
    %2184 = vmatmul.bf16.gmra.mxu0 %v1175
    %v2185 = vpop.f32.mrf.mxu0
    %v2186 = vadd.f32 %v293, %v2185
    %v2187 = vpop.f32.mrf.mxu0
    %v2188 = vadd.f32 %v293, %v2187
    %2189 = vmatmul.bf16.gmra.mxu0 %v1177
    %v2190 = vpop.f32.mrf.mxu0
    %v2191 = vadd.f32 %v293, %v2190
    %v2192 = vpop.f32.mrf.mxu0
    %v2193 = vadd.f32 %v293, %v2192
    %2194 = vmatmul.bf16.gmra.mxu0 %v1179
    %v2195 = vpop.f32.mrf.mxu0
    %v2196 = vadd.f32 %v293, %v2195
    %v2197 = vpop.f32.mrf.mxu0
    %v2198 = vadd.f32 %v293, %v2197
    %2199 = vmatmul.bf16.gmra.mxu0 %v1181
    %v2200 = vpop.f32.mrf.mxu0
    %v2201 = vadd.f32 %v293, %v2200
    %v2202 = vpop.f32.mrf.mxu0
    %v2203 = vadd.f32 %v293, %v2202
    %2204 = vmatmul.bf16.gmra.mxu0 %v1183
    %v2205 = vpop.f32.mrf.mxu0
    %v2206 = vadd.f32 %v293, %v2205
    %v2207 = vpop.f32.mrf.mxu0
    %v2208 = vadd.f32 %v293, %v2207
    %2209 = vmatmul.bf16.gmra.mxu0 %v1185
    %v2210 = vpop.f32.mrf.mxu0
    %v2211 = vadd.f32 %v293, %v2210
    %v2212 = vpop.f32.mrf.mxu0
    %v2213 = vadd.f32 %v293, %v2212
    %2214 = vmatmul.bf16.gmra.mxu0 %v1187
    %v2215 = vpop.f32.mrf.mxu0
    %v2216 = vadd.f32 %v293, %v2215
    %v2217 = vpop.f32.mrf.mxu0
    %v2218 = vadd.f32 %v293, %v2217
    %2219 = vmatmul.bf16.gmra.mxu0 %v1189
    %v2220 = vpop.f32.mrf.mxu0
    %v2221 = vadd.f32 %v293, %v2220
    %v2222 = vpop.f32.mrf.mxu0
    %v2223 = vadd.f32 %v293, %v2222
    %2224 = vmatmul.bf16.gmra.mxu0 %v1191
    %v2225 = vpop.f32.mrf.mxu0
    %v2226 = vadd.f32 %v293, %v2225
    %v2227 = vpop.f32.mrf.mxu0
    %v2228 = vadd.f32 %v293, %v2227
    %2229 = vmatmul.bf16.gmra.mxu0 %v1193
    %v2230 = vpop.f32.mrf.mxu0
    %v2231 = vadd.f32 %v293, %v2230
    %v2232 = vpop.f32.mrf.mxu0
    %v2233 = vadd.f32 %v293, %v2232
    %2234 = vmatmul.bf16.gmra.mxu0 %v1195
    %v2235 = vpop.f32.mrf.mxu0
    %v2236 = vadd.f32 %v293, %v2235
    %v2237 = vpop.f32.mrf.mxu0
    %v2238 = vadd.f32 %v293, %v2237
    %2239 = vmatmul.bf16.gmra.mxu0 %v1197
    %v2240 = vpop.f32.mrf.mxu0
    %v2241 = vadd.f32 %v293, %v2240
    %v2242 = vpop.f32.mrf.mxu0
    %v2243 = vadd.f32 %v293, %v2242
    %2244 = vmatmul.bf16.gmra.mxu0 %v1199
    %v2245 = vpop.f32.mrf.mxu0
    %v2246 = vadd.f32 %v293, %v2245
    %v2247 = vpop.f32.mrf.mxu0
    %v2248 = vadd.f32 %v293, %v2247
    %2249 = vmatmul.bf16.gmra.mxu0 %v1201
    %v2250 = vpop.f32.mrf.mxu0
    %v2251 = vadd.f32 %v293, %v2250
    %v2252 = vpop.f32.mrf.mxu0
    %v2253 = vadd.f32 %v293, %v2252
    %2254 = vmatmul.bf16.gmra.mxu0 %v1203
    %v2255 = vpop.f32.mrf.mxu0
    %v2256 = vadd.f32 %v293, %v2255
    %v2257 = vpop.f32.mrf.mxu0
    %v2258 = vadd.f32 %v293, %v2257
    %2259 = vmatmul.bf16.gmra.mxu0 %v1205
    %v2260 = vpop.f32.mrf.mxu0
    %v2261 = vadd.f32 %v293, %v2260
    %v2262 = vpop.f32.mrf.mxu0
    %v2263 = vadd.f32 %v293, %v2262
    %2264 = vmatmul.bf16.gmra.mxu0 %v1207
    %v2265 = vpop.f32.mrf.mxu0
    %v2266 = vadd.f32 %v293, %v2265
    %v2267 = vpop.f32.mrf.mxu0
    %v2268 = vadd.f32 %v293, %v2267
    %2269 = vmatmul.bf16.gmra.mxu0 %v1209
    %v2270 = vpop.f32.mrf.mxu0
    %v2271 = vadd.f32 %v293, %v2270
    %v2272 = vpop.f32.mrf.mxu0
    %v2273 = vadd.f32 %v293, %v2272
    %2274 = vmatmul.bf16.gmra.mxu0 %v1211
    %v2275 = vpop.f32.mrf.mxu0
    %v2276 = vadd.f32 %v293, %v2275
    %v2277 = vpop.f32.mrf.mxu0
    %v2278 = vadd.f32 %v293, %v2277
    %2279 = vmatmul.bf16.gmra.mxu0 %v1213
    %v2280 = vpop.f32.mrf.mxu0
    %v2281 = vadd.f32 %v293, %v2280
    %v2282 = vpop.f32.mrf.mxu0
    %v2283 = vadd.f32 %v293, %v2282
    %2284 = vmatmul.bf16.gmra.mxu0 %v1215
    %v2285 = vpop.f32.mrf.mxu0
    %v2286 = vadd.f32 %v293, %v2285
    %v2287 = vpop.f32.mrf.mxu0
    %v2288 = vadd.f32 %v293, %v2287
    %2289 = vmatmul.bf16.gmra.mxu0 %v1217
    %v2290 = vpop.f32.mrf.mxu0
    %v2291 = vadd.f32 %v293, %v2290
    %v2292 = vpop.f32.mrf.mxu0
    %v2293 = vadd.f32 %v293, %v2292
    %2294 = vmatmul.bf16.gmra.mxu0 %v1219
    %v2295 = vpop.f32.mrf.mxu0
    %v2296 = vadd.f32 %v293, %v2295
    %v2297 = vpop.f32.mrf.mxu0
    %v2298 = vadd.f32 %v293, %v2297
    %2299 = vmatmul.bf16.gmra.mxu0 %v1221
    %v2300 = vpop.f32.mrf.mxu0
    %v2301 = vadd.f32 %v293, %v2300
    %v2302 = vpop.f32.mrf.mxu0
    %v2303 = vadd.f32 %v293, %v2302
    %2304 = vmatmul.bf16.gmra.mxu0 %v1223
    %v2305 = vpop.f32.mrf.mxu0
    %v2306 = vadd.f32 %v293, %v2305
    %v2307 = vpop.f32.mrf.mxu0
    %v2308 = vadd.f32 %v293, %v2307
    %2309 = vmatmul.bf16.gmra.mxu0 %v1225
    %v2310 = vpop.f32.mrf.mxu0
    %v2311 = vadd.f32 %v293, %v2310
    %v2312 = vpop.f32.mrf.mxu0
    %v2313 = vadd.f32 %v293, %v2312
    %2314 = vmatmul.bf16.gmra.mxu0 %v1227
    %v2315 = vpop.f32.mrf.mxu0
    %v2316 = vadd.f32 %v293, %v2315
    %v2317 = vpop.f32.mrf.mxu0
    %v2318 = vadd.f32 %v293, %v2317
    %2319 = vmatmul.bf16.gmra.mxu0 %v1229
    %v2320 = vpop.f32.mrf.mxu0
    %v2321 = vadd.f32 %v293, %v2320
    %v2322 = vpop.f32.mrf.mxu0
    %v2323 = vadd.f32 %v293, %v2322
    %2324 = vmatmul.bf16.gmra.mxu0 %v1231
    %v2325 = vpop.f32.mrf.mxu0
    %v2326 = vadd.f32 %v293, %v2325
    %v2327 = vpop.f32.mrf.mxu0
    %v2328 = vadd.f32 %v293, %v2327
    %2329 = vmatmul.bf16.gmra.mxu0 %v1233
    %v2330 = vpop.f32.mrf.mxu0
    %v2331 = vadd.f32 %v293, %v2330
    %v2332 = vpop.f32.mrf.mxu0
    %v2333 = vadd.f32 %v293, %v2332
    %2334 = vmatmul.bf16.gmra.mxu0 %v1235
    %v2335 = vpop.f32.mrf.mxu0
    %v2336 = vadd.f32 %v293, %v2335
    %v2337 = vpop.f32.mrf.mxu0
    %v2338 = vadd.f32 %v293, %v2337
    %2339 = vmatmul.bf16.gmra.mxu0 %v1237
    %v2340 = vpop.f32.mrf.mxu0
    %v2341 = vadd.f32 %v293, %v2340
    %v2342 = vpop.f32.mrf.mxu0
    %v2343 = vadd.f32 %v293, %v2342
    %2344 = vmatmul.bf16.gmra.mxu0 %v1239
    %v2345 = vpop.f32.mrf.mxu0
    %v2346 = vadd.f32 %v293, %v2345
    %v2347 = vpop.f32.mrf.mxu0
    %v2348 = vadd.f32 %v293, %v2347
    %2349 = vmatmul.bf16.gmra.mxu0 %v1241
    %v2350 = vpop.f32.mrf.mxu0
    %v2351 = vadd.f32 %v293, %v2350
    %v2352 = vpop.f32.mrf.mxu0
    %v2353 = vadd.f32 %v293, %v2352
    %2354 = vmatmul.bf16.gmra.mxu0 %v1243
    %v2355 = vpop.f32.mrf.mxu0
    %v2356 = vadd.f32 %v293, %v2355
    %v2357 = vpop.f32.mrf.mxu0
    %v2358 = vadd.f32 %v293, %v2357
    %2359 = vmatmul.bf16.gmra.mxu0 %v1245
    %v2360 = vpop.f32.mrf.mxu0
    %v2361 = vadd.f32 %v293, %v2360
    %v2362 = vpop.f32.mrf.mxu0
    %v2363 = vadd.f32 %v293, %v2362
    %2364 = vmatmul.bf16.gmra.mxu0 %v1247
    %v2365 = vpop.f32.mrf.mxu0
    %v2366 = vadd.f32 %v293, %v2365
    %v2367 = vpop.f32.mrf.mxu0
    %v2368 = vadd.f32 %v293, %v2367
    %2369 = vmatmul.bf16.gmra.mxu0 %v1249
    %v2370 = vpop.f32.mrf.mxu0
    %v2371 = vadd.f32 %v293, %v2370
    %v2372 = vpop.f32.mrf.mxu0
    %v2373 = vadd.f32 %v293, %v2372
    %2374 = vmatmul.bf16.gmra.mxu0 %v1251
    %v2375 = vpop.f32.mrf.mxu0
    %v2376 = vadd.f32 %v293, %v2375
    %v2377 = vpop.f32.mrf.mxu0
    %v2378 = vadd.f32 %v293, %v2377
    %2379 = vmatmul.bf16.gmra.mxu0 %v1253
    %v2380 = vpop.f32.mrf.mxu0
    %v2381 = vadd.f32 %v293, %v2380
    %v2382 = vpop.f32.mrf.mxu0
    %v2383 = vadd.f32 %v293, %v2382
    %2384 = vmatmul.bf16.gmra.mxu0 %v1255
    %v2385 = vpop.f32.mrf.mxu0
    %v2386 = vadd.f32 %v293, %v2385
    %v2387 = vpop.f32.mrf.mxu0
    %v2388 = vadd.f32 %v293, %v2387
    %2389 = vmatmul.bf16.gmra.mxu0 %v1257
    %v2390 = vpop.f32.mrf.mxu0
    %v2391 = vadd.f32 %v293, %v2390
    %v2392 = vpop.f32.mrf.mxu0
    %v2393 = vadd.f32 %v293, %v2392
    %2394 = vmatmul.bf16.gmra.mxu0 %v1259
    %v2395 = vpop.f32.mrf.mxu0
    %v2396 = vadd.f32 %v293, %v2395
    %v2397 = vpop.f32.mrf.mxu0
    %v2398 = vadd.f32 %v293, %v2397
    %2399 = vmatmul.bf16.gmra.mxu0 %v1261
    %v2400 = vpop.f32.mrf.mxu0
    %v2401 = vadd.f32 %v293, %v2400
    %v2402 = vpop.f32.mrf.mxu0
    %v2403 = vadd.f32 %v293, %v2402
    %2404 = vmatmul.bf16.gmra.mxu0 %v1263
    %v2405 = vpop.f32.mrf.mxu0
    %v2406 = vadd.f32 %v293, %v2405
    %v2407 = vpop.f32.mrf.mxu0
    %v2408 = vadd.f32 %v293, %v2407
    %2409 = vmatmul.bf16.gmra.mxu0 %v1265
    %v2410 = vpop.f32.mrf.mxu0
    %v2411 = vadd.f32 %v293, %v2410
    %v2412 = vpop.f32.mrf.mxu0
    %v2413 = vadd.f32 %v293, %v2412
    %2414 = vmatmul.bf16.gmra.mxu0 %v1267
    %v2415 = vpop.f32.mrf.mxu0
    %v2416 = vadd.f32 %v293, %v2415
    %v2417 = vpop.f32.mrf.mxu0
    %v2418 = vadd.f32 %v293, %v2417
    %2419 = vmatmul.bf16.gmra.mxu0 %v1269
    %v2420 = vpop.f32.mrf.mxu0
    %v2421 = vadd.f32 %v293, %v2420
    %v2422 = vpop.f32.mrf.mxu0
    %v2423 = vadd.f32 %v293, %v2422
    %2424 = vmatmul.bf16.gmra.mxu0 %v1271
    %v2425 = vpop.f32.mrf.mxu0
    %v2426 = vadd.f32 %v293, %v2425
    %v2427 = vpop.f32.mrf.mxu0
    %v2428 = vadd.f32 %v293, %v2427
    %2429 = vmatmul.bf16.gmra.mxu0 %v1273
    %v2430 = vpop.f32.mrf.mxu0
    %v2431 = vadd.f32 %v293, %v2430
    %v2432 = vpop.f32.mrf.mxu0
    %v2433 = vadd.f32 %v293, %v2432
    %2434 = vmatmul.bf16.gmra.mxu0 %v1275
    %v2435 = vpop.f32.mrf.mxu0
    %v2436 = vadd.f32 %v293, %v2435
    %v2437 = vpop.f32.mrf.mxu0
    %v2438 = vadd.f32 %v293, %v2437
    %2439 = vmatmul.bf16.gmra.mxu0 %v1277
    %v2440 = vpop.f32.mrf.mxu0
    %v2441 = vadd.f32 %v293, %v2440
    %v2442 = vpop.f32.mrf.mxu0
    %v2443 = vadd.f32 %v293, %v2442
    %2444 = vmatmul.bf16.gmra.mxu0 %v1279
    %v2445 = vpop.f32.mrf.mxu0
    %v2446 = vadd.f32 %v293, %v2445
    %v2447 = vpop.f32.mrf.mxu0
    %v2448 = vadd.f32 %v293, %v2447
    %2449 = vmatmul.bf16.gmra.mxu0 %v1281
    %v2450 = vpop.f32.mrf.mxu0
    %v2451 = vadd.f32 %v293, %v2450
    %v2452 = vpop.f32.mrf.mxu0
    %v2453 = vadd.f32 %v293, %v2452
    %2454 = vmatmul.bf16.gmra.mxu0 %v1283
    %v2455 = vpop.f32.mrf.mxu0
    %v2456 = vadd.f32 %v293, %v2455
    %v2457 = vpop.f32.mrf.mxu0
    %v2458 = vadd.f32 %v293, %v2457
    %2459 = vmatmul.bf16.gmra.mxu0 %v1285
    %v2460 = vpop.f32.mrf.mxu0
    %v2461 = vadd.f32 %v293, %v2460
    %v2462 = vpop.f32.mrf.mxu0
    %v2463 = vadd.f32 %v293, %v2462
    %2464 = vmatmul.bf16.gmra.mxu0 %v1287
    %v2465 = vpop.f32.mrf.mxu0
    %v2466 = vadd.f32 %v293, %v2465
    %v2467 = vpop.f32.mrf.mxu0
    %v2468 = vadd.f32 %v293, %v2467
    %2469 = vmatmul.bf16.gmra.mxu0 %v1289
    %v2470 = vpop.f32.mrf.mxu0
    %v2471 = vadd.f32 %v293, %v2470
    %v2472 = vpop.f32.mrf.mxu0
    %v2473 = vadd.f32 %v293, %v2472
    %2474 = vmatmul.bf16.gmra.mxu0 %v1291
    %v2475 = vpop.f32.mrf.mxu0
    %v2476 = vadd.f32 %v293, %v2475
    %v2477 = vpop.f32.mrf.mxu0
    %v2478 = vadd.f32 %v293, %v2477
    %2479 = vmatmul.bf16.gmra.mxu0 %v1293
    %v2480 = vpop.f32.mrf.mxu0
    %v2481 = vadd.f32 %v293, %v2480
    %v2482 = vpop.f32.mrf.mxu0
    %v2483 = vadd.f32 %v293, %v2482
    %2484 = vmatmul.bf16.gmra.mxu0 %v1295
    %v2485 = vpop.f32.mrf.mxu0
    %v2486 = vadd.f32 %v293, %v2485
    %v2487 = vpop.f32.mrf.mxu0
    %v2488 = vadd.f32 %v293, %v2487
    %2489 = vmatmul.bf16.gmra.mxu0 %v1297
    %v2490 = vpop.f32.mrf.mxu0
    %v2491 = vadd.f32 %v293, %v2490
    %v2492 = vpop.f32.mrf.mxu0
    %v2493 = vadd.f32 %v293, %v2492
    %2494 = vmatmul.bf16.gmra.mxu0 %v1299
    %v2495 = vpop.f32.mrf.mxu0
    %v2496 = vadd.f32 %v293, %v2495
    %v2497 = vpop.f32.mrf.mxu0
    %v2498 = vadd.f32 %v293, %v2497
    %2499 = vmatmul.bf16.gmra.mxu0 %v1301
    %v2500 = vpop.f32.mrf.mxu0
    %v2501 = vadd.f32 %v293, %v2500
    %v2502 = vpop.f32.mrf.mxu0
    %v2503 = vadd.f32 %v293, %v2502
    %2504 = vmatmul.bf16.gmra.mxu0 %v1303
    %v2505 = vpop.f32.mrf.mxu0
    %v2506 = vadd.f32 %v293, %v2505
    %v2507 = vpop.f32.mrf.mxu0
    %v2508 = vadd.f32 %v293, %v2507
    %2509 = vmatmul.bf16.gmra.mxu0 %v1305
    %v2510 = vpop.f32.mrf.mxu0
    %v2511 = vadd.f32 %v293, %v2510
    %v2512 = vpop.f32.mrf.mxu0
    %v2513 = vadd.f32 %v293, %v2512
    %2514 = vmatmul.bf16.gmra.mxu0 %v1307
    %v2515 = vpop.f32.mrf.mxu0
    %v2516 = vadd.f32 %v293, %v2515
    %v2517 = vpop.f32.mrf.mxu0
    %v2518 = vadd.f32 %v293, %v2517
    %2519 = vmatmul.bf16.gmra.mxu0 %v1309
    %v2520 = vpop.f32.mrf.mxu0
    %v2521 = vadd.f32 %v293, %v2520
    %v2522 = vpop.f32.mrf.mxu0
    %v2523 = vadd.f32 %v293, %v2522
    %2524 = vmatmul.bf16.gmra.mxu0 %v1311
    %v2525 = vpop.f32.mrf.mxu0
    %v2526 = vadd.f32 %v293, %v2525
    %v2527 = vpop.f32.mrf.mxu0
    %v2528 = vadd.f32 %v293, %v2527
    %2529 = vmatmul.bf16.gmra.mxu0 %v1313
    %v2530 = vpop.f32.mrf.mxu0
    %v2531 = vadd.f32 %v293, %v2530
    %v2532 = vpop.f32.mrf.mxu0
    %v2533 = vadd.f32 %v293, %v2532
    %2534 = vmatmul.bf16.gmra.mxu0 %v1315
    %v2535 = vpop.f32.mrf.mxu0
    %v2536 = vadd.f32 %v293, %v2535
    %v2537 = vpop.f32.mrf.mxu0
    %v2538 = vadd.f32 %v293, %v2537
    %2539 = vmatmul.bf16.gmra.mxu0 %v1317
    %v2540 = vpop.f32.mrf.mxu0
    %v2541 = vadd.f32 %v293, %v2540
    %v2542 = vpop.f32.mrf.mxu0
    %v2543 = vadd.f32 %v293, %v2542
    %2544 = vdwg.mxu0
    %2545 = vmatpush.bf16.msra.mxu0 0
    %2546 = vmatpush.bf16.msra.mxu0 0
    %2547 = vmatpush.bf16.msra.mxu0 0
    %2548 = vmatpush.bf16.msra.mxu0 0
    %2549 = vmatpush.bf16.msra.mxu0 0
    %2550 = vmatpush.bf16.msra.mxu0 0
    %2551 = vmatpush.bf16.msra.mxu0 %v1894
    %2552 = vmatpush.bf16.msra.mxu0 %v1493
    %2553 = vmatmul.bf16.gmra.mxu0 %v1506
    %v2554 = vpop.f32.mrf.mxu0
    %v2555 = vadd.f32 %v1906, %v2554
    %v2556 = vpop.f32.mrf.mxu0
    %v2557 = vadd.f32 %v1908, %v2556
    %2558 = vmatmul.bf16.gmra.mxu0 %v1509
    %v2559 = vpop.f32.mrf.mxu0
    %v2560 = vadd.f32 %v1911, %v2559
    %v2561 = vpop.f32.mrf.mxu0
    %v2562 = vadd.f32 %v1913, %v2561
    %2563 = vmatmul.bf16.gmra.mxu0 %v1512
    %v2564 = vpop.f32.mrf.mxu0
    %v2565 = vadd.f32 %v1916, %v2564
    %v2566 = vpop.f32.mrf.mxu0
    %v2567 = vadd.f32 %v1918, %v2566
    %2568 = vmatmul.bf16.gmra.mxu0 %v1515
    %v2569 = vpop.f32.mrf.mxu0
    %v2570 = vadd.f32 %v1921, %v2569
    %v2571 = vpop.f32.mrf.mxu0
    %v2572 = vadd.f32 %v1923, %v2571
    %2573 = vmatmul.bf16.gmra.mxu0 %v1518
    %v2574 = vpop.f32.mrf.mxu0
    %v2575 = vadd.f32 %v1926, %v2574
    %v2576 = vpop.f32.mrf.mxu0
    %v2577 = vadd.f32 %v1928, %v2576
    %2578 = vmatmul.bf16.gmra.mxu0 %v1521
    %v2579 = vpop.f32.mrf.mxu0
    %v2580 = vadd.f32 %v1931, %v2579
    %v2581 = vpop.f32.mrf.mxu0
    %v2582 = vadd.f32 %v1933, %v2581
    %2583 = vmatmul.bf16.gmra.mxu0 %v1524
    %v2584 = vpop.f32.mrf.mxu0
    %v2585 = vadd.f32 %v1936, %v2584
    %v2586 = vpop.f32.mrf.mxu0
    %v2587 = vadd.f32 %v1938, %v2586
    %2588 = vmatmul.bf16.gmra.mxu0 %v1527
    %v2589 = vpop.f32.mrf.mxu0
    %v2590 = vadd.f32 %v1941, %v2589
    %v2591 = vpop.f32.mrf.mxu0
    %v2592 = vadd.f32 %v1943, %v2591
    %2593 = vmatmul.bf16.gmra.mxu0 %v1530
    %v2594 = vpop.f32.mrf.mxu0
    %v2595 = vadd.f32 %v1946, %v2594
    %v2596 = vpop.f32.mrf.mxu0
    %v2597 = vadd.f32 %v1948, %v2596
    %2598 = vmatmul.bf16.gmra.mxu0 %v1533
    %v2599 = vpop.f32.mrf.mxu0
    %v2600 = vadd.f32 %v1951, %v2599
    %v2601 = vpop.f32.mrf.mxu0
    %v2602 = vadd.f32 %v1953, %v2601
    %2603 = vmatmul.bf16.gmra.mxu0 %v1536
    %v2604 = vpop.f32.mrf.mxu0
    %v2605 = vadd.f32 %v1956, %v2604
    %v2606 = vpop.f32.mrf.mxu0
    %v2607 = vadd.f32 %v1958, %v2606
    %2608 = vmatmul.bf16.gmra.mxu0 %v1539
    %v2609 = vpop.f32.mrf.mxu0
    %v2610 = vadd.f32 %v1961, %v2609
    %v2611 = vpop.f32.mrf.mxu0
    %v2612 = vadd.f32 %v1963, %v2611
    %2613 = vmatmul.bf16.gmra.mxu0 %v1542
    %v2614 = vpop.f32.mrf.mxu0
    %v2615 = vadd.f32 %v1966, %v2614
    %v2616 = vpop.f32.mrf.mxu0
    %v2617 = vadd.f32 %v1968, %v2616
    %2618 = vmatmul.bf16.gmra.mxu0 %v1545
    %v2619 = vpop.f32.mrf.mxu0
    %v2620 = vadd.f32 %v1971, %v2619
    %v2621 = vpop.f32.mrf.mxu0
    %v2622 = vadd.f32 %v1973, %v2621
    %2623 = vmatmul.bf16.gmra.mxu0 %v1548
    %v2624 = vpop.f32.mrf.mxu0
    %v2625 = vadd.f32 %v1976, %v2624
    %v2626 = vpop.f32.mrf.mxu0
    %v2627 = vadd.f32 %v1978, %v2626
    %2628 = vmatmul.bf16.gmra.mxu0 %v1551
    %v2629 = vpop.f32.mrf.mxu0
    %v2630 = vadd.f32 %v1981, %v2629
    %v2631 = vpop.f32.mrf.mxu0
    %v2632 = vadd.f32 %v1983, %v2631
    %2633 = vmatmul.bf16.gmra.mxu0 %v1554
    %v2634 = vpop.f32.mrf.mxu0
    %v2635 = vadd.f32 %v1986, %v2634
    %v2636 = vpop.f32.mrf.mxu0
    %v2637 = vadd.f32 %v1988, %v2636
    %2638 = vmatmul.bf16.gmra.mxu0 %v1557
    %v2639 = vpop.f32.mrf.mxu0
    %v2640 = vadd.f32 %v1991, %v2639
    %v2641 = vpop.f32.mrf.mxu0
    %v2642 = vadd.f32 %v1993, %v2641
    %2643 = vmatmul.bf16.gmra.mxu0 %v1560
    %v2644 = vpop.f32.mrf.mxu0
    %v2645 = vadd.f32 %v1996, %v2644
    %v2646 = vpop.f32.mrf.mxu0
    %v2647 = vadd.f32 %v1998, %v2646
    %2648 = vmatmul.bf16.gmra.mxu0 %v1563
    %v2649 = vpop.f32.mrf.mxu0
    %v2650 = vadd.f32 %v2001, %v2649
    %v2651 = vpop.f32.mrf.mxu0
    %v2652 = vadd.f32 %v2003, %v2651
    %2653 = vmatmul.bf16.gmra.mxu0 %v1566
    %v2654 = vpop.f32.mrf.mxu0
    %v2655 = vadd.f32 %v2006, %v2654
    %v2656 = vpop.f32.mrf.mxu0
    %v2657 = vadd.f32 %v2008, %v2656
    %2658 = vmatmul.bf16.gmra.mxu0 %v1569
    %v2659 = vpop.f32.mrf.mxu0
    %v2660 = vadd.f32 %v2011, %v2659
    %v2661 = vpop.f32.mrf.mxu0
    %v2662 = vadd.f32 %v2013, %v2661
    %2663 = vmatmul.bf16.gmra.mxu0 %v1572
    %v2664 = vpop.f32.mrf.mxu0
    %v2665 = vadd.f32 %v2016, %v2664
    %v2666 = vpop.f32.mrf.mxu0
    %v2667 = vadd.f32 %v2018, %v2666
    %2668 = vmatmul.bf16.gmra.mxu0 %v1575
    %v2669 = vpop.f32.mrf.mxu0
    %v2670 = vadd.f32 %v2021, %v2669
    %v2671 = vpop.f32.mrf.mxu0
    %v2672 = vadd.f32 %v2023, %v2671
    %2673 = vmatmul.bf16.gmra.mxu0 %v1578
    %v2674 = vpop.f32.mrf.mxu0
    %v2675 = vadd.f32 %v2026, %v2674
    %v2676 = vpop.f32.mrf.mxu0
    %v2677 = vadd.f32 %v2028, %v2676
    %2678 = vmatmul.bf16.gmra.mxu0 %v1581
    %v2679 = vpop.f32.mrf.mxu0
    %v2680 = vadd.f32 %v2031, %v2679
    %v2681 = vpop.f32.mrf.mxu0
    %v2682 = vadd.f32 %v2033, %v2681
    %2683 = vmatmul.bf16.gmra.mxu0 %v1584
    %v2684 = vpop.f32.mrf.mxu0
    %v2685 = vadd.f32 %v2036, %v2684
    %v2686 = vpop.f32.mrf.mxu0
    %v2687 = vadd.f32 %v2038, %v2686
    %2688 = vmatmul.bf16.gmra.mxu0 %v1587
    %v2689 = vpop.f32.mrf.mxu0
    %v2690 = vadd.f32 %v2041, %v2689
    %v2691 = vpop.f32.mrf.mxu0
    %v2692 = vadd.f32 %v2043, %v2691
    %2693 = vmatmul.bf16.gmra.mxu0 %v1590
    %v2694 = vpop.f32.mrf.mxu0
    %v2695 = vadd.f32 %v2046, %v2694
    %v2696 = vpop.f32.mrf.mxu0
    %v2697 = vadd.f32 %v2048, %v2696
    %2698 = vmatmul.bf16.gmra.mxu0 %v1593
    %v2699 = vpop.f32.mrf.mxu0
    %v2700 = vadd.f32 %v2051, %v2699
    %v2701 = vpop.f32.mrf.mxu0
    %v2702 = vadd.f32 %v2053, %v2701
    %2703 = vmatmul.bf16.gmra.mxu0 %v1596
    %v2704 = vpop.f32.mrf.mxu0
    %v2705 = vadd.f32 %v2056, %v2704
    %v2706 = vpop.f32.mrf.mxu0
    %v2707 = vadd.f32 %v2058, %v2706
    %2708 = vmatmul.bf16.gmra.mxu0 %v1599
    %v2709 = vpop.f32.mrf.mxu0
    %v2710 = vadd.f32 %v2061, %v2709
    %v2711 = vpop.f32.mrf.mxu0
    %v2712 = vadd.f32 %v2063, %v2711
    %2713 = vmatmul.bf16.gmra.mxu0 %v1602
    %v2714 = vpop.f32.mrf.mxu0
    %v2715 = vadd.f32 %v2066, %v2714
    %v2716 = vpop.f32.mrf.mxu0
    %v2717 = vadd.f32 %v2068, %v2716
    %2718 = vmatmul.bf16.gmra.mxu0 %v1605
    %v2719 = vpop.f32.mrf.mxu0
    %v2720 = vadd.f32 %v2071, %v2719
    %v2721 = vpop.f32.mrf.mxu0
    %v2722 = vadd.f32 %v2073, %v2721
    %2723 = vmatmul.bf16.gmra.mxu0 %v1608
    %v2724 = vpop.f32.mrf.mxu0
    %v2725 = vadd.f32 %v2076, %v2724
    %v2726 = vpop.f32.mrf.mxu0
    %v2727 = vadd.f32 %v2078, %v2726
    %2728 = vmatmul.bf16.gmra.mxu0 %v1611
    %v2729 = vpop.f32.mrf.mxu0
    %v2730 = vadd.f32 %v2081, %v2729
    %v2731 = vpop.f32.mrf.mxu0
    %v2732 = vadd.f32 %v2083, %v2731
    %2733 = vmatmul.bf16.gmra.mxu0 %v1614
    %v2734 = vpop.f32.mrf.mxu0
    %v2735 = vadd.f32 %v2086, %v2734
    %v2736 = vpop.f32.mrf.mxu0
    %v2737 = vadd.f32 %v2088, %v2736
    %2738 = vmatmul.bf16.gmra.mxu0 %v1617
    %v2739 = vpop.f32.mrf.mxu0
    %v2740 = vadd.f32 %v2091, %v2739
    %v2741 = vpop.f32.mrf.mxu0
    %v2742 = vadd.f32 %v2093, %v2741
    %2743 = vmatmul.bf16.gmra.mxu0 %v1620
    %v2744 = vpop.f32.mrf.mxu0
    %v2745 = vadd.f32 %v2096, %v2744
    %v2746 = vpop.f32.mrf.mxu0
    %v2747 = vadd.f32 %v2098, %v2746
    %2748 = vmatmul.bf16.gmra.mxu0 %v1623
    %v2749 = vpop.f32.mrf.mxu0
    %v2750 = vadd.f32 %v2101, %v2749
    %v2751 = vpop.f32.mrf.mxu0
    %v2752 = vadd.f32 %v2103, %v2751
    %2753 = vmatmul.bf16.gmra.mxu0 %v1626
    %v2754 = vpop.f32.mrf.mxu0
    %v2755 = vadd.f32 %v2106, %v2754
    %v2756 = vpop.f32.mrf.mxu0
    %v2757 = vadd.f32 %v2108, %v2756
    %2758 = vmatmul.bf16.gmra.mxu0 %v1629
    %v2759 = vpop.f32.mrf.mxu0
    %v2760 = vadd.f32 %v2111, %v2759
    %v2761 = vpop.f32.mrf.mxu0
    %v2762 = vadd.f32 %v2113, %v2761
    %2763 = vmatmul.bf16.gmra.mxu0 %v1632
    %v2764 = vpop.f32.mrf.mxu0
    %v2765 = vadd.f32 %v2116, %v2764
    %v2766 = vpop.f32.mrf.mxu0
    %v2767 = vadd.f32 %v2118, %v2766
    %2768 = vmatmul.bf16.gmra.mxu0 %v1635
    %v2769 = vpop.f32.mrf.mxu0
    %v2770 = vadd.f32 %v2121, %v2769
    %v2771 = vpop.f32.mrf.mxu0
    %v2772 = vadd.f32 %v2123, %v2771
    %2773 = vmatmul.bf16.gmra.mxu0 %v1638
    %v2774 = vpop.f32.mrf.mxu0
    %v2775 = vadd.f32 %v2126, %v2774
    %v2776 = vpop.f32.mrf.mxu0
    %v2777 = vadd.f32 %v2128, %v2776
    %2778 = vmatmul.bf16.gmra.mxu0 %v1641
    %v2779 = vpop.f32.mrf.mxu0
    %v2780 = vadd.f32 %v2131, %v2779
    %v2781 = vpop.f32.mrf.mxu0
    %v2782 = vadd.f32 %v2133, %v2781
    %2783 = vmatmul.bf16.gmra.mxu0 %v1644
    %v2784 = vpop.f32.mrf.mxu0
    %v2785 = vadd.f32 %v2136, %v2784
    %v2786 = vpop.f32.mrf.mxu0
    %v2787 = vadd.f32 %v2138, %v2786
    %2788 = vmatmul.bf16.gmra.mxu0 %v1647
    %v2789 = vpop.f32.mrf.mxu0
    %v2790 = vadd.f32 %v2141, %v2789
    %v2791 = vpop.f32.mrf.mxu0
    %v2792 = vadd.f32 %v2143, %v2791
    %2793 = vmatmul.bf16.gmra.mxu0 %v1650
    %v2794 = vpop.f32.mrf.mxu0
    %v2795 = vadd.f32 %v2146, %v2794
    %v2796 = vpop.f32.mrf.mxu0
    %v2797 = vadd.f32 %v2148, %v2796
    %2798 = vmatmul.bf16.gmra.mxu0 %v1653
    %v2799 = vpop.f32.mrf.mxu0
    %v2800 = vadd.f32 %v2151, %v2799
    %v2801 = vpop.f32.mrf.mxu0
    %v2802 = vadd.f32 %v2153, %v2801
    %2803 = vmatmul.bf16.gmra.mxu0 %v1656
    %v2804 = vpop.f32.mrf.mxu0
    %v2805 = vadd.f32 %v2156, %v2804
    %v2806 = vpop.f32.mrf.mxu0
    %v2807 = vadd.f32 %v2158, %v2806
    %2808 = vmatmul.bf16.gmra.mxu0 %v1659
    %v2809 = vpop.f32.mrf.mxu0
    %v2810 = vadd.f32 %v2161, %v2809
    %v2811 = vpop.f32.mrf.mxu0
    %v2812 = vadd.f32 %v2163, %v2811
    %2813 = vmatmul.bf16.gmra.mxu0 %v1662
    %v2814 = vpop.f32.mrf.mxu0
    %v2815 = vadd.f32 %v2166, %v2814
    %v2816 = vpop.f32.mrf.mxu0
    %v2817 = vadd.f32 %v2168, %v2816
    %2818 = vmatmul.bf16.gmra.mxu0 %v1665
    %v2819 = vpop.f32.mrf.mxu0
    %v2820 = vadd.f32 %v2171, %v2819
    %v2821 = vpop.f32.mrf.mxu0
    %v2822 = vadd.f32 %v2173, %v2821
    %2823 = vmatmul.bf16.gmra.mxu0 %v1668
    %v2824 = vpop.f32.mrf.mxu0
    %v2825 = vadd.f32 %v2176, %v2824
    %v2826 = vpop.f32.mrf.mxu0
    %v2827 = vadd.f32 %v2178, %v2826
    %2828 = vmatmul.bf16.gmra.mxu0 %v1671
    %v2829 = vpop.f32.mrf.mxu0
    %v2830 = vadd.f32 %v2181, %v2829
    %v2831 = vpop.f32.mrf.mxu0
    %v2832 = vadd.f32 %v2183, %v2831
    %2833 = vmatmul.bf16.gmra.mxu0 %v1674
    %v2834 = vpop.f32.mrf.mxu0
    %v2835 = vadd.f32 %v2186, %v2834
    %v2836 = vpop.f32.mrf.mxu0
    %v2837 = vadd.f32 %v2188, %v2836
    %2838 = vmatmul.bf16.gmra.mxu0 %v1677
    %v2839 = vpop.f32.mrf.mxu0
    %v2840 = vadd.f32 %v2191, %v2839
    %v2841 = vpop.f32.mrf.mxu0
    %v2842 = vadd.f32 %v2193, %v2841
    %2843 = vmatmul.bf16.gmra.mxu0 %v1680
    %v2844 = vpop.f32.mrf.mxu0
    %v2845 = vadd.f32 %v2196, %v2844
    %v2846 = vpop.f32.mrf.mxu0
    %v2847 = vadd.f32 %v2198, %v2846
    %2848 = vmatmul.bf16.gmra.mxu0 %v1683
    %v2849 = vpop.f32.mrf.mxu0
    %v2850 = vadd.f32 %v2201, %v2849
    %v2851 = vpop.f32.mrf.mxu0
    %v2852 = vadd.f32 %v2203, %v2851
    %2853 = vmatmul.bf16.gmra.mxu0 %v1686
    %v2854 = vpop.f32.mrf.mxu0
    %v2855 = vadd.f32 %v2206, %v2854
    %v2856 = vpop.f32.mrf.mxu0
    %v2857 = vadd.f32 %v2208, %v2856
    %2858 = vmatmul.bf16.gmra.mxu0 %v1689
    %v2859 = vpop.f32.mrf.mxu0
    %v2860 = vadd.f32 %v2211, %v2859
    %v2861 = vpop.f32.mrf.mxu0
    %v2862 = vadd.f32 %v2213, %v2861
    %2863 = vmatmul.bf16.gmra.mxu0 %v1692
    %v2864 = vpop.f32.mrf.mxu0
    %v2865 = vadd.f32 %v2216, %v2864
    %v2866 = vpop.f32.mrf.mxu0
    %v2867 = vadd.f32 %v2218, %v2866
    %2868 = vmatmul.bf16.gmra.mxu0 %v1695
    %v2869 = vpop.f32.mrf.mxu0
    %v2870 = vadd.f32 %v2221, %v2869
    %v2871 = vpop.f32.mrf.mxu0
    %v2872 = vadd.f32 %v2223, %v2871
    %2873 = vmatmul.bf16.gmra.mxu0 %v1698
    %v2874 = vpop.f32.mrf.mxu0
    %v2875 = vadd.f32 %v2226, %v2874
    %v2876 = vpop.f32.mrf.mxu0
    %v2877 = vadd.f32 %v2228, %v2876
    %2878 = vmatmul.bf16.gmra.mxu0 %v1701
    %v2879 = vpop.f32.mrf.mxu0
    %v2880 = vadd.f32 %v2231, %v2879
    %v2881 = vpop.f32.mrf.mxu0
    %v2882 = vadd.f32 %v2233, %v2881
    %2883 = vmatmul.bf16.gmra.mxu0 %v1704
    %v2884 = vpop.f32.mrf.mxu0
    %v2885 = vadd.f32 %v2236, %v2884
    %v2886 = vpop.f32.mrf.mxu0
    %v2887 = vadd.f32 %v2238, %v2886
    %2888 = vmatmul.bf16.gmra.mxu0 %v1707
    %v2889 = vpop.f32.mrf.mxu0
    %v2890 = vadd.f32 %v2241, %v2889
    %v2891 = vpop.f32.mrf.mxu0
    %v2892 = vadd.f32 %v2243, %v2891
    %2893 = vmatmul.bf16.gmra.mxu0 %v1710
    %v2894 = vpop.f32.mrf.mxu0
    %v2895 = vadd.f32 %v2246, %v2894
    %v2896 = vpop.f32.mrf.mxu0
    %v2897 = vadd.f32 %v2248, %v2896
    %2898 = vmatmul.bf16.gmra.mxu0 %v1713
    %v2899 = vpop.f32.mrf.mxu0
    %v2900 = vadd.f32 %v2251, %v2899
    %v2901 = vpop.f32.mrf.mxu0
    %v2902 = vadd.f32 %v2253, %v2901
    %2903 = vmatmul.bf16.gmra.mxu0 %v1716
    %v2904 = vpop.f32.mrf.mxu0
    %v2905 = vadd.f32 %v2256, %v2904
    %v2906 = vpop.f32.mrf.mxu0
    %v2907 = vadd.f32 %v2258, %v2906
    %2908 = vmatmul.bf16.gmra.mxu0 %v1719
    %v2909 = vpop.f32.mrf.mxu0
    %v2910 = vadd.f32 %v2261, %v2909
    %v2911 = vpop.f32.mrf.mxu0
    %v2912 = vadd.f32 %v2263, %v2911
    %2913 = vmatmul.bf16.gmra.mxu0 %v1722
    %v2914 = vpop.f32.mrf.mxu0
    %v2915 = vadd.f32 %v2266, %v2914
    %v2916 = vpop.f32.mrf.mxu0
    %v2917 = vadd.f32 %v2268, %v2916
    %2918 = vmatmul.bf16.gmra.mxu0 %v1725
    %v2919 = vpop.f32.mrf.mxu0
    %v2920 = vadd.f32 %v2271, %v2919
    %v2921 = vpop.f32.mrf.mxu0
    %v2922 = vadd.f32 %v2273, %v2921
    %2923 = vmatmul.bf16.gmra.mxu0 %v1728
    %v2924 = vpop.f32.mrf.mxu0
    %v2925 = vadd.f32 %v2276, %v2924
    %v2926 = vpop.f32.mrf.mxu0
    %v2927 = vadd.f32 %v2278, %v2926
    %2928 = vmatmul.bf16.gmra.mxu0 %v1731
    %v2929 = vpop.f32.mrf.mxu0
    %v2930 = vadd.f32 %v2281, %v2929
    %v2931 = vpop.f32.mrf.mxu0
    %v2932 = vadd.f32 %v2283, %v2931
    %2933 = vmatmul.bf16.gmra.mxu0 %v1734
    %v2934 = vpop.f32.mrf.mxu0
    %v2935 = vadd.f32 %v2286, %v2934
    %v2936 = vpop.f32.mrf.mxu0
    %v2937 = vadd.f32 %v2288, %v2936
    %2938 = vmatmul.bf16.gmra.mxu0 %v1737
    %v2939 = vpop.f32.mrf.mxu0
    %v2940 = vadd.f32 %v2291, %v2939
    %v2941 = vpop.f32.mrf.mxu0
    %v2942 = vadd.f32 %v2293, %v2941
    %2943 = vmatmul.bf16.gmra.mxu0 %v1740
    %v2944 = vpop.f32.mrf.mxu0
    %v2945 = vadd.f32 %v2296, %v2944
    %v2946 = vpop.f32.mrf.mxu0
    %v2947 = vadd.f32 %v2298, %v2946
    %2948 = vmatmul.bf16.gmra.mxu0 %v1743
    %v2949 = vpop.f32.mrf.mxu0
    %v2950 = vadd.f32 %v2301, %v2949
    %v2951 = vpop.f32.mrf.mxu0
    %v2952 = vadd.f32 %v2303, %v2951
    %2953 = vmatmul.bf16.gmra.mxu0 %v1746
    %v2954 = vpop.f32.mrf.mxu0
    %v2955 = vadd.f32 %v2306, %v2954
    %v2956 = vpop.f32.mrf.mxu0
    %v2957 = vadd.f32 %v2308, %v2956
    %2958 = vmatmul.bf16.gmra.mxu0 %v1749
    %v2959 = vpop.f32.mrf.mxu0
    %v2960 = vadd.f32 %v2311, %v2959
    %v2961 = vpop.f32.mrf.mxu0
    %v2962 = vadd.f32 %v2313, %v2961
    %2963 = vmatmul.bf16.gmra.mxu0 %v1752
    %v2964 = vpop.f32.mrf.mxu0
    %v2965 = vadd.f32 %v2316, %v2964
    %v2966 = vpop.f32.mrf.mxu0
    %v2967 = vadd.f32 %v2318, %v2966
    %2968 = vmatmul.bf16.gmra.mxu0 %v1755
    %v2969 = vpop.f32.mrf.mxu0
    %v2970 = vadd.f32 %v2321, %v2969
    %v2971 = vpop.f32.mrf.mxu0
    %v2972 = vadd.f32 %v2323, %v2971
    %2973 = vmatmul.bf16.gmra.mxu0 %v1758
    %v2974 = vpop.f32.mrf.mxu0
    %v2975 = vadd.f32 %v2326, %v2974
    %v2976 = vpop.f32.mrf.mxu0
    %v2977 = vadd.f32 %v2328, %v2976
    %2978 = vmatmul.bf16.gmra.mxu0 %v1761
    %v2979 = vpop.f32.mrf.mxu0
    %v2980 = vadd.f32 %v2331, %v2979
    %v2981 = vpop.f32.mrf.mxu0
    %v2982 = vadd.f32 %v2333, %v2981
    %2983 = vmatmul.bf16.gmra.mxu0 %v1764
    %v2984 = vpop.f32.mrf.mxu0
    %v2985 = vadd.f32 %v2336, %v2984
    %v2986 = vpop.f32.mrf.mxu0
    %v2987 = vadd.f32 %v2338, %v2986
    %2988 = vmatmul.bf16.gmra.mxu0 %v1767
    %v2989 = vpop.f32.mrf.mxu0
    %v2990 = vadd.f32 %v2341, %v2989
    %v2991 = vpop.f32.mrf.mxu0
    %v2992 = vadd.f32 %v2343, %v2991
    %2993 = vmatmul.bf16.gmra.mxu0 %v1770
    %v2994 = vpop.f32.mrf.mxu0
    %v2995 = vadd.f32 %v2346, %v2994
    %v2996 = vpop.f32.mrf.mxu0
    %v2997 = vadd.f32 %v2348, %v2996
    %2998 = vmatmul.bf16.gmra.mxu0 %v1773
    %v2999 = vpop.f32.mrf.mxu0
    %v3000 = vadd.f32 %v2351, %v2999
    %v3001 = vpop.f32.mrf.mxu0
    %v3002 = vadd.f32 %v2353, %v3001
    %3003 = vmatmul.bf16.gmra.mxu0 %v1776
    %v3004 = vpop.f32.mrf.mxu0
    %v3005 = vadd.f32 %v2356, %v3004
    %v3006 = vpop.f32.mrf.mxu0
    %v3007 = vadd.f32 %v2358, %v3006
    %3008 = vmatmul.bf16.gmra.mxu0 %v1779
    %v3009 = vpop.f32.mrf.mxu0
    %v3010 = vadd.f32 %v2361, %v3009
    %v3011 = vpop.f32.mrf.mxu0
    %v3012 = vadd.f32 %v2363, %v3011
    %3013 = vmatmul.bf16.gmra.mxu0 %v1782
    %v3014 = vpop.f32.mrf.mxu0
    %v3015 = vadd.f32 %v2366, %v3014
    %v3016 = vpop.f32.mrf.mxu0
    %v3017 = vadd.f32 %v2368, %v3016
    %3018 = vmatmul.bf16.gmra.mxu0 %v1785
    %v3019 = vpop.f32.mrf.mxu0
    %v3020 = vadd.f32 %v2371, %v3019
    %v3021 = vpop.f32.mrf.mxu0
    %v3022 = vadd.f32 %v2373, %v3021
    %3023 = vmatmul.bf16.gmra.mxu0 %v1788
    %v3024 = vpop.f32.mrf.mxu0
    %v3025 = vadd.f32 %v2376, %v3024
    %v3026 = vpop.f32.mrf.mxu0
    %v3027 = vadd.f32 %v2378, %v3026
    %3028 = vmatmul.bf16.gmra.mxu0 %v1791
    %v3029 = vpop.f32.mrf.mxu0
    %v3030 = vadd.f32 %v2381, %v3029
    %v3031 = vpop.f32.mrf.mxu0
    %v3032 = vadd.f32 %v2383, %v3031
    %3033 = vmatmul.bf16.gmra.mxu0 %v1794
    %v3034 = vpop.f32.mrf.mxu0
    %v3035 = vadd.f32 %v2386, %v3034
    %v3036 = vpop.f32.mrf.mxu0
    %v3037 = vadd.f32 %v2388, %v3036
    %3038 = vmatmul.bf16.gmra.mxu0 %v1797
    %v3039 = vpop.f32.mrf.mxu0
    %v3040 = vadd.f32 %v2391, %v3039
    %v3041 = vpop.f32.mrf.mxu0
    %v3042 = vadd.f32 %v2393, %v3041
    %3043 = vmatmul.bf16.gmra.mxu0 %v1800
    %v3044 = vpop.f32.mrf.mxu0
    %v3045 = vadd.f32 %v2396, %v3044
    %v3046 = vpop.f32.mrf.mxu0
    %v3047 = vadd.f32 %v2398, %v3046
    %3048 = vmatmul.bf16.gmra.mxu0 %v1803
    %v3049 = vpop.f32.mrf.mxu0
    %v3050 = vadd.f32 %v2401, %v3049
    %v3051 = vpop.f32.mrf.mxu0
    %v3052 = vadd.f32 %v2403, %v3051
    %3053 = vmatmul.bf16.gmra.mxu0 %v1806
    %v3054 = vpop.f32.mrf.mxu0
    %v3055 = vadd.f32 %v2406, %v3054
    %v3056 = vpop.f32.mrf.mxu0
    %v3057 = vadd.f32 %v2408, %v3056
    %3058 = vmatmul.bf16.gmra.mxu0 %v1809
    %v3059 = vpop.f32.mrf.mxu0
    %v3060 = vadd.f32 %v2411, %v3059
    %v3061 = vpop.f32.mrf.mxu0
    %v3062 = vadd.f32 %v2413, %v3061
    %3063 = vmatmul.bf16.gmra.mxu0 %v1812
    %v3064 = vpop.f32.mrf.mxu0
    %v3065 = vadd.f32 %v2416, %v3064
    %v3066 = vpop.f32.mrf.mxu0
    %v3067 = vadd.f32 %v2418, %v3066
    %3068 = vmatmul.bf16.gmra.mxu0 %v1815
    %v3069 = vpop.f32.mrf.mxu0
    %v3070 = vadd.f32 %v2421, %v3069
    %v3071 = vpop.f32.mrf.mxu0
    %v3072 = vadd.f32 %v2423, %v3071
    %3073 = vmatmul.bf16.gmra.mxu0 %v1818
    %v3074 = vpop.f32.mrf.mxu0
    %v3075 = vadd.f32 %v2426, %v3074
    %v3076 = vpop.f32.mrf.mxu0
    %v3077 = vadd.f32 %v2428, %v3076
    %3078 = vmatmul.bf16.gmra.mxu0 %v1821
    %v3079 = vpop.f32.mrf.mxu0
    %v3080 = vadd.f32 %v2431, %v3079
    %v3081 = vpop.f32.mrf.mxu0
    %v3082 = vadd.f32 %v2433, %v3081
    %3083 = vmatmul.bf16.gmra.mxu0 %v1824
    %v3084 = vpop.f32.mrf.mxu0
    %v3085 = vadd.f32 %v2436, %v3084
    %v3086 = vpop.f32.mrf.mxu0
    %v3087 = vadd.f32 %v2438, %v3086
    %3088 = vmatmul.bf16.gmra.mxu0 %v1827
    %v3089 = vpop.f32.mrf.mxu0
    %v3090 = vadd.f32 %v2441, %v3089
    %v3091 = vpop.f32.mrf.mxu0
    %v3092 = vadd.f32 %v2443, %v3091
    %3093 = vmatmul.bf16.gmra.mxu0 %v1830
    %v3094 = vpop.f32.mrf.mxu0
    %v3095 = vadd.f32 %v2446, %v3094
    %v3096 = vpop.f32.mrf.mxu0
    %v3097 = vadd.f32 %v2448, %v3096
    %3098 = vmatmul.bf16.gmra.mxu0 %v1833
    %v3099 = vpop.f32.mrf.mxu0
    %v3100 = vadd.f32 %v2451, %v3099
    %v3101 = vpop.f32.mrf.mxu0
    %v3102 = vadd.f32 %v2453, %v3101
    %3103 = vmatmul.bf16.gmra.mxu0 %v1836
    %v3104 = vpop.f32.mrf.mxu0
    %v3105 = vadd.f32 %v2456, %v3104
    %v3106 = vpop.f32.mrf.mxu0
    %v3107 = vadd.f32 %v2458, %v3106
    %3108 = vmatmul.bf16.gmra.mxu0 %v1839
    %v3109 = vpop.f32.mrf.mxu0
    %v3110 = vadd.f32 %v2461, %v3109
    %v3111 = vpop.f32.mrf.mxu0
    %v3112 = vadd.f32 %v2463, %v3111
    %3113 = vmatmul.bf16.gmra.mxu0 %v1842
    %v3114 = vpop.f32.mrf.mxu0
    %v3115 = vadd.f32 %v2466, %v3114
    %v3116 = vpop.f32.mrf.mxu0
    %v3117 = vadd.f32 %v2468, %v3116
    %3118 = vmatmul.bf16.gmra.mxu0 %v1845
    %v3119 = vpop.f32.mrf.mxu0
    %v3120 = vadd.f32 %v2471, %v3119
    %v3121 = vpop.f32.mrf.mxu0
    %v3122 = vadd.f32 %v2473, %v3121
    %3123 = vmatmul.bf16.gmra.mxu0 %v1848
    %v3124 = vpop.f32.mrf.mxu0
    %v3125 = vadd.f32 %v2476, %v3124
    %v3126 = vpop.f32.mrf.mxu0
    %v3127 = vadd.f32 %v2478, %v3126
    %3128 = vmatmul.bf16.gmra.mxu0 %v1851
    %v3129 = vpop.f32.mrf.mxu0
    %v3130 = vadd.f32 %v2481, %v3129
    %v3131 = vpop.f32.mrf.mxu0
    %v3132 = vadd.f32 %v2483, %v3131
    %3133 = vmatmul.bf16.gmra.mxu0 %v1854
    %v3134 = vpop.f32.mrf.mxu0
    %v3135 = vadd.f32 %v2486, %v3134
    %v3136 = vpop.f32.mrf.mxu0
    %v3137 = vadd.f32 %v2488, %v3136
    %3138 = vmatmul.bf16.gmra.mxu0 %v1857
    %v3139 = vpop.f32.mrf.mxu0
    %v3140 = vadd.f32 %v2491, %v3139
    %v3141 = vpop.f32.mrf.mxu0
    %v3142 = vadd.f32 %v2493, %v3141
    %3143 = vmatmul.bf16.gmra.mxu0 %v1860
    %v3144 = vpop.f32.mrf.mxu0
    %v3145 = vadd.f32 %v2496, %v3144
    %v3146 = vpop.f32.mrf.mxu0
    %v3147 = vadd.f32 %v2498, %v3146
    %3148 = vmatmul.bf16.gmra.mxu0 %v1863
    %v3149 = vpop.f32.mrf.mxu0
    %v3150 = vadd.f32 %v2501, %v3149
    %v3151 = vpop.f32.mrf.mxu0
    %v3152 = vadd.f32 %v2503, %v3151
    %3153 = vmatmul.bf16.gmra.mxu0 %v1866
    %v3154 = vpop.f32.mrf.mxu0
    %v3155 = vadd.f32 %v2506, %v3154
    %v3156 = vpop.f32.mrf.mxu0
    %v3157 = vadd.f32 %v2508, %v3156
    %3158 = vmatmul.bf16.gmra.mxu0 %v1869
    %v3159 = vpop.f32.mrf.mxu0
    %v3160 = vadd.f32 %v2511, %v3159
    %v3161 = vpop.f32.mrf.mxu0
    %v3162 = vadd.f32 %v2513, %v3161
    %3163 = vmatmul.bf16.gmra.mxu0 %v1872
    %v3164 = vpop.f32.mrf.mxu0
    %v3165 = vadd.f32 %v2516, %v3164
    %v3166 = vpop.f32.mrf.mxu0
    %v3167 = vadd.f32 %v2518, %v3166
    %3168 = vmatmul.bf16.gmra.mxu0 %v1875
    %v3169 = vpop.f32.mrf.mxu0
    %v3170 = vadd.f32 %v2521, %v3169
    %v3171 = vpop.f32.mrf.mxu0
    %v3172 = vadd.f32 %v2523, %v3171
    %3173 = vmatmul.bf16.gmra.mxu0 %v1878
    %v3174 = vpop.f32.mrf.mxu0
    %v3175 = vadd.f32 %v2526, %v3174
    %v3176 = vpop.f32.mrf.mxu0
    %v3177 = vadd.f32 %v2528, %v3176
    %3178 = vmatmul.bf16.gmra.mxu0 %v1881
    %v3179 = vpop.f32.mrf.mxu0
    %v3180 = vadd.f32 %v2531, %v3179
    %v3181 = vpop.f32.mrf.mxu0
    %v3182 = vadd.f32 %v2533, %v3181
    %3183 = vmatmul.bf16.gmra.mxu0 %v1884
    %v3184 = vpop.f32.mrf.mxu0
    %v3185 = vadd.f32 %v2536, %v3184
    %v3186 = vpop.f32.mrf.mxu0
    %v3187 = vadd.f32 %v2538, %v3186
    %3188 = vmatmul.bf16.gmra.mxu0 %v1887
    %v3189 = vpop.f32.mrf.mxu0
    %v3190 = vadd.f32 %v2541, %v3189
    %v3191 = vpop.f32.mrf.mxu0
    %v3192 = vadd.f32 %v2543, %v3191
    %3193 = vdwg.mxu0
    %v3194 = vmax.f32 %v2555, 0.0
    %v3195 = vmax.f32 %v2557, 0.0
    %v3196 = vmax.f32 %v2560, 0.0
    %v3197 = vmax.f32 %v2562, 0.0
    %v3198 = vmax.f32 %v2565, 0.0
    %v3199 = vmax.f32 %v2567, 0.0
    %v3200 = vmax.f32 %v2570, 0.0
    %v3201 = vmax.f32 %v2572, 0.0
    %v3202 = vmax.f32 %v2575, 0.0
    %v3203 = vmax.f32 %v2577, 0.0
    %v3204 = vmax.f32 %v2580, 0.0
    %v3205 = vmax.f32 %v2582, 0.0
    %v3206 = vmax.f32 %v2585, 0.0
    %v3207 = vmax.f32 %v2587, 0.0
    %v3208 = vmax.f32 %v2590, 0.0
    %v3209 = vmax.f32 %v2592, 0.0
    %v3210 = vmax.f32 %v2595, 0.0
    %v3211 = vmax.f32 %v2597, 0.0
    %v3212 = vmax.f32 %v2600, 0.0
    %v3213 = vmax.f32 %v2602, 0.0
    %v3214 = vmax.f32 %v2605, 0.0
    %v3215 = vmax.f32 %v2607, 0.0
    %v3216 = vmax.f32 %v2610, 0.0
    %v3217 = vmax.f32 %v2612, 0.0
    %v3218 = vmax.f32 %v2615, 0.0
    %v3219 = vmax.f32 %v2617, 0.0
    %v3220 = vmax.f32 %v2620, 0.0
    %v3221 = vmax.f32 %v2622, 0.0
    %v3222 = vmax.f32 %v2625, 0.0
    %v3223 = vmax.f32 %v2627, 0.0
    %v3224 = vmax.f32 %v2630, 0.0
    %v3225 = vmax.f32 %v2632, 0.0
    %v3226 = vmax.f32 %v2635, 0.0
    %v3227 = vmax.f32 %v2637, 0.0
    %v3228 = vmax.f32 %v2640, 0.0
    %v3229 = vmax.f32 %v2642, 0.0
    %v3230 = vmax.f32 %v2645, 0.0
    %v3231 = vmax.f32 %v2647, 0.0
    %v3232 = vmax.f32 %v2650, 0.0
    %v3233 = vmax.f32 %v2652, 0.0
    %v3234 = vmax.f32 %v2655, 0.0
    %v3235 = vmax.f32 %v2657, 0.0
    %v3236 = vmax.f32 %v2660, 0.0
    %v3237 = vmax.f32 %v2662, 0.0
    %v3238 = vmax.f32 %v2665, 0.0
    %v3239 = vmax.f32 %v2667, 0.0
    %v3240 = vmax.f32 %v2670, 0.0
    %v3241 = vmax.f32 %v2672, 0.0
    %v3242 = vmax.f32 %v2675, 0.0
    %v3243 = vmax.f32 %v2677, 0.0
    %v3244 = vmax.f32 %v2680, 0.0
    %v3245 = vmax.f32 %v2682, 0.0
    %v3246 = vmax.f32 %v2685, 0.0
    %v3247 = vmax.f32 %v2687, 0.0
    %v3248 = vmax.f32 %v2690, 0.0
    %v3249 = vmax.f32 %v2692, 0.0
    %v3250 = vmax.f32 %v2695, 0.0
    %v3251 = vmax.f32 %v2697, 0.0
    %v3252 = vmax.f32 %v2700, 0.0
    %v3253 = vmax.f32 %v2702, 0.0
    %v3254 = vmax.f32 %v2705, 0.0
    %v3255 = vmax.f32 %v2707, 0.0
    %v3256 = vmax.f32 %v2710, 0.0
    %v3257 = vmax.f32 %v2712, 0.0
    %v3258 = vmax.f32 %v2715, 0.0
    %v3259 = vmax.f32 %v2717, 0.0
    %v3260 = vmax.f32 %v2720, 0.0
    %v3261 = vmax.f32 %v2722, 0.0
    %v3262 = vmax.f32 %v2725, 0.0
    %v3263 = vmax.f32 %v2727, 0.0
    %v3264 = vmax.f32 %v2730, 0.0
    %v3265 = vmax.f32 %v2732, 0.0
    %v3266 = vmax.f32 %v2735, 0.0
    %v3267 = vmax.f32 %v2737, 0.0
    %v3268 = vmax.f32 %v2740, 0.0
    %v3269 = vmax.f32 %v2742, 0.0
    %v3270 = vmax.f32 %v2745, 0.0
    %v3271 = vmax.f32 %v2747, 0.0
    %v3272 = vmax.f32 %v2750, 0.0
    %v3273 = vmax.f32 %v2752, 0.0
    %v3274 = vmax.f32 %v2755, 0.0
    %v3275 = vmax.f32 %v2757, 0.0
    %v3276 = vmax.f32 %v2760, 0.0
    %v3277 = vmax.f32 %v2762, 0.0
    %v3278 = vmax.f32 %v2765, 0.0
    %v3279 = vmax.f32 %v2767, 0.0
    %v3280 = vmax.f32 %v2770, 0.0
    %v3281 = vmax.f32 %v2772, 0.0
    %v3282 = vmax.f32 %v2775, 0.0
    %v3283 = vmax.f32 %v2777, 0.0
    %v3284 = vmax.f32 %v2780, 0.0
    %v3285 = vmax.f32 %v2782, 0.0
    %v3286 = vmax.f32 %v2785, 0.0
    %v3287 = vmax.f32 %v2787, 0.0
    %v3288 = vmax.f32 %v2790, 0.0
    %v3289 = vmax.f32 %v2792, 0.0
    %v3290 = vmax.f32 %v2795, 0.0
    %v3291 = vmax.f32 %v2797, 0.0
    %v3292 = vmax.f32 %v2800, 0.0
    %v3293 = vmax.f32 %v2802, 0.0
    %v3294 = vmax.f32 %v2805, 0.0
    %v3295 = vmax.f32 %v2807, 0.0
    %v3296 = vmax.f32 %v2810, 0.0
    %v3297 = vmax.f32 %v2812, 0.0
    %v3298 = vmax.f32 %v2815, 0.0
    %v3299 = vmax.f32 %v2817, 0.0
    %v3300 = vmax.f32 %v2820, 0.0
    %v3301 = vmax.f32 %v2822, 0.0
    %v3302 = vmax.f32 %v2825, 0.0
    %v3303 = vmax.f32 %v2827, 0.0
    %v3304 = vmax.f32 %v2830, 0.0
    %v3305 = vmax.f32 %v2832, 0.0
    %v3306 = vmax.f32 %v2835, 0.0
    %v3307 = vmax.f32 %v2837, 0.0
    %v3308 = vmax.f32 %v2840, 0.0
    %v3309 = vmax.f32 %v2842, 0.0
    %v3310 = vmax.f32 %v2845, 0.0
    %v3311 = vmax.f32 %v2847, 0.0
    %v3312 = vmax.f32 %v2850, 0.0
    %v3313 = vmax.f32 %v2852, 0.0
    %v3314 = vmax.f32 %v2855, 0.0
    %v3315 = vmax.f32 %v2857, 0.0
    %v3316 = vmax.f32 %v2860, 0.0
    %v3317 = vmax.f32 %v2862, 0.0
    %v3318 = vmax.f32 %v2865, 0.0
    %v3319 = vmax.f32 %v2867, 0.0
    %v3320 = vmax.f32 %v2870, 0.0
    %v3321 = vmax.f32 %v2872, 0.0
    %v3322 = vmax.f32 %v2875, 0.0
    %v3323 = vmax.f32 %v2877, 0.0
    %v3324 = vmax.f32 %v2880, 0.0
    %v3325 = vmax.f32 %v2882, 0.0
    %v3326 = vmax.f32 %v2885, 0.0
    %v3327 = vmax.f32 %v2887, 0.0
    %v3328 = vmax.f32 %v2890, 0.0
    %v3329 = vmax.f32 %v2892, 0.0
    %v3330 = vmax.f32 %v2895, 0.0
    %v3331 = vmax.f32 %v2897, 0.0
    %v3332 = vmax.f32 %v2900, 0.0
    %v3333 = vmax.f32 %v2902, 0.0
    %v3334 = vmax.f32 %v2905, 0.0
    %v3335 = vmax.f32 %v2907, 0.0
    %v3336 = vmax.f32 %v2910, 0.0
    %v3337 = vmax.f32 %v2912, 0.0
    %v3338 = vmax.f32 %v2915, 0.0
    %v3339 = vmax.f32 %v2917, 0.0
    %v3340 = vmax.f32 %v2920, 0.0
    %v3341 = vmax.f32 %v2922, 0.0
    %v3342 = vmax.f32 %v2925, 0.0
    %v3343 = vmax.f32 %v2927, 0.0
    %v3344 = vmax.f32 %v2930, 0.0
    %v3345 = vmax.f32 %v2932, 0.0
    %v3346 = vmax.f32 %v2935, 0.0
    %v3347 = vmax.f32 %v2937, 0.0
    %v3348 = vmax.f32 %v2940, 0.0
    %v3349 = vmax.f32 %v2942, 0.0
    %v3350 = vmax.f32 %v2945, 0.0
    %v3351 = vmax.f32 %v2947, 0.0
    %v3352 = vmax.f32 %v2950, 0.0
    %v3353 = vmax.f32 %v2952, 0.0
    %v3354 = vmax.f32 %v2955, 0.0
    %v3355 = vmax.f32 %v2957, 0.0
    %v3356 = vmax.f32 %v2960, 0.0
    %v3357 = vmax.f32 %v2962, 0.0
    %v3358 = vmax.f32 %v2965, 0.0
    %v3359 = vmax.f32 %v2967, 0.0
    %v3360 = vmax.f32 %v2970, 0.0
    %v3361 = vmax.f32 %v2972, 0.0
    %v3362 = vmax.f32 %v2975, 0.0
    %v3363 = vmax.f32 %v2977, 0.0
    %v3364 = vmax.f32 %v2980, 0.0
    %v3365 = vmax.f32 %v2982, 0.0
    %v3366 = vmax.f32 %v2985, 0.0
    %v3367 = vmax.f32 %v2987, 0.0
    %v3368 = vmax.f32 %v2990, 0.0
    %v3369 = vmax.f32 %v2992, 0.0
    %v3370 = vmax.f32 %v2995, 0.0
    %v3371 = vmax.f32 %v2997, 0.0
    %v3372 = vmax.f32 %v3000, 0.0
    %v3373 = vmax.f32 %v3002, 0.0
    %v3374 = vmax.f32 %v3005, 0.0
    %v3375 = vmax.f32 %v3007, 0.0
    %v3376 = vmax.f32 %v3010, 0.0
    %v3377 = vmax.f32 %v3012, 0.0
    %v3378 = vmax.f32 %v3015, 0.0
    %v3379 = vmax.f32 %v3017, 0.0
    %v3380 = vmax.f32 %v3020, 0.0
    %v3381 = vmax.f32 %v3022, 0.0
    %v3382 = vmax.f32 %v3025, 0.0
    %v3383 = vmax.f32 %v3027, 0.0
    %v3384 = vmax.f32 %v3030, 0.0
    %v3385 = vmax.f32 %v3032, 0.0
    %v3386 = vmax.f32 %v3035, 0.0
    %v3387 = vmax.f32 %v3037, 0.0
    %v3388 = vmax.f32 %v3040, 0.0
    %v3389 = vmax.f32 %v3042, 0.0
    %v3390 = vmax.f32 %v3045, 0.0
    %v3391 = vmax.f32 %v3047, 0.0
    %v3392 = vmax.f32 %v3050, 0.0
    %v3393 = vmax.f32 %v3052, 0.0
    %v3394 = vmax.f32 %v3055, 0.0
    %v3395 = vmax.f32 %v3057, 0.0
    %v3396 = vmax.f32 %v3060, 0.0
    %v3397 = vmax.f32 %v3062, 0.0
    %v3398 = vmax.f32 %v3065, 0.0
    %v3399 = vmax.f32 %v3067, 0.0
    %v3400 = vmax.f32 %v3070, 0.0
    %v3401 = vmax.f32 %v3072, 0.0
    %v3402 = vmax.f32 %v3075, 0.0
    %v3403 = vmax.f32 %v3077, 0.0
    %v3404 = vmax.f32 %v3080, 0.0
    %v3405 = vmax.f32 %v3082, 0.0
    %v3406 = vmax.f32 %v3085, 0.0
    %v3407 = vmax.f32 %v3087, 0.0
    %v3408 = vmax.f32 %v3090, 0.0
    %v3409 = vmax.f32 %v3092, 0.0
    %v3410 = vmax.f32 %v3095, 0.0
    %v3411 = vmax.f32 %v3097, 0.0
    %v3412 = vmax.f32 %v3100, 0.0
    %v3413 = vmax.f32 %v3102, 0.0
    %v3414 = vmax.f32 %v3105, 0.0
    %v3415 = vmax.f32 %v3107, 0.0
    %v3416 = vmax.f32 %v3110, 0.0
    %v3417 = vmax.f32 %v3112, 0.0
    %v3418 = vmax.f32 %v3115, 0.0
    %v3419 = vmax.f32 %v3117, 0.0
    %v3420 = vmax.f32 %v3120, 0.0
    %v3421 = vmax.f32 %v3122, 0.0
    %v3422 = vmax.f32 %v3125, 0.0
    %v3423 = vmax.f32 %v3127, 0.0
    %v3424 = vmax.f32 %v3130, 0.0
    %v3425 = vmax.f32 %v3132, 0.0
    %v3426 = vmax.f32 %v3135, 0.0
    %v3427 = vmax.f32 %v3137, 0.0
    %v3428 = vmax.f32 %v3140, 0.0
    %v3429 = vmax.f32 %v3142, 0.0
    %v3430 = vmax.f32 %v3145, 0.0
    %v3431 = vmax.f32 %v3147, 0.0
    %v3432 = vmax.f32 %v3150, 0.0
    %v3433 = vmax.f32 %v3152, 0.0
    %v3434 = vmax.f32 %v3155, 0.0
    %v3435 = vmax.f32 %v3157, 0.0
    %v3436 = vmax.f32 %v3160, 0.0
    %v3437 = vmax.f32 %v3162, 0.0
    %v3438 = vmax.f32 %v3165, 0.0
    %v3439 = vmax.f32 %v3167, 0.0
    %v3440 = vmax.f32 %v3170, 0.0
    %v3441 = vmax.f32 %v3172, 0.0
    %v3442 = vmax.f32 %v3175, 0.0
    %v3443 = vmax.f32 %v3177, 0.0
    %v3444 = vmax.f32 %v3180, 0.0
    %v3445 = vmax.f32 %v3182, 0.0
    %v3446 = vmax.f32 %v3185, 0.0
    %v3447 = vmax.f32 %v3187, 0.0
    %v3448 = vmax.f32 %v3190, 0.0
    %v3449 = vmax.f32 %v3192, 0.0
    %3450 = vst [vmem:[#allocation2] sm:$0xff] %v3194
    %3451 = vst [vmem:[#allocation2 + $0x8] sm:$0xff] %v3195
    %3452 = vst [vmem:[#allocation2 + $0x10] sm:$0xff] %v3196
    %3453 = vst [vmem:[#allocation2 + $0x18] sm:$0xff] %v3197
    %3454 = vst [vmem:[#allocation2 + $0x20] sm:$0xff] %v3198
    %3455 = vst [vmem:[#allocation2 + $0x28] sm:$0xff] %v3199
    %3456 = vst [vmem:[#allocation2 + $0x30] sm:$0xff] %v3200
    %3457 = vst [vmem:[#allocation2 + $0x38] sm:$0xff] %v3201
    %3458 = vst [vmem:[#allocation2 + $0x40] sm:$0xff] %v3202
    %3459 = vst [vmem:[#allocation2 + $0x48] sm:$0xff] %v3203
    %3460 = vst [vmem:[#allocation2 + $0x50] sm:$0xff] %v3204
    %3461 = vst [vmem:[#allocation2 + $0x58] sm:$0xff] %v3205
    %3462 = vst [vmem:[#allocation2 + $0x60] sm:$0xff] %v3206
    %3463 = vst [vmem:[#allocation2 + $0x68] sm:$0xff] %v3207
    %3464 = vst [vmem:[#allocation2 + $0x70] sm:$0xff] %v3208
    %3465 = vst [vmem:[#allocation2 + $0x78] sm:$0xff] %v3209
    %3466 = vst [vmem:[#allocation2 + $0x80] sm:$0xff] %v3210
    %3467 = vst [vmem:[#allocation2 + $0x88] sm:$0xff] %v3211
    %3468 = vst [vmem:[#allocation2 + $0x90] sm:$0xff] %v3212
    %3469 = vst [vmem:[#allocation2 + $0x98] sm:$0xff] %v3213
    %3470 = vst [vmem:[#allocation2 + $0xa0] sm:$0xff] %v3214
    %3471 = vst [vmem:[#allocation2 + $0xa8] sm:$0xff] %v3215
    %3472 = vst [vmem:[#allocation2 + $0xb0] sm:$0xff] %v3216
    %3473 = vst [vmem:[#allocation2 + $0xb8] sm:$0xff] %v3217
    %3474 = vst [vmem:[#allocation2 + $0xc0] sm:$0xff] %v3218
    %3475 = vst [vmem:[#allocation2 + $0xc8] sm:$0xff] %v3219
    %3476 = vst [vmem:[#allocation2 + $0xd0] sm:$0xff] %v3220
    %3477 = vst [vmem:[#allocation2 + $0xd8] sm:$0xff] %v3221
    %3478 = vst [vmem:[#allocation2 + $0xe0] sm:$0xff] %v3222
    %3479 = vst [vmem:[#allocation2 + $0xe8] sm:$0xff] %v3223
    %3480 = vst [vmem:[#allocation2 + $0xf0] sm:$0xff] %v3224
    %3481 = vst [vmem:[#allocation2 + $0xf8] sm:$0xff] %v3225
    %3482 = vst [vmem:[#allocation2 + $0x100] sm:$0xff] %v3226
    %3483 = vst [vmem:[#allocation2 + $0x108] sm:$0xff] %v3227
    %3484 = vst [vmem:[#allocation2 + $0x110] sm:$0xff] %v3228
    %3485 = vst [vmem:[#allocation2 + $0x118] sm:$0xff] %v3229
    %3486 = vst [vmem:[#allocation2 + $0x120] sm:$0xff] %v3230
    %3487 = vst [vmem:[#allocation2 + $0x128] sm:$0xff] %v3231
    %3488 = vst [vmem:[#allocation2 + $0x130] sm:$0xff] %v3232
    %3489 = vst [vmem:[#allocation2 + $0x138] sm:$0xff] %v3233
    %3490 = vst [vmem:[#allocation2 + $0x140] sm:$0xff] %v3234
    %3491 = vst [vmem:[#allocation2 + $0x148] sm:$0xff] %v3235
    %3492 = vst [vmem:[#allocation2 + $0x150] sm:$0xff] %v3236
    %3493 = vst [vmem:[#allocation2 + $0x158] sm:$0xff] %v3237
    %3494 = vst [vmem:[#allocation2 + $0x160] sm:$0xff] %v3238
    %3495 = vst [vmem:[#allocation2 + $0x168] sm:$0xff] %v3239
    %3496 = vst [vmem:[#allocation2 + $0x170] sm:$0xff] %v3240
    %3497 = vst [vmem:[#allocation2 + $0x178] sm:$0xff] %v3241
    %3498 = vst [vmem:[#allocation2 + $0x180] sm:$0xff] %v3242
    %3499 = vst [vmem:[#allocation2 + $0x188] sm:$0xff] %v3243
    %3500 = vst [vmem:[#allocation2 + $0x190] sm:$0xff] %v3244
    %3501 = vst [vmem:[#allocation2 + $0x198] sm:$0xff] %v3245
    %3502 = vst [vmem:[#allocation2 + $0x1a0] sm:$0xff] %v3246
    %3503 = vst [vmem:[#allocation2 + $0x1a8] sm:$0xff] %v3247
    %3504 = vst [vmem:[#allocation2 + $0x1b0] sm:$0xff] %v3248
    %3505 = vst [vmem:[#allocation2 + $0x1b8] sm:$0xff] %v3249
    %3506 = vst [vmem:[#allocation2 + $0x1c0] sm:$0xff] %v3250
    %3507 = vst [vmem:[#allocation2 + $0x1c8] sm:$0xff] %v3251
    %3508 = vst [vmem:[#allocation2 + $0x1d0] sm:$0xff] %v3252
    %3509 = vst [vmem:[#allocation2 + $0x1d8] sm:$0xff] %v3253
    %3510 = vst [vmem:[#allocation2 + $0x1e0] sm:$0xff] %v3254
    %3511 = vst [vmem:[#allocation2 + $0x1e8] sm:$0xff] %v3255
    %3512 = vst [vmem:[#allocation2 + $0x1f0] sm:$0xff] %v3256
    %3513 = vst [vmem:[#allocation2 + $0x1f8] sm:$0xff] %v3257
    %3514 = vst [vmem:[#allocation2 + $0x200] sm:$0xff] %v3258
    %3515 = vst [vmem:[#allocation2 + $0x208] sm:$0xff] %v3259
    %3516 = vst [vmem:[#allocation2 + $0x210] sm:$0xff] %v3260
    %3517 = vst [vmem:[#allocation2 + $0x218] sm:$0xff] %v3261
    %3518 = vst [vmem:[#allocation2 + $0x220] sm:$0xff] %v3262
    %3519 = vst [vmem:[#allocation2 + $0x228] sm:$0xff] %v3263
    %3520 = vst [vmem:[#allocation2 + $0x230] sm:$0xff] %v3264
    %3521 = vst [vmem:[#allocation2 + $0x238] sm:$0xff] %v3265
    %3522 = vst [vmem:[#allocation2 + $0x240] sm:$0xff] %v3266
    %3523 = vst [vmem:[#allocation2 + $0x248] sm:$0xff] %v3267
    %3524 = vst [vmem:[#allocation2 + $0x250] sm:$0xff] %v3268
    %3525 = vst [vmem:[#allocation2 + $0x258] sm:$0xff] %v3269
    %3526 = vst [vmem:[#allocation2 + $0x260] sm:$0xff] %v3270
    %3527 = vst [vmem:[#allocation2 + $0x268] sm:$0xff] %v3271
    %3528 = vst [vmem:[#allocation2 + $0x270] sm:$0xff] %v3272
    %3529 = vst [vmem:[#allocation2 + $0x278] sm:$0xff] %v3273
    %3530 = vst [vmem:[#allocation2 + $0x280] sm:$0xff] %v3274
    %3531 = vst [vmem:[#allocation2 + $0x288] sm:$0xff] %v3275
    %3532 = vst [vmem:[#allocation2 + $0x290] sm:$0xff] %v3276
    %3533 = vst [vmem:[#allocation2 + $0x298] sm:$0xff] %v3277
    %3534 = vst [vmem:[#allocation2 + $0x2a0] sm:$0xff] %v3278
    %3535 = vst [vmem:[#allocation2 + $0x2a8] sm:$0xff] %v3279
    %3536 = vst [vmem:[#allocation2 + $0x2b0] sm:$0xff] %v3280
    %3537 = vst [vmem:[#allocation2 + $0x2b8] sm:$0xff] %v3281
    %3538 = vst [vmem:[#allocation2 + $0x2c0] sm:$0xff] %v3282
    %3539 = vst [vmem:[#allocation2 + $0x2c8] sm:$0xff] %v3283
    %3540 = vst [vmem:[#allocation2 + $0x2d0] sm:$0xff] %v3284
    %3541 = vst [vmem:[#allocation2 + $0x2d8] sm:$0xff] %v3285
    %3542 = vst [vmem:[#allocation2 + $0x2e0] sm:$0xff] %v3286
    %3543 = vst [vmem:[#allocation2 + $0x2e8] sm:$0xff] %v3287
    %3544 = vst [vmem:[#allocation2 + $0x2f0] sm:$0xff] %v3288
    %3545 = vst [vmem:[#allocation2 + $0x2f8] sm:$0xff] %v3289
    %3546 = vst [vmem:[#allocation2 + $0x300] sm:$0xff] %v3290
    %3547 = vst [vmem:[#allocation2 + $0x308] sm:$0xff] %v3291
    %3548 = vst [vmem:[#allocation2 + $0x310] sm:$0xff] %v3292
    %3549 = vst [vmem:[#allocation2 + $0x318] sm:$0xff] %v3293
    %3550 = vst [vmem:[#allocation2 + $0x320] sm:$0xff] %v3294
    %3551 = vst [vmem:[#allocation2 + $0x328] sm:$0xff] %v3295
    %3552 = vst [vmem:[#allocation2 + $0x330] sm:$0xff] %v3296
    %3553 = vst [vmem:[#allocation2 + $0x338] sm:$0xff] %v3297
    %3554 = vst [vmem:[#allocation2 + $0x340] sm:$0xff] %v3298
    %3555 = vst [vmem:[#allocation2 + $0x348] sm:$0xff] %v3299
    %3556 = vst [vmem:[#allocation2 + $0x350] sm:$0xff] %v3300
    %3557 = vst [vmem:[#allocation2 + $0x358] sm:$0xff] %v3301
    %3558 = vst [vmem:[#allocation2 + $0x360] sm:$0xff] %v3302
    %3559 = vst [vmem:[#allocation2 + $0x368] sm:$0xff] %v3303
    %3560 = vst [vmem:[#allocation2 + $0x370] sm:$0xff] %v3304
    %3561 = vst [vmem:[#allocation2 + $0x378] sm:$0xff] %v3305
    %3562 = vst [vmem:[#allocation2 + $0x380] sm:$0xff] %v3306
    %3563 = vst [vmem:[#allocation2 + $0x388] sm:$0xff] %v3307
    %3564 = vst [vmem:[#allocation2 + $0x390] sm:$0xff] %v3308
    %3565 = vst [vmem:[#allocation2 + $0x398] sm:$0xff] %v3309
    %3566 = vst [vmem:[#allocation2 + $0x3a0] sm:$0xff] %v3310
    %3567 = vst [vmem:[#allocation2 + $0x3a8] sm:$0xff] %v3311
    %3568 = vst [vmem:[#allocation2 + $0x3b0] sm:$0xff] %v3312
    %3569 = vst [vmem:[#allocation2 + $0x3b8] sm:$0xff] %v3313
    %3570 = vst [vmem:[#allocation2 + $0x3c0] sm:$0xff] %v3314
    %3571 = vst [vmem:[#allocation2 + $0x3c8] sm:$0xff] %v3315
    %3572 = vst [vmem:[#allocation2 + $0x3d0] sm:$0xff] %v3316
    %3573 = vst [vmem:[#allocation2 + $0x3d8] sm:$0xff] %v3317
    %3574 = vst [vmem:[#allocation2 + $0x3e0] sm:$0xff] %v3318
    %3575 = vst [vmem:[#allocation2 + $0x3e8] sm:$0xff] %v3319
    %3576 = vst [vmem:[#allocation2 + $0x3f0] sm:$0xff] %v3320
    %3577 = vst [vmem:[#allocation2 + $0x3f8] sm:$0xff] %v3321
    %3578 = vst [vmem:[#allocation2 + $0x400] sm:$0xff] %v3322
    %3579 = vst [vmem:[#allocation2 + $0x408] sm:$0xff] %v3323
    %3580 = vst [vmem:[#allocation2 + $0x410] sm:$0xff] %v3324
    %3581 = vst [vmem:[#allocation2 + $0x418] sm:$0xff] %v3325
    %3582 = vst [vmem:[#allocation2 + $0x420] sm:$0xff] %v3326
    %3583 = vst [vmem:[#allocation2 + $0x428] sm:$0xff] %v3327
    %3584 = vst [vmem:[#allocation2 + $0x430] sm:$0xff] %v3328
    %3585 = vst [vmem:[#allocation2 + $0x438] sm:$0xff] %v3329
    %3586 = vst [vmem:[#allocation2 + $0x440] sm:$0xff] %v3330
    %3587 = vst [vmem:[#allocation2 + $0x448] sm:$0xff] %v3331
    %3588 = vst [vmem:[#allocation2 + $0x450] sm:$0xff] %v3332
    %3589 = vst [vmem:[#allocation2 + $0x458] sm:$0xff] %v3333
    %3590 = vst [vmem:[#allocation2 + $0x460] sm:$0xff] %v3334
    %3591 = vst [vmem:[#allocation2 + $0x468] sm:$0xff] %v3335
    %3592 = vst [vmem:[#allocation2 + $0x470] sm:$0xff] %v3336
    %3593 = vst [vmem:[#allocation2 + $0x478] sm:$0xff] %v3337
    %3594 = vst [vmem:[#allocation2 + $0x480] sm:$0xff] %v3338
    %3595 = vst [vmem:[#allocation2 + $0x488] sm:$0xff] %v3339
    %3596 = vst [vmem:[#allocation2 + $0x490] sm:$0xff] %v3340
    %3597 = vst [vmem:[#allocation2 + $0x498] sm:$0xff] %v3341
    %3598 = vst [vmem:[#allocation2 + $0x4a0] sm:$0xff] %v3342
    %3599 = vst [vmem:[#allocation2 + $0x4a8] sm:$0xff] %v3343
    %3600 = vst [vmem:[#allocation2 + $0x4b0] sm:$0xff] %v3344
    %3601 = vst [vmem:[#allocation2 + $0x4b8] sm:$0xff] %v3345
    %3602 = vst [vmem:[#allocation2 + $0x4c0] sm:$0xff] %v3346
    %3603 = vst [vmem:[#allocation2 + $0x4c8] sm:$0xff] %v3347
    %3604 = vst [vmem:[#allocation2 + $0x4d0] sm:$0xff] %v3348
    %3605 = vst [vmem:[#allocation2 + $0x4d8] sm:$0xff] %v3349
    %3606 = vst [vmem:[#allocation2 + $0x4e0] sm:$0xff] %v3350
    %3607 = vst [vmem:[#allocation2 + $0x4e8] sm:$0xff] %v3351
    %3608 = vst [vmem:[#allocation2 + $0x4f0] sm:$0xff] %v3352
    %3609 = vst [vmem:[#allocation2 + $0x4f8] sm:$0xff] %v3353
    %3610 = vst [vmem:[#allocation2 + $0x500] sm:$0xff] %v3354
    %3611 = vst [vmem:[#allocation2 + $0x508] sm:$0xff] %v3355
    %3612 = vst [vmem:[#allocation2 + $0x510] sm:$0xff] %v3356
    %3613 = vst [vmem:[#allocation2 + $0x518] sm:$0xff] %v3357
    %3614 = vst [vmem:[#allocation2 + $0x520] sm:$0xff] %v3358
    %3615 = vst [vmem:[#allocation2 + $0x528] sm:$0xff] %v3359
    %3616 = vst [vmem:[#allocation2 + $0x530] sm:$0xff] %v3360
    %3617 = vst [vmem:[#allocation2 + $0x538] sm:$0xff] %v3361
    %3618 = vst [vmem:[#allocation2 + $0x540] sm:$0xff] %v3362
    %3619 = vst [vmem:[#allocation2 + $0x548] sm:$0xff] %v3363
    %3620 = vst [vmem:[#allocation2 + $0x550] sm:$0xff] %v3364
    %3621 = vst [vmem:[#allocation2 + $0x558] sm:$0xff] %v3365
    %3622 = vst [vmem:[#allocation2 + $0x560] sm:$0xff] %v3366
    %3623 = vst [vmem:[#allocation2 + $0x568] sm:$0xff] %v3367
    %3624 = vst [vmem:[#allocation2 + $0x570] sm:$0xff] %v3368
    %3625 = vst [vmem:[#allocation2 + $0x578] sm:$0xff] %v3369
    %3626 = vst [vmem:[#allocation2 + $0x580] sm:$0xff] %v3370
    %3627 = vst [vmem:[#allocation2 + $0x588] sm:$0xff] %v3371
    %3628 = vst [vmem:[#allocation2 + $0x590] sm:$0xff] %v3372
    %3629 = vst [vmem:[#allocation2 + $0x598] sm:$0xff] %v3373
    %3630 = vst [vmem:[#allocation2 + $0x5a0] sm:$0xff] %v3374
    %3631 = vst [vmem:[#allocation2 + $0x5a8] sm:$0xff] %v3375
    %3632 = vst [vmem:[#allocation2 + $0x5b0] sm:$0xff] %v3376
    %3633 = vst [vmem:[#allocation2 + $0x5b8] sm:$0xff] %v3377
    %3634 = vst [vmem:[#allocation2 + $0x5c0] sm:$0xff] %v3378
    %3635 = vst [vmem:[#allocation2 + $0x5c8] sm:$0xff] %v3379
    %3636 = vst [vmem:[#allocation2 + $0x5d0] sm:$0xff] %v3380
    %3637 = vst [vmem:[#allocation2 + $0x5d8] sm:$0xff] %v3381
    %3638 = vst [vmem:[#allocation2 + $0x5e0] sm:$0xff] %v3382
    %3639 = vst [vmem:[#allocation2 + $0x5e8] sm:$0xff] %v3383
    %3640 = vst [vmem:[#allocation2 + $0x5f0] sm:$0xff] %v3384
    %3641 = vst [vmem:[#allocation2 + $0x5f8] sm:$0xff] %v3385
    %3642 = vst [vmem:[#allocation2 + $0x600] sm:$0xff] %v3386
    %3643 = vst [vmem:[#allocation2 + $0x608] sm:$0xff] %v3387
    %3644 = vst [vmem:[#allocation2 + $0x610] sm:$0xff] %v3388
    %3645 = vst [vmem:[#allocation2 + $0x618] sm:$0xff] %v3389
    %3646 = vst [vmem:[#allocation2 + $0x620] sm:$0xff] %v3390
    %3647 = vst [vmem:[#allocation2 + $0x628] sm:$0xff] %v3391
    %3648 = vst [vmem:[#allocation2 + $0x630] sm:$0xff] %v3392
    %3649 = vst [vmem:[#allocation2 + $0x638] sm:$0xff] %v3393
    %3650 = vst [vmem:[#allocation2 + $0x640] sm:$0xff] %v3394
    %3651 = vst [vmem:[#allocation2 + $0x648] sm:$0xff] %v3395
    %3652 = vst [vmem:[#allocation2 + $0x650] sm:$0xff] %v3396
    %3653 = vst [vmem:[#allocation2 + $0x658] sm:$0xff] %v3397
    %3654 = vst [vmem:[#allocation2 + $0x660] sm:$0xff] %v3398
    %3655 = vst [vmem:[#allocation2 + $0x668] sm:$0xff] %v3399
    %3656 = vst [vmem:[#allocation2 + $0x670] sm:$0xff] %v3400
    %3657 = vst [vmem:[#allocation2 + $0x678] sm:$0xff] %v3401
    %3658 = vst [vmem:[#allocation2 + $0x680] sm:$0xff] %v3402
    %3659 = vst [vmem:[#allocation2 + $0x688] sm:$0xff] %v3403
    %3660 = vst [vmem:[#allocation2 + $0x690] sm:$0xff] %v3404
    %3661 = vst [vmem:[#allocation2 + $0x698] sm:$0xff] %v3405
    %3662 = vst [vmem:[#allocation2 + $0x6a0] sm:$0xff] %v3406
    %3663 = vst [vmem:[#allocation2 + $0x6a8] sm:$0xff] %v3407
    %3664 = vst [vmem:[#allocation2 + $0x6b0] sm:$0xff] %v3408
    %3665 = vst [vmem:[#allocation2 + $0x6b8] sm:$0xff] %v3409
    %3666 = vst [vmem:[#allocation2 + $0x6c0] sm:$0xff] %v3410
    %3667 = vst [vmem:[#allocation2 + $0x6c8] sm:$0xff] %v3411
    %3668 = vst [vmem:[#allocation2 + $0x6d0] sm:$0xff] %v3412
    %3669 = vst [vmem:[#allocation2 + $0x6d8] sm:$0xff] %v3413
    %3670 = vst [vmem:[#allocation2 + $0x6e0] sm:$0xff] %v3414
    %3671 = vst [vmem:[#allocation2 + $0x6e8] sm:$0xff] %v3415
    %3672 = vst [vmem:[#allocation2 + $0x6f0] sm:$0xff] %v3416
    %3673 = vst [vmem:[#allocation2 + $0x6f8] sm:$0xff] %v3417
    %3674 = vst [vmem:[#allocation2 + $0x700] sm:$0xff] %v3418
    %3675 = vst [vmem:[#allocation2 + $0x708] sm:$0xff] %v3419
    %3676 = vst [vmem:[#allocation2 + $0x710] sm:$0xff] %v3420
    %3677 = vst [vmem:[#allocation2 + $0x718] sm:$0xff] %v3421
    %3678 = vst [vmem:[#allocation2 + $0x720] sm:$0xff] %v3422
    %3679 = vst [vmem:[#allocation2 + $0x728] sm:$0xff] %v3423
    %3680 = vst [vmem:[#allocation2 + $0x730] sm:$0xff] %v3424
    %3681 = vst [vmem:[#allocation2 + $0x738] sm:$0xff] %v3425
    %3682 = vst [vmem:[#allocation2 + $0x740] sm:$0xff] %v3426
    %3683 = vst [vmem:[#allocation2 + $0x748] sm:$0xff] %v3427
    %3684 = vst [vmem:[#allocation2 + $0x750] sm:$0xff] %v3428
    %3685 = vst [vmem:[#allocation2 + $0x758] sm:$0xff] %v3429
    %3686 = vst [vmem:[#allocation2 + $0x760] sm:$0xff] %v3430
    %3687 = vst [vmem:[#allocation2 + $0x768] sm:$0xff] %v3431
    %3688 = vst [vmem:[#allocation2 + $0x770] sm:$0xff] %v3432
    %3689 = vst [vmem:[#allocation2 + $0x778] sm:$0xff] %v3433
    %3690 = vst [vmem:[#allocation2 + $0x780] sm:$0xff] %v3434
    %3691 = vst [vmem:[#allocation2 + $0x788] sm:$0xff] %v3435
    %3692 = vst [vmem:[#allocation2 + $0x790] sm:$0xff] %v3436
    %3693 = vst [vmem:[#allocation2 + $0x798] sm:$0xff] %v3437
    %3694 = vst [vmem:[#allocation2 + $0x7a0] sm:$0xff] %v3438
    %3695 = vst [vmem:[#allocation2 + $0x7a8] sm:$0xff] %v3439
    %3696 = vst [vmem:[#allocation2 + $0x7b0] sm:$0xff] %v3440
    %3697 = vst [vmem:[#allocation2 + $0x7b8] sm:$0xff] %v3441
    %3698 = vst [vmem:[#allocation2 + $0x7c0] sm:$0xff] %v3442
    %3699 = vst [vmem:[#allocation2 + $0x7c8] sm:$0xff] %v3443
    %3700 = vst [vmem:[#allocation2 + $0x7d0] sm:$0xff] %v3444
    %3701 = vst [vmem:[#allocation2 + $0x7d8] sm:$0xff] %v3445
    %3702 = vst [vmem:[#allocation2 + $0x7e0] sm:$0xff] %v3446
    %3703 = vst [vmem:[#allocation2 + $0x7e8] sm:$0xff] %v3447
    %3704 = vst [vmem:[#allocation2 + $0x7f0] sm:$0xff] %v3448
    %3705 = vst [vmem:[#allocation2 + $0x7f8] sm:$0xff] %v3449
    // Predicated region
    $region14: #{object_detection_forward.1} parent=1 // pred_check
      _
    $region15: #{object_detection_forward.1} parent=1 // pred_check_branch
      %3707 = sbr.rel (0) target = $region17
    $region16: #{object_detection_forward.1} parent=1 // pred_region
      %3709 = vsyncadd [#allocation3], 0
      %s3710 = sshll.u32 [#allocation2], 4
      %s3711 = int_to_ptr.vmem [resolvable:$true] %s3710
      %s3712 = sshll.u32 %s3, 4
      %s3713 = int_to_ptr.hbm [resolvable:$true] %s3712
      %3718 = dma.vmem_to_hbm [thread:$0]  %s3711, 32768, %s3713, [#allocation3], 128, 128, 8
    $region17: #{object_detection_forward.1} parent=1 // pred_fallthru
      _
    // Predicated region
    $region18: #{object_detection_forward.1} parent=1 // pred_check
      _
    $region19: #{object_detection_forward.1} parent=1 // pred_check_branch
      %3720 = sbr.rel (0) target = $region21
    $region20: #{object_detection_forward.1} parent=1 // pred_region
      %3722 = dma.done [#allocation3], 32768
    $region21: #{object_detection_forward.1} parent=1 // pred_fallthru
      _
    %3723 = vsyncpa [#allocation3], 1

</llo_original>
